<compile_context>
chip_gen: v6e
topology: v6e:2x2x1
jax: 0.10.0
libtpu: 0.0.40
codegen_flags: <defaults>
</compile_context>

<pallas_src>
import functools

import jax
import jax.numpy as jnp
from jax.experimental import pallas as pl
from jax.experimental.pallas import tpu as pltpu

BN_EPS = 1e-5
F_PAD = 128          # lane-dense feature width (all layer widths zero-padded to 128 lanes)
F_PAD2 = 2 * F_PAD   # concatenated [Wself | Wneigh] output width for SAGE layers


# ----------------------------- in-kernel helpers ----------------------------- #

def _erf(x):
    # Abramowitz & Stegun 7.1.26 (|abs err| < 1.5e-7). exp() and the approximate
    # reciprocal both issue to the EUP slot; the Horner chain is a few VPU ops.
    a1, a2, a3, a4, a5 = 0.254829592, -0.284496736, 1.421413741, -1.453152027, 1.061405429
    p = 0.3275911
    ax = jnp.abs(x)
    t = pl.reciprocal(1.0 + p * ax, approx=True)      # EUP, ~free vs a VALU divide
    poly = ((((a5 * t + a4) * t + a3) * t + a2) * t + a1) * t
    y = 1.0 - poly * jnp.exp(-(ax * ax))
    return jnp.where(x >= 0.0, y, -y)


def _gelu(x):
    # nn.GELU() default: exact erf formulation
    return 0.5 * x * (1.0 + _erf(x * 0.7071067811865476))


def _batchnorm_train(x, gamma, beta):
    # BatchNorm1d, training mode (biased batch var), single-pass statistics:
    # the two column reductions are independent -> shorter XLU dependency chain.
    inv_n = 1.0 / x.shape[0]
    s = jnp.sum(x, axis=0, keepdims=True)
    s2 = jnp.sum(x * x, axis=0, keepdims=True)
    mean = s * inv_n
    var = s2 * inv_n - mean * mean
    return (x - mean) * jax.lax.rsqrt(var + BN_EPS) * gamma + beta


# ------------------------------ fused Pallas kernel -------------------------- #

def gnn_fused_kernel(x_ref, adj_ref, vecs_ref, w_lin_ref, w_sage_ref, o_ref, *, layers):
    """`layers` is STATIC metadata: tuple of (kind, apply_skip, apply_gelu, vec_idx, w_idx)."""
    h = x_ref[...]                                    # (N, F_PAD) f32; padded lanes stay exactly 0

    for kind, apply_skip, apply_gelu, vidx, widx in layers:
        v = vecs_ref[vidx]                            # (3, F_PAD) f32: [gamma | beta | bias]
        gamma, beta, bias = v[0:1, :], v[1:2, :], v[2:3, :]

        xn = _batchnorm_train(h, gamma, beta)
        xn_bf = xn.astype(jnp.bfloat16)

        if kind == "linear":
            w = w_lin_ref[widx]                       # (F_PAD, F_PAD) bf16 (= W^T of nn.Linear)
            y = jnp.dot(xn_bf, w, preferred_element_type=jnp.float32) + bias
            if apply_gelu:
                y = _gelu(y)
            if apply_skip:
                y = xn + y                            # LinearLayer: skip OUTSIDE the activation
            h = y
        else:  # "sage"
            wcat = w_sage_ref[widx]                   # (F_PAD, 2*F_PAD) bf16 = [Wself^T | Wneigh^T]
            # single 256-lane-wide MXU pass produces both projections
            proj = jnp.dot(xn_bf, wcat, preferred_element_type=jnp.float32)
            self_t = proj[:, :F_PAD]
            nproj_bf = proj[:, F_PAD:].astype(jnp.bfloat16)
            adj = adj_ref[...]                        # (N, N) bf16; load scoped to SAGE layers
            neigh = jnp.dot(adj, nproj_bf, preferred_element_type=jnp.float32)
            y = self_t + neigh + bias
            if apply_skip:
                y = y + xn                            # GraphConvolutionLayer: skip INSIDE activation
            h = _gelu(y) if apply_gelu else y

    o_ref[...] = h                                    # lane-dense store; column 0 is the prediction


# --------------------------------- wrapper ----------------------------------- #

def make_forward(layer_descs):
    kernel = functools.partial(gnn_fused_kernel, layers=layer_descs)

    @jax.jit
    def forward(features_padded, adj_mean_bf16, vecs, w_lin, w_sage):
        n = features_padded.shape[0]
        out_pad = pl.pallas_call(
            kernel,
            out_shape=jax.ShapeDtypeStruct((n, F_PAD), jnp.float32),
            in_specs=[pl.BlockSpec(memory_space=pltpu.MemorySpace.VMEM)] * 5,
            out_specs=pl.BlockSpec(memory_space=pltpu.MemorySpace.VMEM),
        )(features_padded, adj_mean_bf16, vecs, w_lin, w_sage)
        return out_pad[:, :1]                         # real predictor output (N, 1)

    return forward


# ------------------------------ parameter setup ------------------------------ #

def _pad2(a, rows, cols):
    out = jnp.zeros((rows, cols), a.dtype)
    return out.at[: a.shape[0], : a.shape[1]].set(a)


def _bn_vec(bias_row):
    # [gamma=1 | beta=0 | bias] ; zero beta/bias on padded lanes keeps them exactly 0.
    return jnp.stack([jnp.ones((F_PAD,), jnp.float32),
                      jnp.zeros((F_PAD,), jnp.float32),
                      bias_row])


def init_linear(key, f_in, f_out):
    k1, k2 = jax.random.split(key)
    bound = 1.0 / (f_in ** 0.5)
    w = jax.random.uniform(k1, (f_in, f_out), jnp.float32, -bound, bound)   # = W^T of nn.Linear
    b = jax.random.uniform(k2, (1, f_out), jnp.float32, -bound, bound)
    w_p = _pad2(w, F_PAD, F_PAD).astype(jnp.bfloat16)
    return w_p, _bn_vec(_pad2(b, 1, F_PAD)[0])


def init_sage(key, f_in, f_out):
    k1, k2, k3 = jax.random.split(key, 3)
    bound = 1.0 / (f_in ** 0.5)
    ws = jax.random.uniform(k1, (f_in, f_out), jnp.float32, -bound, bound)  # fc_self^T
    wn = jax.random.uniform(k2, (f_in, f_out), jnp.float32, -bound, bound)  # fc_neigh^T
    b = jax.random.uniform(k3, (1, f_out), jnp.float32, -bound, bound)
    wcat = jnp.concatenate([_pad2(ws, F_PAD, F_PAD), _pad2(wn, F_PAD, F_PAD)],
                           axis=1).astype(jnp.bfloat16)                     # (F_PAD, 2*F_PAD)
    return wcat, _bn_vec(_pad2(b, 1, F_PAD)[0])


def build_gnn_params(key, num_input_features, num_hidden_features,
                     num_preprocessing_layers, num_encoder_layers, num_predictor_layers,
                     apply_skip_connection):
    total = num_preprocessing_layers + num_encoder_layers + num_predictor_layers
    keys = iter(jax.random.split(key, total))

    layer_descs = []                 # STATIC: (kind, skip, gelu, vec_idx, w_idx)
    vec_list, w_lin_list, w_sage_list = [], [], []

    def add_linear(k, f_in, f_out, skip, gelu):
        w, vec = init_linear(k, f_in, f_out)
        w_lin_list.append(w)
        vec_list.append(vec)
        layer_descs.append(("linear", skip, gelu, len(vec_list) - 1, len(w_lin_list) - 1))

    def add_sage(k, f_in, f_out, skip, gelu):
        w, vec = init_sage(k, f_in, f_out)
        w_sage_list.append(w)
        vec_list.append(vec)
        layer_descs.append(("sage", skip, gelu, len(vec_list) - 1, len(w_sage_list) - 1))

    pre = [num_input_features] + [num_hidden_features] * num_preprocessing_layers
    for idx in range(len(pre) - 1):
        skip = bool(apply_skip_connection) and idx != 0
        if skip:
            assert pre[idx] == pre[idx + 1], "skip requires f_in == f_out"
        add_linear(next(keys), pre[idx], pre[idx + 1], skip, True)

    enc = [num_hidden_features] * (num_encoder_layers + 1)
    for idx in range(len(enc) - 1):
        add_sage(next(keys), enc[idx], enc[idx + 1], bool(apply_skip_connection), True)

    pred = [num_hidden_features] * num_predictor_layers + [1]
    for idx in range(len(pred) - 1):
        is_last = (idx + 1 == len(pred) - 1)
        skip = bool(apply_skip_connection) and not is_last
        if skip:
            assert pred[idx] == pred[idx + 1], "skip requires f_in == f_out"
        add_linear(next(keys), pred[idx], pred[idx + 1], skip, not is_last)

    vecs = jnp.stack(vec_list)                                              # (L, 3, F_PAD) f32
    w_lin = (jnp.stack(w_lin_list) if w_lin_list
             else jnp.zeros((1, F_PAD, F_PAD), jnp.bfloat16))
    w_sage = (jnp.stack(w_sage_list) if w_sage_list
              else jnp.zeros((1, F_PAD, F_PAD2), jnp.bfloat16))
    return tuple(layer_descs), vecs, w_lin, w_sage


# ----------------------------------- main ------------------------------------ #

if __name__ == "__main__":
    key = jax.random.PRNGKey(0)
    k_graph, k_feat, k_params = jax.random.split(key, 3)

    N = 64                       # number of graph nodes
    NUM_INPUT_FEATURES = 16
    NUM_HIDDEN_FEATURES = 32

    # deterministic random graph; guarantee in-degree >= 1 (DGL SAGEConv requirement),
    # then row-normalize for the "mean" aggregator.
    adj = (jax.random.uniform(k_graph, (N, N)) < 0.1).astype(jnp.float32)
    deg = jnp.sum(adj, axis=1, keepdims=True)
    adj = jnp.where(deg == 0.0, jnp.eye(N, dtype=jnp.float32), adj)
    deg = jnp.sum(adj, axis=1, keepdims=True)
    adj_mean = (adj / deg).astype(jnp.bfloat16)          # (N, N) row-normalized, bf16 MXU operand

    features = jax.random.normal(k_feat, (N, NUM_INPUT_FEATURES), jnp.float32)
    features_padded = jnp.zeros((N, F_PAD), jnp.float32).at[:, :NUM_INPUT_FEATURES].set(features)

    layer_descs, vecs, w_lin, w_sage = build_gnn_params(
        k_params,
        num_input_features=NUM_INPUT_FEATURES,
        num_hidden_features=NUM_HIDDEN_FEATURES,
        num_preprocessing_layers=2,
        num_encoder_layers=2,
        num_predictor_layers=2,
        apply_skip_connection=True,
    )

    forward = make_forward(layer_descs)
    out = forward(features_padded, adj_mean, vecs, w_lin, w_sage)
    out = jax.block_until_ready(out)
    assert out.shape == (N, 1), out.shape
    print("KERNEL_OK")
</pallas_src>

<mosaic_0001>
module attributes {stable_mosaic.version = 11 : i64} {
  func.func @gnn_fused_kernel(%arg0: memref<64x128xf32, #tpu.memory_space<vmem>>, %arg1: memref<64x64xbf16, #tpu.memory_space<vmem>>, %arg2: memref<6x3x128xf32, #tpu.memory_space<vmem>>, %arg3: memref<4x128x128xbf16, #tpu.memory_space<vmem>>, %arg4: memref<2x128x256xbf16, #tpu.memory_space<vmem>>, %arg5: memref<64x128xf32, #tpu.memory_space<vmem>>) attributes {dimension_semantics = [], scalar_prefetch = 0 : i64, scratch_operands = 0 : i64, tpu.core_type = #tpu.core_type<tc>} {
    %c0 = arith.constant 0 : index
    %c0_0 = arith.constant 0 : index
    %0 = vector.load %arg0[%c0, %c0_0] : memref<64x128xf32, #tpu.memory_space<vmem>>, vector<64x128xf32>
    %c0_1 = arith.constant 0 : index
    %c0_2 = arith.constant 0 : index
    %c0_3 = arith.constant 0 : index
    %1 = vector.load %arg2[%c0_1, %c0_2, %c0_3] : memref<6x3x128xf32, #tpu.memory_space<vmem>>, vector<1x3x128xf32>
    %2 = vector.shape_cast %1 : vector<1x3x128xf32> to vector<3x128xf32>
    %3 = vector.extract_strided_slice %2 {offsets = [0, 0], sizes = [1, 128], strides = [1, 1]} : vector<3x128xf32> to vector<1x128xf32>
    %4 = vector.extract_strided_slice %2 {offsets = [1, 0], sizes = [1, 128], strides = [1, 1]} : vector<3x128xf32> to vector<1x128xf32>
    %5 = vector.extract_strided_slice %2 {offsets = [2, 0], sizes = [1, 128], strides = [1, 1]} : vector<3x128xf32> to vector<1x128xf32>
    %cst = arith.constant dense<0.000000e+00> : vector<128xf32>
    %6 = vector.multi_reduction <add>, %0, %cst [0] : vector<64x128xf32> to vector<128xf32>
    %7 = vector.shape_cast %6 : vector<128xf32> to vector<1x128xf32>
    %8 = arith.mulf %0, %0 : vector<64x128xf32>
    %cst_4 = arith.constant dense<0.000000e+00> : vector<128xf32>
    %9 = vector.multi_reduction <add>, %8, %cst_4 [0] : vector<64x128xf32> to vector<128xf32>
    %10 = vector.shape_cast %9 : vector<128xf32> to vector<1x128xf32>
    %cst_5 = arith.constant 1.562500e-02 : f32
    %11 = vector.broadcast %cst_5 : f32 to vector<1x128xf32>
    %12 = arith.mulf %7, %11 : vector<1x128xf32>
    %cst_6 = arith.constant 1.562500e-02 : f32
    %13 = vector.broadcast %cst_6 : f32 to vector<1x128xf32>
    %14 = arith.mulf %10, %13 : vector<1x128xf32>
    %15 = arith.mulf %12, %12 : vector<1x128xf32>
    %16 = arith.subf %14, %15 : vector<1x128xf32>
    %17 = vector.broadcast %12 : vector<1x128xf32> to vector<64x128xf32>
    %18 = arith.subf %0, %17 : vector<64x128xf32>
    %cst_7 = arith.constant 9.99999974E-6 : f32
    %19 = vector.broadcast %cst_7 : f32 to vector<1x128xf32>
    %20 = arith.addf %16, %19 : vector<1x128xf32>
    %21 = math.rsqrt %20 : vector<1x128xf32>
    %22 = vector.broadcast %21 : vector<1x128xf32> to vector<64x128xf32>
    %23 = arith.mulf %18, %22 : vector<64x128xf32>
    %24 = vector.broadcast %3 : vector<1x128xf32> to vector<64x128xf32>
    %25 = arith.mulf %23, %24 : vector<64x128xf32>
    %26 = vector.broadcast %4 : vector<1x128xf32> to vector<64x128xf32>
    %27 = arith.addf %25, %26 : vector<64x128xf32>
    %28 = arith.truncf %27 : vector<64x128xf32> to vector<64x128xbf16>
    %c0_8 = arith.constant 0 : index
    %c0_9 = arith.constant 0 : index
    %c0_10 = arith.constant 0 : index
    %29 = vector.load %arg3[%c0_8, %c0_9, %c0_10] : memref<4x128x128xbf16, #tpu.memory_space<vmem>>, vector<1x128x128xbf16>
    %30 = vector.shape_cast %29 : vector<1x128x128xbf16> to vector<128x128xbf16>
    %cst_11 = arith.constant dense<0.000000e+00> : vector<64x128xf32>
    %31 = tpu.matmul %28, %30, %cst_11 {dimension_numbers = #tpu.dot_dimension_numbers<[1], [0], [0], [1], [0, 0, 1, 1], [], []>} : vector<64x128xbf16>, vector<128x128xbf16>, vector<64x128xf32> -> vector<64x128xf32>
    %32 = vector.broadcast %5 : vector<1x128xf32> to vector<64x128xf32>
    %33 = arith.addf %31, %32 : vector<64x128xf32>
    %cst_12 = arith.constant 5.000000e-01 : f32
    %34 = vector.broadcast %cst_12 : f32 to vector<64x128xf32>
    %35 = arith.mulf %34, %33 : vector<64x128xf32>
    %cst_13 = arith.constant 0.707106769 : f32
    %36 = vector.broadcast %cst_13 : f32 to vector<64x128xf32>
    %37 = arith.mulf %33, %36 : vector<64x128xf32>
    %38 = math.absf %37 : vector<64x128xf32>
    %cst_14 = arith.constant 0.327591091 : f32
    %39 = vector.broadcast %cst_14 : f32 to vector<64x128xf32>
    %40 = arith.mulf %39, %38 : vector<64x128xf32>
    %cst_15 = arith.constant 1.000000e+00 : f32
    %41 = vector.broadcast %cst_15 : f32 to vector<64x128xf32>
    %42 = arith.addf %41, %40 : vector<64x128xf32>
    %43 = tpu.reciprocal %42 {approx = true} : vector<64x128xf32> -> vector<64x128xf32>
    %cst_16 = arith.constant 1.06140542 : f32
    %44 = vector.broadcast %cst_16 : f32 to vector<64x128xf32>
    %45 = arith.mulf %44, %43 : vector<64x128xf32>
    %cst_17 = arith.constant -1.45315206 : f32
    %46 = vector.broadcast %cst_17 : f32 to vector<64x128xf32>
    %47 = arith.addf %45, %46 : vector<64x128xf32>
    %48 = arith.mulf %47, %43 : vector<64x128xf32>
    %cst_18 = arith.constant 1.42141378 : f32
    %49 = vector.broadcast %cst_18 : f32 to vector<64x128xf32>
    %50 = arith.addf %48, %49 : vector<64x128xf32>
    %51 = arith.mulf %50, %43 : vector<64x128xf32>
    %cst_19 = arith.constant -0.284496725 : f32
    %52 = vector.broadcast %cst_19 : f32 to vector<64x128xf32>
    %53 = arith.addf %51, %52 : vector<64x128xf32>
    %54 = arith.mulf %53, %43 : vector<64x128xf32>
    %cst_20 = arith.constant 0.254829586 : f32
    %55 = vector.broadcast %cst_20 : f32 to vector<64x128xf32>
    %56 = arith.addf %54, %55 : vector<64x128xf32>
    %57 = arith.mulf %56, %43 : vector<64x128xf32>
    %58 = arith.mulf %38, %38 : vector<64x128xf32>
    %cst_21 = arith.constant 0.000000e+00 : f32
    %59 = vector.broadcast %cst_21 : f32 to vector<64x128xf32>
    %60 = arith.subf %59, %58 : vector<64x128xf32>
    %61 = math.exp %60 : vector<64x128xf32>
    %62 = arith.mulf %57, %61 : vector<64x128xf32>
    %cst_22 = arith.constant 1.000000e+00 : f32
    %63 = vector.broadcast %cst_22 : f32 to vector<64x128xf32>
    %64 = arith.subf %63, %62 : vector<64x128xf32>
    %cst_23 = arith.constant 0.000000e+00 : f32
    %65 = vector.broadcast %cst_23 : f32 to vector<64x128xf32>
    %66 = arith.cmpf oge, %37, %65 : vector<64x128xf32>
    %cst_24 = arith.constant 0.000000e+00 : f32
    %67 = vector.broadcast %cst_24 : f32 to vector<64x128xf32>
    %68 = arith.subf %67, %64 : vector<64x128xf32>
    %69 = arith.select %66, %64, %68 : vector<64x128xi1>, vector<64x128xf32>
    %cst_25 = arith.constant 1.000000e+00 : f32
    %70 = vector.broadcast %cst_25 : f32 to vector<64x128xf32>
    %71 = arith.addf %70, %69 : vector<64x128xf32>
    %72 = arith.mulf %35, %71 : vector<64x128xf32>
    %c1 = arith.constant 1 : index
    %c0_26 = arith.constant 0 : index
    %c0_27 = arith.constant 0 : index
    %73 = vector.load %arg2[%c1, %c0_26, %c0_27] : memref<6x3x128xf32, #tpu.memory_space<vmem>>, vector<1x3x128xf32>
    %74 = vector.shape_cast %73 : vector<1x3x128xf32> to vector<3x128xf32>
    %75 = vector.extract_strided_slice %74 {offsets = [0, 0], sizes = [1, 128], strides = [1, 1]} : vector<3x128xf32> to vector<1x128xf32>
    %76 = vector.extract_strided_slice %74 {offsets = [1, 0], sizes = [1, 128], strides = [1, 1]} : vector<3x128xf32> to vector<1x128xf32>
    %77 = vector.extract_strided_slice %74 {offsets = [2, 0], sizes = [1, 128], strides = [1, 1]} : vector<3x128xf32> to vector<1x128xf32>
    %cst_28 = arith.constant dense<0.000000e+00> : vector<128xf32>
    %78 = vector.multi_reduction <add>, %72, %cst_28 [0] : vector<64x128xf32> to vector<128xf32>
    %79 = vector.shape_cast %78 : vector<128xf32> to vector<1x128xf32>
    %80 = arith.mulf %72, %72 : vector<64x128xf32>
    %cst_29 = arith.constant dense<0.000000e+00> : vector<128xf32>
    %81 = vector.multi_reduction <add>, %80, %cst_29 [0] : vector<64x128xf32> to vector<128xf32>
    %82 = vector.shape_cast %81 : vector<128xf32> to vector<1x128xf32>
    %cst_30 = arith.constant 1.562500e-02 : f32
    %83 = vector.broadcast %cst_30 : f32 to vector<1x128xf32>
    %84 = arith.mulf %79, %83 : vector<1x128xf32>
    %cst_31 = arith.constant 1.562500e-02 : f32
    %85 = vector.broadcast %cst_31 : f32 to vector<1x128xf32>
    %86 = arith.mulf %82, %85 : vector<1x128xf32>
    %87 = arith.mulf %84, %84 : vector<1x128xf32>
    %88 = arith.subf %86, %87 : vector<1x128xf32>
    %89 = vector.broadcast %84 : vector<1x128xf32> to vector<64x128xf32>
    %90 = arith.subf %72, %89 : vector<64x128xf32>
    %cst_32 = arith.constant 9.99999974E-6 : f32
    %91 = vector.broadcast %cst_32 : f32 to vector<1x128xf32>
    %92 = arith.addf %88, %91 : vector<1x128xf32>
    %93 = math.rsqrt %92 : vector<1x128xf32>
    %94 = vector.broadcast %93 : vector<1x128xf32> to vector<64x128xf32>
    %95 = arith.mulf %90, %94 : vector<64x128xf32>
    %96 = vector.broadcast %75 : vector<1x128xf32> to vector<64x128xf32>
    %97 = arith.mulf %95, %96 : vector<64x128xf32>
    %98 = vector.broadcast %76 : vector<1x128xf32> to vector<64x128xf32>
    %99 = arith.addf %97, %98 : vector<64x128xf32>
    %100 = arith.truncf %99 : vector<64x128xf32> to vector<64x128xbf16>
    %c1_33 = arith.constant 1 : index
    %c0_34 = arith.constant 0 : index
    %c0_35 = arith.constant 0 : index
    %101 = vector.load %arg3[%c1_33, %c0_34, %c0_35] : memref<4x128x128xbf16, #tpu.memory_space<vmem>>, vector<1x128x128xbf16>
    %102 = vector.shape_cast %101 : vector<1x128x128xbf16> to vector<128x128xbf16>
    %cst_36 = arith.constant dense<0.000000e+00> : vector<64x128xf32>
    %103 = tpu.matmul %100, %102, %cst_36 {dimension_numbers = #tpu.dot_dimension_numbers<[1], [0], [0], [1], [0, 0, 1, 1], [], []>} : vector<64x128xbf16>, vector<128x128xbf16>, vector<64x128xf32> -> vector<64x128xf32>
    %104 = vector.broadcast %77 : vector<1x128xf32> to vector<64x128xf32>
    %105 = arith.addf %103, %104 : vector<64x128xf32>
    %cst_37 = arith.constant 5.000000e-01 : f32
    %106 = vector.broadcast %cst_37 : f32 to vector<64x128xf32>
    %107 = arith.mulf %106, %105 : vector<64x128xf32>
    %cst_38 = arith.constant 0.707106769 : f32
    %108 = vector.broadcast %cst_38 : f32 to vector<64x128xf32>
    %109 = arith.mulf %105, %108 : vector<64x128xf32>
    %110 = math.absf %109 : vector<64x128xf32>
    %cst_39 = arith.constant 0.327591091 : f32
    %111 = vector.broadcast %cst_39 : f32 to vector<64x128xf32>
    %112 = arith.mulf %111, %110 : vector<64x128xf32>
    %cst_40 = arith.constant 1.000000e+00 : f32
    %113 = vector.broadcast %cst_40 : f32 to vector<64x128xf32>
    %114 = arith.addf %113, %112 : vector<64x128xf32>
    %115 = tpu.reciprocal %114 {approx = true} : vector<64x128xf32> -> vector<64x128xf32>
    %cst_41 = arith.constant 1.06140542 : f32
    %116 = vector.broadcast %cst_41 : f32 to vector<64x128xf32>
    %117 = arith.mulf %116, %115 : vector<64x128xf32>
    %cst_42 = arith.constant -1.45315206 : f32
    %118 = vector.broadcast %cst_42 : f32 to vector<64x128xf32>
    %119 = arith.addf %117, %118 : vector<64x128xf32>
    %120 = arith.mulf %119, %115 : vector<64x128xf32>
    %cst_43 = arith.constant 1.42141378 : f32
    %121 = vector.broadcast %cst_43 : f32 to vector<64x128xf32>
    %122 = arith.addf %120, %121 : vector<64x128xf32>
    %123 = arith.mulf %122, %115 : vector<64x128xf32>
    %cst_44 = arith.constant -0.284496725 : f32
    %124 = vector.broadcast %cst_44 : f32 to vector<64x128xf32>
    %125 = arith.addf %123, %124 : vector<64x128xf32>
    %126 = arith.mulf %125, %115 : vector<64x128xf32>
    %cst_45 = arith.constant 0.254829586 : f32
    %127 = vector.broadcast %cst_45 : f32 to vector<64x128xf32>
    %128 = arith.addf %126, %127 : vector<64x128xf32>
    %129 = arith.mulf %128, %115 : vector<64x128xf32>
    %130 = arith.mulf %110, %110 : vector<64x128xf32>
    %cst_46 = arith.constant 0.000000e+00 : f32
    %131 = vector.broadcast %cst_46 : f32 to vector<64x128xf32>
    %132 = arith.subf %131, %130 : vector<64x128xf32>
    %133 = math.exp %132 : vector<64x128xf32>
    %134 = arith.mulf %129, %133 : vector<64x128xf32>
    %cst_47 = arith.constant 1.000000e+00 : f32
    %135 = vector.broadcast %cst_47 : f32 to vector<64x128xf32>
    %136 = arith.subf %135, %134 : vector<64x128xf32>
    %cst_48 = arith.constant 0.000000e+00 : f32
    %137 = vector.broadcast %cst_48 : f32 to vector<64x128xf32>
    %138 = arith.cmpf oge, %109, %137 : vector<64x128xf32>
    %cst_49 = arith.constant 0.000000e+00 : f32
    %139 = vector.broadcast %cst_49 : f32 to vector<64x128xf32>
    %140 = arith.subf %139, %136 : vector<64x128xf32>
    %141 = arith.select %138, %136, %140 : vector<64x128xi1>, vector<64x128xf32>
    %cst_50 = arith.constant 1.000000e+00 : f32
    %142 = vector.broadcast %cst_50 : f32 to vector<64x128xf32>
    %143 = arith.addf %142, %141 : vector<64x128xf32>
    %144 = arith.mulf %107, %143 : vector<64x128xf32>
    %145 = arith.addf %99, %144 : vector<64x128xf32>
    %c2 = arith.constant 2 : index
    %c0_51 = arith.constant 0 : index
    %c0_52 = arith.constant 0 : index
    %146 = vector.load %arg2[%c2, %c0_51, %c0_52] : memref<6x3x128xf32, #tpu.memory_space<vmem>>, vector<1x3x128xf32>
    %147 = vector.shape_cast %146 : vector<1x3x128xf32> to vector<3x128xf32>
    %148 = vector.extract_strided_slice %147 {offsets = [0, 0], sizes = [1, 128], strides = [1, 1]} : vector<3x128xf32> to vector<1x128xf32>
    %149 = vector.extract_strided_slice %147 {offsets = [1, 0], sizes = [1, 128], strides = [1, 1]} : vector<3x128xf32> to vector<1x128xf32>
    %150 = vector.extract_strided_slice %147 {offsets = [2, 0], sizes = [1, 128], strides = [1, 1]} : vector<3x128xf32> to vector<1x128xf32>
    %cst_53 = arith.constant dense<0.000000e+00> : vector<128xf32>
    %151 = vector.multi_reduction <add>, %145, %cst_53 [0] : vector<64x128xf32> to vector<128xf32>
    %152 = vector.shape_cast %151 : vector<128xf32> to vector<1x128xf32>
    %153 = arith.mulf %145, %145 : vector<64x128xf32>
    %cst_54 = arith.constant dense<0.000000e+00> : vector<128xf32>
    %154 = vector.multi_reduction <add>, %153, %cst_54 [0] : vector<64x128xf32> to vector<128xf32>
    %155 = vector.shape_cast %154 : vector<128xf32> to vector<1x128xf32>
    %cst_55 = arith.constant 1.562500e-02 : f32
    %156 = vector.broadcast %cst_55 : f32 to vector<1x128xf32>
    %157 = arith.mulf %152, %156 : vector<1x128xf32>
    %cst_56 = arith.constant 1.562500e-02 : f32
    %158 = vector.broadcast %cst_56 : f32 to vector<1x128xf32>
    %159 = arith.mulf %155, %158 : vector<1x128xf32>
    %160 = arith.mulf %157, %157 : vector<1x128xf32>
    %161 = arith.subf %159, %160 : vector<1x128xf32>
    %162 = vector.broadcast %157 : vector<1x128xf32> to vector<64x128xf32>
    %163 = arith.subf %145, %162 : vector<64x128xf32>
    %cst_57 = arith.constant 9.99999974E-6 : f32
    %164 = vector.broadcast %cst_57 : f32 to vector<1x128xf32>
    %165 = arith.addf %161, %164 : vector<1x128xf32>
    %166 = math.rsqrt %165 : vector<1x128xf32>
    %167 = vector.broadcast %166 : vector<1x128xf32> to vector<64x128xf32>
    %168 = arith.mulf %163, %167 : vector<64x128xf32>
    %169 = vector.broadcast %148 : vector<1x128xf32> to vector<64x128xf32>
    %170 = arith.mulf %168, %169 : vector<64x128xf32>
    %171 = vector.broadcast %149 : vector<1x128xf32> to vector<64x128xf32>
    %172 = arith.addf %170, %171 : vector<64x128xf32>
    %173 = arith.truncf %172 : vector<64x128xf32> to vector<64x128xbf16>
    %c0_58 = arith.constant 0 : index
    %c0_59 = arith.constant 0 : index
    %c0_60 = arith.constant 0 : index
    %174 = vector.load %arg4[%c0_58, %c0_59, %c0_60] : memref<2x128x256xbf16, #tpu.memory_space<vmem>>, vector<1x128x256xbf16>
    %175 = vector.shape_cast %174 : vector<1x128x256xbf16> to vector<128x256xbf16>
    %cst_61 = arith.constant dense<0.000000e+00> : vector<64x256xf32>
    %176 = tpu.matmul %173, %175, %cst_61 {dimension_numbers = #tpu.dot_dimension_numbers<[1], [0], [0], [1], [0, 0, 1, 1], [], []>} : vector<64x128xbf16>, vector<128x256xbf16>, vector<64x256xf32> -> vector<64x256xf32>
    %177 = vector.extract_strided_slice %176 {offsets = [0, 0], sizes = [64, 128], strides = [1, 1]} : vector<64x256xf32> to vector<64x128xf32>
    %178 = vector.extract_strided_slice %176 {offsets = [0, 128], sizes = [64, 128], strides = [1, 1]} : vector<64x256xf32> to vector<64x128xf32>
    %179 = arith.truncf %178 : vector<64x128xf32> to vector<64x128xbf16>
    %c0_62 = arith.constant 0 : index
    %c0_63 = arith.constant 0 : index
    %180 = vector.load %arg1[%c0_62, %c0_63] : memref<64x64xbf16, #tpu.memory_space<vmem>>, vector<64x64xbf16>
    %cst_64 = arith.constant dense<0.000000e+00> : vector<64x128xf32>
    %181 = tpu.matmul %180, %179, %cst_64 {dimension_numbers = #tpu.dot_dimension_numbers<[1], [0], [0], [1], [0, 0, 1, 1], [], []>} : vector<64x64xbf16>, vector<64x128xbf16>, vector<64x128xf32> -> vector<64x128xf32>
    %182 = arith.addf %177, %181 : vector<64x128xf32>
    %183 = vector.broadcast %150 : vector<1x128xf32> to vector<64x128xf32>
    %184 = arith.addf %182, %183 : vector<64x128xf32>
    %185 = arith.addf %184, %172 : vector<64x128xf32>
    %cst_65 = arith.constant 5.000000e-01 : f32
    %186 = vector.broadcast %cst_65 : f32 to vector<64x128xf32>
    %187 = arith.mulf %186, %185 : vector<64x128xf32>
    %cst_66 = arith.constant 0.707106769 : f32
    %188 = vector.broadcast %cst_66 : f32 to vector<64x128xf32>
    %189 = arith.mulf %185, %188 : vector<64x128xf32>
    %190 = math.absf %189 : vector<64x128xf32>
    %cst_67 = arith.constant 0.327591091 : f32
    %191 = vector.broadcast %cst_67 : f32 to vector<64x128xf32>
    %192 = arith.mulf %191, %190 : vector<64x128xf32>
    %cst_68 = arith.constant 1.000000e+00 : f32
    %193 = vector.broadcast %cst_68 : f32 to vector<64x128xf32>
    %194 = arith.addf %193, %192 : vector<64x128xf32>
    %195 = tpu.reciprocal %194 {approx = true} : vector<64x128xf32> -> vector<64x128xf32>
    %cst_69 = arith.constant 1.06140542 : f32
    %196 = vector.broadcast %cst_69 : f32 to vector<64x128xf32>
    %197 = arith.mulf %196, %195 : vector<64x128xf32>
    %cst_70 = arith.constant -1.45315206 : f32
    %198 = vector.broadcast %cst_70 : f32 to vector<64x128xf32>
    %199 = arith.addf %197, %198 : vector<64x128xf32>
    %200 = arith.mulf %199, %195 : vector<64x128xf32>
    %cst_71 = arith.constant 1.42141378 : f32
    %201 = vector.broadcast %cst_71 : f32 to vector<64x128xf32>
    %202 = arith.addf %200, %201 : vector<64x128xf32>
    %203 = arith.mulf %202, %195 : vector<64x128xf32>
    %cst_72 = arith.constant -0.284496725 : f32
    %204 = vector.broadcast %cst_72 : f32 to vector<64x128xf32>
    %205 = arith.addf %203, %204 : vector<64x128xf32>
    %206 = arith.mulf %205, %195 : vector<64x128xf32>
    %cst_73 = arith.constant 0.254829586 : f32
    %207 = vector.broadcast %cst_73 : f32 to vector<64x128xf32>
    %208 = arith.addf %206, %207 : vector<64x128xf32>
    %209 = arith.mulf %208, %195 : vector<64x128xf32>
    %210 = arith.mulf %190, %190 : vector<64x128xf32>
    %cst_74 = arith.constant 0.000000e+00 : f32
    %211 = vector.broadcast %cst_74 : f32 to vector<64x128xf32>
    %212 = arith.subf %211, %210 : vector<64x128xf32>
    %213 = math.exp %212 : vector<64x128xf32>
    %214 = arith.mulf %209, %213 : vector<64x128xf32>
    %cst_75 = arith.constant 1.000000e+00 : f32
    %215 = vector.broadcast %cst_75 : f32 to vector<64x128xf32>
    %216 = arith.subf %215, %214 : vector<64x128xf32>
    %cst_76 = arith.constant 0.000000e+00 : f32
    %217 = vector.broadcast %cst_76 : f32 to vector<64x128xf32>
    %218 = arith.cmpf oge, %189, %217 : vector<64x128xf32>
    %cst_77 = arith.constant 0.000000e+00 : f32
    %219 = vector.broadcast %cst_77 : f32 to vector<64x128xf32>
    %220 = arith.subf %219, %216 : vector<64x128xf32>
    %221 = arith.select %218, %216, %220 : vector<64x128xi1>, vector<64x128xf32>
    %cst_78 = arith.constant 1.000000e+00 : f32
    %222 = vector.broadcast %cst_78 : f32 to vector<64x128xf32>
    %223 = arith.addf %222, %221 : vector<64x128xf32>
    %224 = arith.mulf %187, %223 : vector<64x128xf32>
    %c3 = arith.constant 3 : index
    %c0_79 = arith.constant 0 : index
    %c0_80 = arith.constant 0 : index
    %225 = vector.load %arg2[%c3, %c0_79, %c0_80] : memref<6x3x128xf32, #tpu.memory_space<vmem>>, vector<1x3x128xf32>
    %226 = vector.shape_cast %225 : vector<1x3x128xf32> to vector<3x128xf32>
    %227 = vector.extract_strided_slice %226 {offsets = [0, 0], sizes = [1, 128], strides = [1, 1]} : vector<3x128xf32> to vector<1x128xf32>
    %228 = vector.extract_strided_slice %226 {offsets = [1, 0], sizes = [1, 128], strides = [1, 1]} : vector<3x128xf32> to vector<1x128xf32>
    %229 = vector.extract_strided_slice %226 {offsets = [2, 0], sizes = [1, 128], strides = [1, 1]} : vector<3x128xf32> to vector<1x128xf32>
    %cst_81 = arith.constant dense<0.000000e+00> : vector<128xf32>
    %230 = vector.multi_reduction <add>, %224, %cst_81 [0] : vector<64x128xf32> to vector<128xf32>
    %231 = vector.shape_cast %230 : vector<128xf32> to vector<1x128xf32>
    %232 = arith.mulf %224, %224 : vector<64x128xf32>
    %cst_82 = arith.constant dense<0.000000e+00> : vector<128xf32>
    %233 = vector.multi_reduction <add>, %232, %cst_82 [0] : vector<64x128xf32> to vector<128xf32>
    %234 = vector.shape_cast %233 : vector<128xf32> to vector<1x128xf32>
    %cst_83 = arith.constant 1.562500e-02 : f32
    %235 = vector.broadcast %cst_83 : f32 to vector<1x128xf32>
    %236 = arith.mulf %231, %235 : vector<1x128xf32>
    %cst_84 = arith.constant 1.562500e-02 : f32
    %237 = vector.broadcast %cst_84 : f32 to vector<1x128xf32>
    %238 = arith.mulf %234, %237 : vector<1x128xf32>
    %239 = arith.mulf %236, %236 : vector<1x128xf32>
    %240 = arith.subf %238, %239 : vector<1x128xf32>
    %241 = vector.broadcast %236 : vector<1x128xf32> to vector<64x128xf32>
    %242 = arith.subf %224, %241 : vector<64x128xf32>
    %cst_85 = arith.constant 9.99999974E-6 : f32
    %243 = vector.broadcast %cst_85 : f32 to vector<1x128xf32>
    %244 = arith.addf %240, %243 : vector<1x128xf32>
    %245 = math.rsqrt %244 : vector<1x128xf32>
    %246 = vector.broadcast %245 : vector<1x128xf32> to vector<64x128xf32>
    %247 = arith.mulf %242, %246 : vector<64x128xf32>
    %248 = vector.broadcast %227 : vector<1x128xf32> to vector<64x128xf32>
    %249 = arith.mulf %247, %248 : vector<64x128xf32>
    %250 = vector.broadcast %228 : vector<1x128xf32> to vector<64x128xf32>
    %251 = arith.addf %249, %250 : vector<64x128xf32>
    %252 = arith.truncf %251 : vector<64x128xf32> to vector<64x128xbf16>
    %c1_86 = arith.constant 1 : index
    %c0_87 = arith.constant 0 : index
    %c0_88 = arith.constant 0 : index
    %253 = vector.load %arg4[%c1_86, %c0_87, %c0_88] : memref<2x128x256xbf16, #tpu.memory_space<vmem>>, vector<1x128x256xbf16>
    %254 = vector.shape_cast %253 : vector<1x128x256xbf16> to vector<128x256xbf16>
    %cst_89 = arith.constant dense<0.000000e+00> : vector<64x256xf32>
    %255 = tpu.matmul %252, %254, %cst_89 {dimension_numbers = #tpu.dot_dimension_numbers<[1], [0], [0], [1], [0, 0, 1, 1], [], []>} : vector<64x128xbf16>, vector<128x256xbf16>, vector<64x256xf32> -> vector<64x256xf32>
    %256 = vector.extract_strided_slice %255 {offsets = [0, 0], sizes = [64, 128], strides = [1, 1]} : vector<64x256xf32> to vector<64x128xf32>
    %257 = vector.extract_strided_slice %255 {offsets = [0, 128], sizes = [64, 128], strides = [1, 1]} : vector<64x256xf32> to vector<64x128xf32>
    %258 = arith.truncf %257 : vector<64x128xf32> to vector<64x128xbf16>
    %c0_90 = arith.constant 0 : index
    %c0_91 = arith.constant 0 : index
    %259 = vector.load %arg1[%c0_90, %c0_91] : memref<64x64xbf16, #tpu.memory_space<vmem>>, vector<64x64xbf16>
    %cst_92 = arith.constant dense<0.000000e+00> : vector<64x128xf32>
    %260 = tpu.matmul %259, %258, %cst_92 {dimension_numbers = #tpu.dot_dimension_numbers<[1], [0], [0], [1], [0, 0, 1, 1], [], []>} : vector<64x64xbf16>, vector<64x128xbf16>, vector<64x128xf32> -> vector<64x128xf32>
    %261 = arith.addf %256, %260 : vector<64x128xf32>
    %262 = vector.broadcast %229 : vector<1x128xf32> to vector<64x128xf32>
    %263 = arith.addf %261, %262 : vector<64x128xf32>
    %264 = arith.addf %263, %251 : vector<64x128xf32>
    %cst_93 = arith.constant 5.000000e-01 : f32
    %265 = vector.broadcast %cst_93 : f32 to vector<64x128xf32>
    %266 = arith.mulf %265, %264 : vector<64x128xf32>
    %cst_94 = arith.constant 0.707106769 : f32
    %267 = vector.broadcast %cst_94 : f32 to vector<64x128xf32>
    %268 = arith.mulf %264, %267 : vector<64x128xf32>
    %269 = math.absf %268 : vector<64x128xf32>
    %cst_95 = arith.constant 0.327591091 : f32
    %270 = vector.broadcast %cst_95 : f32 to vector<64x128xf32>
    %271 = arith.mulf %270, %269 : vector<64x128xf32>
    %cst_96 = arith.constant 1.000000e+00 : f32
    %272 = vector.broadcast %cst_96 : f32 to vector<64x128xf32>
    %273 = arith.addf %272, %271 : vector<64x128xf32>
    %274 = tpu.reciprocal %273 {approx = true} : vector<64x128xf32> -> vector<64x128xf32>
    %cst_97 = arith.constant 1.06140542 : f32
    %275 = vector.broadcast %cst_97 : f32 to vector<64x128xf32>
    %276 = arith.mulf %275, %274 : vector<64x128xf32>
    %cst_98 = arith.constant -1.45315206 : f32
    %277 = vector.broadcast %cst_98 : f32 to vector<64x128xf32>
    %278 = arith.addf %276, %277 : vector<64x128xf32>
    %279 = arith.mulf %278, %274 : vector<64x128xf32>
    %cst_99 = arith.constant 1.42141378 : f32
    %280 = vector.broadcast %cst_99 : f32 to vector<64x128xf32>
    %281 = arith.addf %279, %280 : vector<64x128xf32>
    %282 = arith.mulf %281, %274 : vector<64x128xf32>
    %cst_100 = arith.constant -0.284496725 : f32
    %283 = vector.broadcast %cst_100 : f32 to vector<64x128xf32>
    %284 = arith.addf %282, %283 : vector<64x128xf32>
    %285 = arith.mulf %284, %274 : vector<64x128xf32>
    %cst_101 = arith.constant 0.254829586 : f32
    %286 = vector.broadcast %cst_101 : f32 to vector<64x128xf32>
    %287 = arith.addf %285, %286 : vector<64x128xf32>
    %288 = arith.mulf %287, %274 : vector<64x128xf32>
    %289 = arith.mulf %269, %269 : vector<64x128xf32>
    %cst_102 = arith.constant 0.000000e+00 : f32
    %290 = vector.broadcast %cst_102 : f32 to vector<64x128xf32>
    %291 = arith.subf %290, %289 : vector<64x128xf32>
    %292 = math.exp %291 : vector<64x128xf32>
    %293 = arith.mulf %288, %292 : vector<64x128xf32>
    %cst_103 = arith.constant 1.000000e+00 : f32
    %294 = vector.broadcast %cst_103 : f32 to vector<64x128xf32>
    %295 = arith.subf %294, %293 : vector<64x128xf32>
    %cst_104 = arith.constant 0.000000e+00 : f32
    %296 = vector.broadcast %cst_104 : f32 to vector<64x128xf32>
    %297 = arith.cmpf oge, %268, %296 : vector<64x128xf32>
    %cst_105 = arith.constant 0.000000e+00 : f32
    %298 = vector.broadcast %cst_105 : f32 to vector<64x128xf32>
    %299 = arith.subf %298, %295 : vector<64x128xf32>
    %300 = arith.select %297, %295, %299 : vector<64x128xi1>, vector<64x128xf32>
    %cst_106 = arith.constant 1.000000e+00 : f32
    %301 = vector.broadcast %cst_106 : f32 to vector<64x128xf32>
    %302 = arith.addf %301, %300 : vector<64x128xf32>
    %303 = arith.mulf %266, %302 : vector<64x128xf32>
    %c4 = arith.constant 4 : index
    %c0_107 = arith.constant 0 : index
    %c0_108 = arith.constant 0 : index
    %304 = vector.load %arg2[%c4, %c0_107, %c0_108] : memref<6x3x128xf32, #tpu.memory_space<vmem>>, vector<1x3x128xf32>
    %305 = vector.shape_cast %304 : vector<1x3x128xf32> to vector<3x128xf32>
    %306 = vector.extract_strided_slice %305 {offsets = [0, 0], sizes = [1, 128], strides = [1, 1]} : vector<3x128xf32> to vector<1x128xf32>
    %307 = vector.extract_strided_slice %305 {offsets = [1, 0], sizes = [1, 128], strides = [1, 1]} : vector<3x128xf32> to vector<1x128xf32>
    %308 = vector.extract_strided_slice %305 {offsets = [2, 0], sizes = [1, 128], strides = [1, 1]} : vector<3x128xf32> to vector<1x128xf32>
    %cst_109 = arith.constant dense<0.000000e+00> : vector<128xf32>
    %309 = vector.multi_reduction <add>, %303, %cst_109 [0] : vector<64x128xf32> to vector<128xf32>
    %310 = vector.shape_cast %309 : vector<128xf32> to vector<1x128xf32>
    %311 = arith.mulf %303, %303 : vector<64x128xf32>
    %cst_110 = arith.constant dense<0.000000e+00> : vector<128xf32>
    %312 = vector.multi_reduction <add>, %311, %cst_110 [0] : vector<64x128xf32> to vector<128xf32>
    %313 = vector.shape_cast %312 : vector<128xf32> to vector<1x128xf32>
    %cst_111 = arith.constant 1.562500e-02 : f32
    %314 = vector.broadcast %cst_111 : f32 to vector<1x128xf32>
    %315 = arith.mulf %310, %314 : vector<1x128xf32>
    %cst_112 = arith.constant 1.562500e-02 : f32
    %316 = vector.broadcast %cst_112 : f32 to vector<1x128xf32>
    %317 = arith.mulf %313, %316 : vector<1x128xf32>
    %318 = arith.mulf %315, %315 : vector<1x128xf32>
    %319 = arith.subf %317, %318 : vector<1x128xf32>
    %320 = vector.broadcast %315 : vector<1x128xf32> to vector<64x128xf32>
    %321 = arith.subf %303, %320 : vector<64x128xf32>
    %cst_113 = arith.constant 9.99999974E-6 : f32
    %322 = vector.broadcast %cst_113 : f32 to vector<1x128xf32>
    %323 = arith.addf %319, %322 : vector<1x128xf32>
    %324 = math.rsqrt %323 : vector<1x128xf32>
    %325 = vector.broadcast %324 : vector<1x128xf32> to vector<64x128xf32>
    %326 = arith.mulf %321, %325 : vector<64x128xf32>
    %327 = vector.broadcast %306 : vector<1x128xf32> to vector<64x128xf32>
    %328 = arith.mulf %326, %327 : vector<64x128xf32>
    %329 = vector.broadcast %307 : vector<1x128xf32> to vector<64x128xf32>
    %330 = arith.addf %328, %329 : vector<64x128xf32>
    %331 = arith.truncf %330 : vector<64x128xf32> to vector<64x128xbf16>
    %c2_114 = arith.constant 2 : index
    %c0_115 = arith.constant 0 : index
    %c0_116 = arith.constant 0 : index
    %332 = vector.load %arg3[%c2_114, %c0_115, %c0_116] : memref<4x128x128xbf16, #tpu.memory_space<vmem>>, vector<1x128x128xbf16>
    %333 = vector.shape_cast %332 : vector<1x128x128xbf16> to vector<128x128xbf16>
    %cst_117 = arith.constant dense<0.000000e+00> : vector<64x128xf32>
    %334 = tpu.matmul %331, %333, %cst_117 {dimension_numbers = #tpu.dot_dimension_numbers<[1], [0], [0], [1], [0, 0, 1, 1], [], []>} : vector<64x128xbf16>, vector<128x128xbf16>, vector<64x128xf32> -> vector<64x128xf32>
    %335 = vector.broadcast %308 : vector<1x128xf32> to vector<64x128xf32>
    %336 = arith.addf %334, %335 : vector<64x128xf32>
    %cst_118 = arith.constant 5.000000e-01 : f32
    %337 = vector.broadcast %cst_118 : f32 to vector<64x128xf32>
    %338 = arith.mulf %337, %336 : vector<64x128xf32>
    %cst_119 = arith.constant 0.707106769 : f32
    %339 = vector.broadcast %cst_119 : f32 to vector<64x128xf32>
    %340 = arith.mulf %336, %339 : vector<64x128xf32>
    %341 = math.absf %340 : vector<64x128xf32>
    %cst_120 = arith.constant 0.327591091 : f32
    %342 = vector.broadcast %cst_120 : f32 to vector<64x128xf32>
    %343 = arith.mulf %342, %341 : vector<64x128xf32>
    %cst_121 = arith.constant 1.000000e+00 : f32
    %344 = vector.broadcast %cst_121 : f32 to vector<64x128xf32>
    %345 = arith.addf %344, %343 : vector<64x128xf32>
    %346 = tpu.reciprocal %345 {approx = true} : vector<64x128xf32> -> vector<64x128xf32>
    %cst_122 = arith.constant 1.06140542 : f32
    %347 = vector.broadcast %cst_122 : f32 to vector<64x128xf32>
    %348 = arith.mulf %347, %346 : vector<64x128xf32>
    %cst_123 = arith.constant -1.45315206 : f32
    %349 = vector.broadcast %cst_123 : f32 to vector<64x128xf32>
    %350 = arith.addf %348, %349 : vector<64x128xf32>
    %351 = arith.mulf %350, %346 : vector<64x128xf32>
    %cst_124 = arith.constant 1.42141378 : f32
    %352 = vector.broadcast %cst_124 : f32 to vector<64x128xf32>
    %353 = arith.addf %351, %352 : vector<64x128xf32>
    %354 = arith.mulf %353, %346 : vector<64x128xf32>
    %cst_125 = arith.constant -0.284496725 : f32
    %355 = vector.broadcast %cst_125 : f32 to vector<64x128xf32>
    %356 = arith.addf %354, %355 : vector<64x128xf32>
    %357 = arith.mulf %356, %346 : vector<64x128xf32>
    %cst_126 = arith.constant 0.254829586 : f32
    %358 = vector.broadcast %cst_126 : f32 to vector<64x128xf32>
    %359 = arith.addf %357, %358 : vector<64x128xf32>
    %360 = arith.mulf %359, %346 : vector<64x128xf32>
    %361 = arith.mulf %341, %341 : vector<64x128xf32>
    %cst_127 = arith.constant 0.000000e+00 : f32
    %362 = vector.broadcast %cst_127 : f32 to vector<64x128xf32>
    %363 = arith.subf %362, %361 : vector<64x128xf32>
    %364 = math.exp %363 : vector<64x128xf32>
    %365 = arith.mulf %360, %364 : vector<64x128xf32>
    %cst_128 = arith.constant 1.000000e+00 : f32
    %366 = vector.broadcast %cst_128 : f32 to vector<64x128xf32>
    %367 = arith.subf %366, %365 : vector<64x128xf32>
    %cst_129 = arith.constant 0.000000e+00 : f32
    %368 = vector.broadcast %cst_129 : f32 to vector<64x128xf32>
    %369 = arith.cmpf oge, %340, %368 : vector<64x128xf32>
    %cst_130 = arith.constant 0.000000e+00 : f32
    %370 = vector.broadcast %cst_130 : f32 to vector<64x128xf32>
    %371 = arith.subf %370, %367 : vector<64x128xf32>
    %372 = arith.select %369, %367, %371 : vector<64x128xi1>, vector<64x128xf32>
    %cst_131 = arith.constant 1.000000e+00 : f32
    %373 = vector.broadcast %cst_131 : f32 to vector<64x128xf32>
    %374 = arith.addf %373, %372 : vector<64x128xf32>
    %375 = arith.mulf %338, %374 : vector<64x128xf32>
    %376 = arith.addf %330, %375 : vector<64x128xf32>
    %c5 = arith.constant 5 : index
    %c0_132 = arith.constant 0 : index
    %c0_133 = arith.constant 0 : index
    %377 = vector.load %arg2[%c5, %c0_132, %c0_133] : memref<6x3x128xf32, #tpu.memory_space<vmem>>, vector<1x3x128xf32>
    %378 = vector.shape_cast %377 : vector<1x3x128xf32> to vector<3x128xf32>
    %379 = vector.extract_strided_slice %378 {offsets = [0, 0], sizes = [1, 128], strides = [1, 1]} : vector<3x128xf32> to vector<1x128xf32>
    %380 = vector.extract_strided_slice %378 {offsets = [1, 0], sizes = [1, 128], strides = [1, 1]} : vector<3x128xf32> to vector<1x128xf32>
    %381 = vector.extract_strided_slice %378 {offsets = [2, 0], sizes = [1, 128], strides = [1, 1]} : vector<3x128xf32> to vector<1x128xf32>
    %cst_134 = arith.constant dense<0.000000e+00> : vector<128xf32>
    %382 = vector.multi_reduction <add>, %376, %cst_134 [0] : vector<64x128xf32> to vector<128xf32>
    %383 = vector.shape_cast %382 : vector<128xf32> to vector<1x128xf32>
    %384 = arith.mulf %376, %376 : vector<64x128xf32>
    %cst_135 = arith.constant dense<0.000000e+00> : vector<128xf32>
    %385 = vector.multi_reduction <add>, %384, %cst_135 [0] : vector<64x128xf32> to vector<128xf32>
    %386 = vector.shape_cast %385 : vector<128xf32> to vector<1x128xf32>
    %cst_136 = arith.constant 1.562500e-02 : f32
    %387 = vector.broadcast %cst_136 : f32 to vector<1x128xf32>
    %388 = arith.mulf %383, %387 : vector<1x128xf32>
    %cst_137 = arith.constant 1.562500e-02 : f32
    %389 = vector.broadcast %cst_137 : f32 to vector<1x128xf32>
    %390 = arith.mulf %386, %389 : vector<1x128xf32>
    %391 = arith.mulf %388, %388 : vector<1x128xf32>
    %392 = arith.subf %390, %391 : vector<1x128xf32>
    %393 = vector.broadcast %388 : vector<1x128xf32> to vector<64x128xf32>
    %394 = arith.subf %376, %393 : vector<64x128xf32>
    %cst_138 = arith.constant 9.99999974E-6 : f32
    %395 = vector.broadcast %cst_138 : f32 to vector<1x128xf32>
    %396 = arith.addf %392, %395 : vector<1x128xf32>
    %397 = math.rsqrt %396 : vector<1x128xf32>
    %398 = vector.broadcast %397 : vector<1x128xf32> to vector<64x128xf32>
    %399 = arith.mulf %394, %398 : vector<64x128xf32>
    %400 = vector.broadcast %379 : vector<1x128xf32> to vector<64x128xf32>
    %401 = arith.mulf %399, %400 : vector<64x128xf32>
    %402 = vector.broadcast %380 : vector<1x128xf32> to vector<64x128xf32>
    %403 = arith.addf %401, %402 : vector<64x128xf32>
    %404 = arith.truncf %403 : vector<64x128xf32> to vector<64x128xbf16>
    %c3_139 = arith.constant 3 : index
    %c0_140 = arith.constant 0 : index
    %c0_141 = arith.constant 0 : index
    %405 = vector.load %arg3[%c3_139, %c0_140, %c0_141] : memref<4x128x128xbf16, #tpu.memory_space<vmem>>, vector<1x128x128xbf16>
    %406 = vector.shape_cast %405 : vector<1x128x128xbf16> to vector<128x128xbf16>
    %cst_142 = arith.constant dense<0.000000e+00> : vector<64x128xf32>
    %407 = tpu.matmul %404, %406, %cst_142 {dimension_numbers = #tpu.dot_dimension_numbers<[1], [0], [0], [1], [0, 0, 1, 1], [], []>} : vector<64x128xbf16>, vector<128x128xbf16>, vector<64x128xf32> -> vector<64x128xf32>
    %408 = vector.broadcast %381 : vector<1x128xf32> to vector<64x128xf32>
    %409 = arith.addf %407, %408 : vector<64x128xf32>
    %c0_143 = arith.constant 0 : index
    %c0_144 = arith.constant 0 : index
    %410 = vector.load %arg5[%c0_143, %c0_144] : memref<64x128xf32, #tpu.memory_space<vmem>>, vector<64x128xf32>
    tpu.vector_store %arg5[%c0_143, %c0_144], %409 {strides = array<i32>} : memref<64x128xf32, #tpu.memory_space<vmem>>, vector<64x128xf32>,
    return
  }
}

</mosaic_0001>

<llo_original>
// kernel: forward.1
$region0: #{forward.1}
  #allocation0 [shape = 'u32[]', space=smem, size = 0x4, offset = 0x4, fixed_abs, tag = 'smem constant byte address 0x4 - core index']
  #allocation1 [shape = 'u32[144,128]{1,0:T(1,128)}', space=vmem, size = 0x12000, scoped, tag = 'internal scratch']
  %s0 = inlined_call_operand.hbm [shape: f32[64,128], index: 0, kind: input, shape index: {}]
  %s1 = inlined_call_operand.hbm [shape: bf16[64,64], index: 1, kind: input, shape index: {}]
  %s2 = inlined_call_operand.hbm [shape: f32[6,3,128], index: 2, kind: input, shape index: {}]
  %s3 = inlined_call_operand.hbm [shape: bf16[4,128,128], index: 3, kind: input, shape index: {}]
  %s4 = inlined_call_operand.hbm [shape: bf16[2,128,256], index: 4, kind: input, shape index: {}]
  %s5 = inlined_call_operand.vmem [shape: f32[64,128], index: 5, kind: output, shape index: {}]
  %s6 = sld [smem:[#allocation0]]
  $region50: #{forward.1} parent=0
    _
  %s8 = ssub.s32 1, %s6
  %s9 = scalar_select 0, %s8, %s6
  $region1: #{forward.1} parent=0
    #allocation2 [shape = 'u8[32768]{0}', space=vmem, size = 0x8000, scoped, tag = 'input window, operand 0, single buffered']
    #allocation3 [shape = 's32[1]{0}', space=sflag, size = 0x4, scoped, tag = 'scoped memory for forward.1']
    #allocation4 [shape = 'u8[16384]{0}', space=vmem, size = 0x4000, scoped, tag = 'input window, operand 1, single buffered']
    #allocation5 [shape = 's32[1]{0}', space=sflag, size = 0x4, scoped, tag = 'scoped memory for forward.1']
    #allocation6 [shape = 'u8[12288]{0}', space=vmem, size = 0x3000, scoped, tag = 'input window, operand 2, single buffered']
    #allocation7 [shape = 'u8[131072]{0}', space=vmem, size = 0x20000, scoped, tag = 'input window, operand 3, single buffered']
    #allocation8 [shape = 's32[1]{0}', space=sflag, size = 0x4, scoped, tag = 'scoped memory for forward.1']
    #allocation9 [shape = 'u8[131072]{0}', space=vmem, size = 0x20000, scoped, tag = 'input window, operand 4, single buffered']
    %10 = vsyncpa [#allocation3], 0
    %11 = vsyncpa [#allocation5], 0
    %12 = vsyncpa [#allocation8], 0
    // Predicated region
    $region2: #{forward.1} parent=1 // pred_check
      _
    $region3: #{forward.1} parent=1 // pred_check_branch
      %14 = sbr.rel (0) target = $region5
    $region4: #{forward.1} parent=1 // pred_region
      %s16 = ssub.s32 1024, 1024
      %17 = vsyncadd [#allocation3], %s16
      %s18 = sshll.u32 [#allocation2], 4
      %s19 = int_to_ptr.vmem [resolvable:$true] %s18
      %24 = dma.hbm_to_vmem [thread:$0]  %s0, 1024, %s19, [#allocation3], 128, 128, 8
    $region5: #{forward.1} parent=1 // pred_fallthru
      _
    // Predicated region
    $region6: #{forward.1} parent=1 // pred_check
      _
    $region7: #{forward.1} parent=1 // pred_check_branch
      %26 = sbr.rel (0) target = $region9
    $region8: #{forward.1} parent=1 // pred_region
      %s28 = ssub.s32 512, 512
      %29 = vsyncadd [#allocation5], %s28
      %s30 = sshll.u32 [#allocation4], 4
      %s31 = int_to_ptr.vmem [resolvable:$true] %s30
      %36 = dma.hbm_to_vmem [thread:$0]  %s1, 512, %s31, [#allocation5], 64, 64, 4
    $region9: #{forward.1} parent=1 // pred_fallthru
      _
    // Predicated region
    $region10: #{forward.1} parent=1 // pred_check
      _
    $region11: #{forward.1} parent=1 // pred_check_branch
      %38 = sbr.rel (0) target = $region13
    $region12: #{forward.1} parent=1 // pred_region
      %s40 = ssub.s32 384, 384
      %41 = vsyncadd [#allocation5], %s40
      %s42 = sshll.u32 [#allocation6], 4
      %s43 = int_to_ptr.vmem [resolvable:$true] %s42
      %48 = dma.hbm_to_vmem [thread:$0]  %s2, 384, %s43, [#allocation5], 64, 64, 4
    $region13: #{forward.1} parent=1 // pred_fallthru
      _
    // Predicated region
    $region14: #{forward.1} parent=1 // pred_check
      _
    $region15: #{forward.1} parent=1 // pred_check_branch
      %50 = sbr.rel (0) target = $region17
    $region16: #{forward.1} parent=1 // pred_region
      %s52 = ssub.s32 4096, 4096
      %53 = vsyncadd [#allocation8], %s52
      %s54 = sshll.u32 [#allocation7], 4
      %s55 = int_to_ptr.vmem [resolvable:$true] %s54
      %60 = dma.hbm_to_vmem [thread:$0]  %s3, 4096, %s55, [#allocation8], 64, 64, 4
    $region17: #{forward.1} parent=1 // pred_fallthru
      _
    // Predicated region
    $region18: #{forward.1} parent=1 // pred_check
      _
    $region19: #{forward.1} parent=1 // pred_check_branch
      %62 = sbr.rel (0) target = $region21
    $region20: #{forward.1} parent=1 // pred_region
      %s64 = ssub.s32 4096, 4096
      %65 = vsyncadd [#allocation8], %s64
      %s66 = sshll.u32 [#allocation9], 4
      %s67 = int_to_ptr.vmem [resolvable:$true] %s66
      %72 = dma.hbm_to_vmem [thread:$0]  %s4, 4096, %s67, [#allocation8], 128, 128, 8
    $region21: #{forward.1} parent=1 // pred_fallthru
      _
    // Predicated region
    $region22: #{forward.1} parent=1 // pred_check
      _
    $region23: #{forward.1} parent=1 // pred_check_branch
      %74 = sbr.rel (0) target = $region25
    $region24: #{forward.1} parent=1 // pred_region
      %75 = dma.done [#allocation3], 1024
    $region25: #{forward.1} parent=1 // pred_fallthru
      _
    // Predicated region
    $region26: #{forward.1} parent=1 // pred_check
      _
    $region27: #{forward.1} parent=1 // pred_check_branch
      %77 = sbr.rel (0) target = $region29
    $region28: #{forward.1} parent=1 // pred_region
      %78 = dma.done [#allocation5], 512
    $region29: #{forward.1} parent=1 // pred_fallthru
      _
    // Predicated region
    $region30: #{forward.1} parent=1 // pred_check
      _
    $region31: #{forward.1} parent=1 // pred_check_branch
      %80 = sbr.rel (0) target = $region33
    $region32: #{forward.1} parent=1 // pred_region
      %81 = dma.done [#allocation5], 384
    $region33: #{forward.1} parent=1 // pred_fallthru
      _
    // Predicated region
    $region34: #{forward.1} parent=1 // pred_check
      _
    $region35: #{forward.1} parent=1 // pred_check_branch
      %83 = sbr.rel (0) target = $region37
    $region36: #{forward.1} parent=1 // pred_region
      %84 = dma.done [#allocation8], 4096
    $region37: #{forward.1} parent=1 // pred_fallthru
      _
    // Predicated region
    $region38: #{forward.1} parent=1 // pred_check
      _
    $region39: #{forward.1} parent=1 // pred_check_branch
      %86 = sbr.rel (0) target = $region41
    $region40: #{forward.1} parent=1 // pred_region
      %87 = dma.done [#allocation8], 4096
    $region41: #{forward.1} parent=1 // pred_fallthru
      _
    %v89 = vld [vmem:[#allocation2] sm:$0xff]
    %v90 = vld [vmem:[#allocation2 + $0x8] sm:$0xff]
    %v91 = vld [vmem:[#allocation2 + $0x10] sm:$0xff]
    %v92 = vld [vmem:[#allocation2 + $0x18] sm:$0xff]
    %v93 = vld [vmem:[#allocation2 + $0x20] sm:$0xff]
    %v94 = vld [vmem:[#allocation2 + $0x28] sm:$0xff]
    %v95 = vld [vmem:[#allocation2 + $0x30] sm:$0xff]
    %v96 = vld [vmem:[#allocation2 + $0x38] sm:$0xff]
    %v97 = vld [vmem:[#allocation6] sm:$0x7]
    %v98 = vadd.f32 %v89, %v90
    %v99 = vadd.f32 %v98, %v91
    %v100 = vadd.f32 %v99, %v92
    %v101 = vadd.f32 %v100, %v93
    %v102 = vadd.f32 %v101, %v94
    %v103 = vadd.f32 %v102, %v95
    %v104 = vadd.f32 %v103, %v96
    %v105 = vrot.slane %v104, 4
    %v106 = vadd.f32 %v104, %v105
    %v107 = vrot.slane %v106, 2
    %v108 = vadd.f32 %v106, %v107
    %v109 = vrot.slane %v108, 1
    %v110 = vadd.f32 %v108, %v109
    %v111 = vmul.f32 %v89, %v89
    %v112 = vmul.f32 %v90, %v90
    %v113 = vmul.f32 %v91, %v91
    %v114 = vmul.f32 %v92, %v92
    %v115 = vmul.f32 %v93, %v93
    %v116 = vmul.f32 %v94, %v94
    %v117 = vmul.f32 %v95, %v95
    %v118 = vmul.f32 %v96, %v96
    %v119 = vadd.f32 %v111, %v112
    %v120 = vadd.f32 %v119, %v113
    %v121 = vadd.f32 %v120, %v114
    %v122 = vadd.f32 %v121, %v115
    %v123 = vadd.f32 %v122, %v116
    %v124 = vadd.f32 %v123, %v117
    %v125 = vadd.f32 %v124, %v118
    %v126 = vrot.slane %v125, 4
    %v127 = vadd.f32 %v125, %v126
    %v128 = vrot.slane %v127, 2
    %v129 = vadd.f32 %v127, %v128
    %v130 = vrot.slane %v129, 1
    %v131 = vadd.f32 %v129, %v130
    %v132 = vmul.f32 %v110, 0.015625
    %v133 = vmul.f32 %v131, 0.015625
    %v134 = vmul.f32 %v132, %v132
    %v135 = vsub.f32 %v133, %v134
    %v136 = vsub.f32 %v89, %v132
    %v137 = vsub.f32 %v90, %v132
    %v138 = vsub.f32 %v91, %v132
    %v139 = vsub.f32 %v92, %v132
    %v140 = vsub.f32 %v93, %v132
    %v141 = vsub.f32 %v94, %v132
    %v142 = vsub.f32 %v95, %v132
    %v143 = vsub.f32 %v96, %v132
    %v144 = vadd.f32 %v135, 1e-05
    %v145 = vrsqrt.pop %v144
    %v146 = vmul.f32 %v136, %v145
    %v147 = vmul.f32 %v137, %v145
    %v148 = vmul.f32 %v138, %v145
    %v149 = vmul.f32 %v139, %v145
    %v150 = vmul.f32 %v140, %v145
    %v151 = vmul.f32 %v141, %v145
    %v152 = vmul.f32 %v142, %v145
    %v153 = vmul.f32 %v143, %v145
    %v154 = vlaneseq
    %v155 = vshrl.u32 %v154, 7
    %v156 = vsub.s32 0, %v155
    %v157 = vrot.slane %v97, %v156
    %v158 = vmul.f32 %v146, %v157
    %v159 = vmul.f32 %v147, %v157
    %v160 = vmul.f32 %v148, %v157
    %v161 = vmul.f32 %v149, %v157
    %v162 = vmul.f32 %v150, %v157
    %v163 = vmul.f32 %v151, %v157
    %v164 = vmul.f32 %v152, %v157
    %v165 = vmul.f32 %v153, %v157
    %v166 = vlaneseq
    %v167 = vshrl.u32 %v166, 7
    %v168 = vsub.s32 1, %v167
    %v169 = vrot.slane %v97, %v168
    %v170 = vadd.f32 %v158, %v169
    %v171 = vadd.f32 %v159, %v169
    %v172 = vadd.f32 %v160, %v169
    %v173 = vadd.f32 %v161, %v169
    %v174 = vadd.f32 %v162, %v169
    %v175 = vadd.f32 %v163, %v169
    %v176 = vadd.f32 %v164, %v169
    %v177 = vadd.f32 %v165, %v169
    %v178 = vpack.c.bf16 %v171, %v170
    %v179 = vpack.c.bf16 %v173, %v172
    %v180 = vpack.c.bf16 %v175, %v174
    %v181 = vpack.c.bf16 %v177, %v176
    %v182 = vld [vmem:[#allocation7] sm:$0xf]
    %v183 = vld [vmem:[#allocation7 + $0x4] sm:$0xf]
    %v184 = vld [vmem:[#allocation7 + $0x8] sm:$0xf]
    %v185 = vld [vmem:[#allocation7 + $0xc] sm:$0xf]
    %v186 = vld [vmem:[#allocation7 + $0x10] sm:$0xf]
    %v187 = vld [vmem:[#allocation7 + $0x14] sm:$0xf]
    %v188 = vld [vmem:[#allocation7 + $0x18] sm:$0xf]
    %v189 = vld [vmem:[#allocation7 + $0x1c] sm:$0xf]
    %v190 = vld [vmem:[#allocation7 + $0x20] sm:$0xf]
    %v191 = vld [vmem:[#allocation7 + $0x24] sm:$0xf]
    %v192 = vld [vmem:[#allocation7 + $0x28] sm:$0xf]
    %v193 = vld [vmem:[#allocation7 + $0x2c] sm:$0xf]
    %v194 = vld [vmem:[#allocation7 + $0x30] sm:$0xf]
    %v195 = vld [vmem:[#allocation7 + $0x34] sm:$0xf]
    %v196 = vld [vmem:[#allocation7 + $0x38] sm:$0xf]
    %v197 = vld [vmem:[#allocation7 + $0x3c] sm:$0xf]
    %v198 = vlaneseq
    %v199 = vshrl.u32 %v198, 7
    %v200 = vsub.s32 2, %v199
    %v201 = vrot.slane %v97, %v200
    %v218 = vunpack.c.l.b16 %v182
    %v219 = vunpack.c.l.b16 %v183
    %v220 = vunpack.c.l.b16 %v184
    %v221 = vunpack.c.l.b16 %v185
    %v222 = vunpack.c.l.b16 %v186
    %v223 = vunpack.c.l.b16 %v187
    %v224 = vunpack.c.l.b16 %v188
    %v225 = vunpack.c.l.b16 %v189
    %v226 = vunpack.c.l.b16 %v190
    %v227 = vunpack.c.l.b16 %v191
    %v228 = vunpack.c.l.b16 %v192
    %v229 = vunpack.c.l.b16 %v193
    %v230 = vunpack.c.l.b16 %v194
    %v231 = vunpack.c.l.b16 %v195
    %v232 = vunpack.c.l.b16 %v196
    %v233 = vunpack.c.l.b16 %v197
    %v234 = vpack.c.b16 %v219, %v218
    %v235 = vpack.c.b16 %v221, %v220
    %v236 = vpack.c.b16 %v223, %v222
    %v237 = vpack.c.b16 %v225, %v224
    %v238 = vpack.c.b16 %v227, %v226
    %v239 = vpack.c.b16 %v229, %v228
    %v240 = vpack.c.b16 %v231, %v230
    %v241 = vpack.c.b16 %v233, %v232
    %250 = vmatprep.subr.bf16.mxu0 0
    %251 = vmatpush1.bf16.msra.mxu0 %v241
    %252 = vmatprep.subr.bf16.mxu0 0
    %253 = vmatpush1.bf16.msra.mxu0 %v240
    %254 = vmatprep.subr.bf16.mxu0 0
    %255 = vmatpush1.bf16.msra.mxu0 %v239
    %256 = vmatprep.subr.bf16.mxu0 0
    %257 = vmatpush1.bf16.msra.mxu0 %v238
    %258 = vmatprep.subr.bf16.mxu0 0
    %259 = vmatpush1.bf16.msra.mxu0 %v237
    %260 = vmatprep.subr.bf16.mxu0 0
    %261 = vmatpush1.bf16.msra.mxu0 %v236
    %262 = vmatprep.subr.bf16.mxu0 0
    %263 = vmatpush1.bf16.msra.mxu0 %v235
    %264 = vmatprep.subr.bf16.mxu0 0
    %265 = vmatpush1.bf16.msra.mxu0 %v234
    %266 = vmatprep.subr.bf16.mxu0 0
    %267 = vmatpush2.bf16.msra.mxu0 0
    %268 = vmatprep.subr.bf16.mxu0 0
    %269 = vmatpush2.bf16.msra.mxu0 0
    %270 = vmatprep.subr.bf16.mxu0 0
    %271 = vmatpush2.bf16.msra.mxu0 0
    %272 = vmatprep.subr.bf16.mxu0 0
    %273 = vmatpush2.bf16.msra.mxu0 0
    %274 = vmatprep.subr.bf16.mxu0 0
    %275 = vmatpush2.bf16.msra.mxu0 0
    %276 = vmatprep.subr.bf16.mxu0 0
    %277 = vmatpush2.bf16.msra.mxu0 0
    %278 = vmatprep.subr.bf16.mxu0 0
    %279 = vmatpush2.bf16.msra.mxu0 0
    %280 = vmatprep.subr.bf16.mxu0 0
    %281 = vmatpush2.bf16.msra.mxu0 0
    %282 = vmatprep.mubr.bf16.mxu0 0
    %283 = vmatmul.mubr.bf16.gmra.mxu0 %v178
    %v284 = vpop.f32.mrf.mxu0
    %v285 = vadd.f32 %v201, %v284
    %v286 = vpop.f32.mrf.mxu0
    %v287 = vpop.f32.mrf.mxu0
    %v288 = vadd.f32 %v201, %v287
    %v289 = vpop.f32.mrf.mxu0
    %290 = vmatprep.mubr.bf16.mxu0 0
    %291 = vmatmul.mubr.bf16.gmra.mxu0 %v179
    %v292 = vpop.f32.mrf.mxu0
    %v293 = vadd.f32 %v201, %v292
    %v294 = vpop.f32.mrf.mxu0
    %v295 = vpop.f32.mrf.mxu0
    %v296 = vadd.f32 %v201, %v295
    %v297 = vpop.f32.mrf.mxu0
    %298 = vmatprep.mubr.bf16.mxu0 0
    %299 = vmatmul.mubr.bf16.gmra.mxu0 %v180
    %v300 = vpop.f32.mrf.mxu0
    %v301 = vadd.f32 %v201, %v300
    %v302 = vpop.f32.mrf.mxu0
    %v303 = vpop.f32.mrf.mxu0
    %v304 = vadd.f32 %v201, %v303
    %v305 = vpop.f32.mrf.mxu0
    %306 = vmatprep.mubr.bf16.mxu0 0
    %307 = vmatmul.mubr.bf16.gmra.mxu0 %v181
    %v308 = vpop.f32.mrf.mxu0
    %v309 = vadd.f32 %v201, %v308
    %v310 = vpop.f32.mrf.mxu0
    %v311 = vpop.f32.mrf.mxu0
    %v312 = vadd.f32 %v201, %v311
    %v313 = vpop.f32.mrf.mxu0
    %314 = vdwg.mxu0
    %v315 = vmul.f32 %v285, 0.5
    %v316 = vmul.f32 %v288, 0.5
    %v317 = vmul.f32 %v293, 0.5
    %v318 = vmul.f32 %v296, 0.5
    %v319 = vmul.f32 %v301, 0.5
    %v320 = vmul.f32 %v304, 0.5
    %v321 = vmul.f32 %v309, 0.5
    %v322 = vmul.f32 %v312, 0.5
    %v323 = vmul.f32 %v285, 0.70710677
    %v324 = vmul.f32 %v288, 0.70710677
    %v325 = vmul.f32 %v293, 0.70710677
    %v326 = vmul.f32 %v296, 0.70710677
    %v327 = vmul.f32 %v301, 0.70710677
    %v328 = vmul.f32 %v304, 0.70710677
    %v329 = vmul.f32 %v309, 0.70710677
    %v330 = vmul.f32 %v312, 0.70710677
    %v331 = vand.u32 2147483647, %v323
    %v332 = vand.u32 2147483647, %v324
    %v333 = vand.u32 2147483647, %v325
    %v334 = vand.u32 2147483647, %v326
    %v335 = vand.u32 2147483647, %v327
    %v336 = vand.u32 2147483647, %v328
    %v337 = vand.u32 2147483647, %v329
    %v338 = vand.u32 2147483647, %v330
    %v339 = vmul.f32 %v331, 0.3275911
    %v340 = vmul.f32 %v332, 0.3275911
    %v341 = vmul.f32 %v333, 0.3275911
    %v342 = vmul.f32 %v334, 0.3275911
    %v343 = vmul.f32 %v335, 0.3275911
    %v344 = vmul.f32 %v336, 0.3275911
    %v345 = vmul.f32 %v337, 0.3275911
    %v346 = vmul.f32 %v338, 0.3275911
    %v347 = vadd.f32 %v339, 1.0
    %v348 = vadd.f32 %v340, 1.0
    %v349 = vadd.f32 %v341, 1.0
    %v350 = vadd.f32 %v342, 1.0
    %v351 = vadd.f32 %v343, 1.0
    %v352 = vadd.f32 %v344, 1.0
    %v353 = vadd.f32 %v345, 1.0
    %v354 = vadd.f32 %v346, 1.0
    %v355 = vrcp.pop %v347
    %v356 = vrcp.pop %v348
    %v357 = vrcp.pop %v349
    %v358 = vrcp.pop %v350
    %v359 = vrcp.pop %v351
    %v360 = vrcp.pop %v352
    %v361 = vrcp.pop %v353
    %v362 = vrcp.pop %v354
    %v363 = vmul.f32 %v355, 1.0614054
    %v364 = vmul.f32 %v356, 1.0614054
    %v365 = vmul.f32 %v357, 1.0614054
    %v366 = vmul.f32 %v358, 1.0614054
    %v367 = vmul.f32 %v359, 1.0614054
    %v368 = vmul.f32 %v360, 1.0614054
    %v369 = vmul.f32 %v361, 1.0614054
    %v370 = vmul.f32 %v362, 1.0614054
    %v371 = vadd.f32 %v363, -1.4531521
    %v372 = vadd.f32 %v364, -1.4531521
    %v373 = vadd.f32 %v365, -1.4531521
    %v374 = vadd.f32 %v366, -1.4531521
    %v375 = vadd.f32 %v367, -1.4531521
    %v376 = vadd.f32 %v368, -1.4531521
    %v377 = vadd.f32 %v369, -1.4531521
    %v378 = vadd.f32 %v370, -1.4531521
    %v379 = vmul.f32 %v371, %v355
    %v380 = vmul.f32 %v372, %v356
    %v381 = vmul.f32 %v373, %v357
    %v382 = vmul.f32 %v374, %v358
    %v383 = vmul.f32 %v375, %v359
    %v384 = vmul.f32 %v376, %v360
    %v385 = vmul.f32 %v377, %v361
    %v386 = vmul.f32 %v378, %v362
    %v387 = vadd.f32 %v379, 1.4214138
    %v388 = vadd.f32 %v380, 1.4214138
    %v389 = vadd.f32 %v381, 1.4214138
    %v390 = vadd.f32 %v382, 1.4214138
    %v391 = vadd.f32 %v383, 1.4214138
    %v392 = vadd.f32 %v384, 1.4214138
    %v393 = vadd.f32 %v385, 1.4214138
    %v394 = vadd.f32 %v386, 1.4214138
    %v395 = vmul.f32 %v387, %v355
    %v396 = vmul.f32 %v388, %v356
    %v397 = vmul.f32 %v389, %v357
    %v398 = vmul.f32 %v390, %v358
    %v399 = vmul.f32 %v391, %v359
    %v400 = vmul.f32 %v392, %v360
    %v401 = vmul.f32 %v393, %v361
    %v402 = vmul.f32 %v394, %v362
    %v403 = vadd.f32 %v395, -0.28449672
    %v404 = vadd.f32 %v396, -0.28449672
    %v405 = vadd.f32 %v397, -0.28449672
    %v406 = vadd.f32 %v398, -0.28449672
    %v407 = vadd.f32 %v399, -0.28449672
    %v408 = vadd.f32 %v400, -0.28449672
    %v409 = vadd.f32 %v401, -0.28449672
    %v410 = vadd.f32 %v402, -0.28449672
    %v411 = vmul.f32 %v403, %v355
    %v412 = vmul.f32 %v404, %v356
    %v413 = vmul.f32 %v405, %v357
    %v414 = vmul.f32 %v406, %v358
    %v415 = vmul.f32 %v407, %v359
    %v416 = vmul.f32 %v408, %v360
    %v417 = vmul.f32 %v409, %v361
    %v418 = vmul.f32 %v410, %v362
    %v419 = vadd.f32 %v411, 0.2548296
    %v420 = vadd.f32 %v412, 0.2548296
    %v421 = vadd.f32 %v413, 0.2548296
    %v422 = vadd.f32 %v414, 0.2548296
    %v423 = vadd.f32 %v415, 0.2548296
    %v424 = vadd.f32 %v416, 0.2548296
    %v425 = vadd.f32 %v417, 0.2548296
    %v426 = vadd.f32 %v418, 0.2548296
    %v427 = vmul.f32 %v419, %v355
    %v428 = vmul.f32 %v420, %v356
    %v429 = vmul.f32 %v421, %v357
    %v430 = vmul.f32 %v422, %v358
    %v431 = vmul.f32 %v423, %v359
    %v432 = vmul.f32 %v424, %v360
    %v433 = vmul.f32 %v425, %v361
    %v434 = vmul.f32 %v426, %v362
    %v435 = vmul.f32 %v331, %v331
    %v436 = vmul.f32 %v332, %v332
    %v437 = vmul.f32 %v333, %v333
    %v438 = vmul.f32 %v334, %v334
    %v439 = vmul.f32 %v335, %v335
    %v440 = vmul.f32 %v336, %v336
    %v441 = vmul.f32 %v337, %v337
    %v442 = vmul.f32 %v338, %v338
    %v443 = vsub.f32 0.0, %v435
    %v444 = vsub.f32 0.0, %v436
    %v445 = vsub.f32 0.0, %v437
    %v446 = vsub.f32 0.0, %v438
    %v447 = vsub.f32 0.0, %v439
    %v448 = vsub.f32 0.0, %v440
    %v449 = vsub.f32 0.0, %v441
    %v450 = vsub.f32 0.0, %v442
    %v451 = vmul.f32 %v443, 1.442695
    %v452 = vpow.pop %v451
    %v453 = vmul.f32 %v444, 1.442695
    %v454 = vpow.pop %v453
    %v455 = vmul.f32 %v445, 1.442695
    %v456 = vpow.pop %v455
    %v457 = vmul.f32 %v446, 1.442695
    %v458 = vpow.pop %v457
    %v459 = vmul.f32 %v447, 1.442695
    %v460 = vpow.pop %v459
    %v461 = vmul.f32 %v448, 1.442695
    %v462 = vpow.pop %v461
    %v463 = vmul.f32 %v449, 1.442695
    %v464 = vpow.pop %v463
    %v465 = vmul.f32 %v450, 1.442695
    %v466 = vpow.pop %v465
    %v467 = vmul.f32 %v427, %v452
    %v468 = vmul.f32 %v428, %v454
    %v469 = vmul.f32 %v429, %v456
    %v470 = vmul.f32 %v430, %v458
    %v471 = vmul.f32 %v431, %v460
    %v472 = vmul.f32 %v432, %v462
    %v473 = vmul.f32 %v433, %v464
    %v474 = vmul.f32 %v434, %v466
    %v475 = vsub.f32 1.0, %v467
    %v476 = vsub.f32 1.0, %v468
    %v477 = vsub.f32 1.0, %v469
    %v478 = vsub.f32 1.0, %v470
    %v479 = vsub.f32 1.0, %v471
    %v480 = vsub.f32 1.0, %v472
    %v481 = vsub.f32 1.0, %v473
    %v482 = vsub.f32 1.0, %v474
    %vm483 = vcmp.ge.f32.partialorder %v323, 0.0
    %vm484 = vcmp.ge.f32.partialorder %v324, 0.0
    %vm485 = vcmp.ge.f32.partialorder %v325, 0.0
    %vm486 = vcmp.ge.f32.partialorder %v326, 0.0
    %vm487 = vcmp.ge.f32.partialorder %v327, 0.0
    %vm488 = vcmp.ge.f32.partialorder %v328, 0.0
    %vm489 = vcmp.ge.f32.partialorder %v329, 0.0
    %vm490 = vcmp.ge.f32.partialorder %v330, 0.0
    %v491 = vsub.f32 0.0, %v475
    %v492 = vsub.f32 0.0, %v476
    %v493 = vsub.f32 0.0, %v477
    %v494 = vsub.f32 0.0, %v478
    %v495 = vsub.f32 0.0, %v479
    %v496 = vsub.f32 0.0, %v480
    %v497 = vsub.f32 0.0, %v481
    %v498 = vsub.f32 0.0, %v482
    %v499 = vsel %vm483, %v475, %v491
    %v500 = vsel %vm484, %v476, %v492
    %v501 = vsel %vm485, %v477, %v493
    %v502 = vsel %vm486, %v478, %v494
    %v503 = vsel %vm487, %v479, %v495
    %v504 = vsel %vm488, %v480, %v496
    %v505 = vsel %vm489, %v481, %v497
    %v506 = vsel %vm490, %v482, %v498
    %v507 = vadd.f32 %v499, 1.0
    %v508 = vadd.f32 %v500, 1.0
    %v509 = vadd.f32 %v501, 1.0
    %v510 = vadd.f32 %v502, 1.0
    %v511 = vadd.f32 %v503, 1.0
    %v512 = vadd.f32 %v504, 1.0
    %v513 = vadd.f32 %v505, 1.0
    %v514 = vadd.f32 %v506, 1.0
    %v515 = vmul.f32 %v315, %v507
    %v516 = vmul.f32 %v316, %v508
    %v517 = vmul.f32 %v317, %v509
    %v518 = vmul.f32 %v318, %v510
    %v519 = vmul.f32 %v319, %v511
    %v520 = vmul.f32 %v320, %v512
    %v521 = vmul.f32 %v321, %v513
    %v522 = vmul.f32 %v322, %v514
    %s523 = scalar_lea.vmem [#allocation6], 4
    %v524 = vld [vmem:[%s523] sm:$0x7]
    %v525 = vadd.f32 %v515, %v516
    %v526 = vadd.f32 %v525, %v517
    %v527 = vadd.f32 %v526, %v518
    %v528 = vadd.f32 %v527, %v519
    %v529 = vadd.f32 %v528, %v520
    %v530 = vadd.f32 %v529, %v521
    %v531 = vadd.f32 %v530, %v522
    %v532 = vrot.slane %v531, 4
    %v533 = vadd.f32 %v531, %v532
    %v534 = vrot.slane %v533, 2
    %v535 = vadd.f32 %v533, %v534
    %v536 = vrot.slane %v535, 1
    %v537 = vadd.f32 %v535, %v536
    %v538 = vmul.f32 %v515, %v515
    %v539 = vmul.f32 %v516, %v516
    %v540 = vmul.f32 %v517, %v517
    %v541 = vmul.f32 %v518, %v518
    %v542 = vmul.f32 %v519, %v519
    %v543 = vmul.f32 %v520, %v520
    %v544 = vmul.f32 %v521, %v521
    %v545 = vmul.f32 %v522, %v522
    %v546 = vadd.f32 %v538, %v539
    %v547 = vadd.f32 %v546, %v540
    %v548 = vadd.f32 %v547, %v541
    %v549 = vadd.f32 %v548, %v542
    %v550 = vadd.f32 %v549, %v543
    %v551 = vadd.f32 %v550, %v544
    %v552 = vadd.f32 %v551, %v545
    %v553 = vrot.slane %v552, 4
    %v554 = vadd.f32 %v552, %v553
    %v555 = vrot.slane %v554, 2
    %v556 = vadd.f32 %v554, %v555
    %v557 = vrot.slane %v556, 1
    %v558 = vadd.f32 %v556, %v557
    %v559 = vmul.f32 %v537, 0.015625
    %v560 = vmul.f32 %v558, 0.015625
    %v561 = vmul.f32 %v559, %v559
    %v562 = vsub.f32 %v560, %v561
    %v563 = vsub.f32 %v515, %v559
    %v564 = vsub.f32 %v516, %v559
    %v565 = vsub.f32 %v517, %v559
    %v566 = vsub.f32 %v518, %v559
    %v567 = vsub.f32 %v519, %v559
    %v568 = vsub.f32 %v520, %v559
    %v569 = vsub.f32 %v521, %v559
    %v570 = vsub.f32 %v522, %v559
    %v571 = vadd.f32 %v562, 1e-05
    %v572 = vrsqrt.pop %v571
    %v573 = vmul.f32 %v563, %v572
    %v574 = vmul.f32 %v564, %v572
    %v575 = vmul.f32 %v565, %v572
    %v576 = vmul.f32 %v566, %v572
    %v577 = vmul.f32 %v567, %v572
    %v578 = vmul.f32 %v568, %v572
    %v579 = vmul.f32 %v569, %v572
    %v580 = vmul.f32 %v570, %v572
    %v581 = vlaneseq
    %v582 = vshrl.u32 %v581, 7
    %v583 = vsub.s32 0, %v582
    %v584 = vrot.slane %v524, %v583
    %v585 = vmul.f32 %v573, %v584
    %v586 = vmul.f32 %v574, %v584
    %v587 = vmul.f32 %v575, %v584
    %v588 = vmul.f32 %v576, %v584
    %v589 = vmul.f32 %v577, %v584
    %v590 = vmul.f32 %v578, %v584
    %v591 = vmul.f32 %v579, %v584
    %v592 = vmul.f32 %v580, %v584
    %v593 = vlaneseq
    %v594 = vshrl.u32 %v593, 7
    %v595 = vsub.s32 1, %v594
    %v596 = vrot.slane %v524, %v595
    %v597 = vadd.f32 %v585, %v596
    %v598 = vadd.f32 %v586, %v596
    %v599 = vadd.f32 %v587, %v596
    %v600 = vadd.f32 %v588, %v596
    %v601 = vadd.f32 %v589, %v596
    %v602 = vadd.f32 %v590, %v596
    %v603 = vadd.f32 %v591, %v596
    %v604 = vadd.f32 %v592, %v596
    %v605 = vpack.c.bf16 %v598, %v597
    %v606 = vpack.c.bf16 %v600, %v599
    %v607 = vpack.c.bf16 %v602, %v601
    %v608 = vpack.c.bf16 %v604, %v603
    %s609 = scalar_lea.vmem [#allocation7], 64
    %v610 = vld [vmem:[%s609] sm:$0xf]
    %v611 = vld [vmem:[%s609 + $0x4] sm:$0xf]
    %v612 = vld [vmem:[%s609 + $0x8] sm:$0xf]
    %v613 = vld [vmem:[%s609 + $0xc] sm:$0xf]
    %v614 = vld [vmem:[%s609 + $0x10] sm:$0xf]
    %v615 = vld [vmem:[%s609 + $0x14] sm:$0xf]
    %v616 = vld [vmem:[%s609 + $0x18] sm:$0xf]
    %v617 = vld [vmem:[%s609 + $0x1c] sm:$0xf]
    %v618 = vld [vmem:[%s609 + $0x20] sm:$0xf]
    %v619 = vld [vmem:[%s609 + $0x24] sm:$0xf]
    %v620 = vld [vmem:[%s609 + $0x28] sm:$0xf]
    %v621 = vld [vmem:[%s609 + $0x2c] sm:$0xf]
    %v622 = vld [vmem:[%s609 + $0x30] sm:$0xf]
    %v623 = vld [vmem:[%s609 + $0x34] sm:$0xf]
    %v624 = vld [vmem:[%s609 + $0x38] sm:$0xf]
    %v625 = vld [vmem:[%s609 + $0x3c] sm:$0xf]
    %v626 = vlaneseq
    %v627 = vshrl.u32 %v626, 7
    %v628 = vsub.s32 2, %v627
    %v629 = vrot.slane %v524, %v628
    %v646 = vunpack.c.l.b16 %v610
    %v647 = vunpack.c.l.b16 %v611
    %v648 = vunpack.c.l.b16 %v612
    %v649 = vunpack.c.l.b16 %v613
    %v650 = vunpack.c.l.b16 %v614
    %v651 = vunpack.c.l.b16 %v615
    %v652 = vunpack.c.l.b16 %v616
    %v653 = vunpack.c.l.b16 %v617
    %v654 = vunpack.c.l.b16 %v618
    %v655 = vunpack.c.l.b16 %v619
    %v656 = vunpack.c.l.b16 %v620
    %v657 = vunpack.c.l.b16 %v621
    %v658 = vunpack.c.l.b16 %v622
    %v659 = vunpack.c.l.b16 %v623
    %v660 = vunpack.c.l.b16 %v624
    %v661 = vunpack.c.l.b16 %v625
    %v662 = vpack.c.b16 %v647, %v646
    %v663 = vpack.c.b16 %v649, %v648
    %v664 = vpack.c.b16 %v651, %v650
    %v665 = vpack.c.b16 %v653, %v652
    %v666 = vpack.c.b16 %v655, %v654
    %v667 = vpack.c.b16 %v657, %v656
    %v668 = vpack.c.b16 %v659, %v658
    %v669 = vpack.c.b16 %v661, %v660
    %678 = vmatprep.subr.bf16.mxu0 0
    %679 = vmatpush1.bf16.msra.mxu0 %v669
    %680 = vmatprep.subr.bf16.mxu0 0
    %681 = vmatpush1.bf16.msra.mxu0 %v668
    %682 = vmatprep.subr.bf16.mxu0 0
    %683 = vmatpush1.bf16.msra.mxu0 %v667
    %684 = vmatprep.subr.bf16.mxu0 0
    %685 = vmatpush1.bf16.msra.mxu0 %v666
    %686 = vmatprep.subr.bf16.mxu0 0
    %687 = vmatpush1.bf16.msra.mxu0 %v665
    %688 = vmatprep.subr.bf16.mxu0 0
    %689 = vmatpush1.bf16.msra.mxu0 %v664
    %690 = vmatprep.subr.bf16.mxu0 0
    %691 = vmatpush1.bf16.msra.mxu0 %v663
    %692 = vmatprep.subr.bf16.mxu0 0
    %693 = vmatpush1.bf16.msra.mxu0 %v662
    %694 = vmatprep.subr.bf16.mxu0 0
    %695 = vmatpush2.bf16.msra.mxu0 0
    %696 = vmatprep.subr.bf16.mxu0 0
    %697 = vmatpush2.bf16.msra.mxu0 0
    %698 = vmatprep.subr.bf16.mxu0 0
    %699 = vmatpush2.bf16.msra.mxu0 0
    %700 = vmatprep.subr.bf16.mxu0 0
    %701 = vmatpush2.bf16.msra.mxu0 0
    %702 = vmatprep.subr.bf16.mxu0 0
    %703 = vmatpush2.bf16.msra.mxu0 0
    %704 = vmatprep.subr.bf16.mxu0 0
    %705 = vmatpush2.bf16.msra.mxu0 0
    %706 = vmatprep.subr.bf16.mxu0 0
    %707 = vmatpush2.bf16.msra.mxu0 0
    %708 = vmatprep.subr.bf16.mxu0 0
    %709 = vmatpush2.bf16.msra.mxu0 0
    %710 = vmatprep.mubr.bf16.mxu0 0
    %711 = vmatmul.mubr.bf16.gmra.mxu0 %v605
    %v712 = vpop.f32.mrf.mxu0
    %v713 = vadd.f32 %v629, %v712
    %v714 = vpop.f32.mrf.mxu0
    %v715 = vpop.f32.mrf.mxu0
    %v716 = vadd.f32 %v629, %v715
    %v717 = vpop.f32.mrf.mxu0
    %718 = vmatprep.mubr.bf16.mxu0 0
    %719 = vmatmul.mubr.bf16.gmra.mxu0 %v606
    %v720 = vpop.f32.mrf.mxu0
    %v721 = vadd.f32 %v629, %v720
    %v722 = vpop.f32.mrf.mxu0
    %v723 = vpop.f32.mrf.mxu0
    %v724 = vadd.f32 %v629, %v723
    %v725 = vpop.f32.mrf.mxu0
    %726 = vmatprep.mubr.bf16.mxu0 0
    %727 = vmatmul.mubr.bf16.gmra.mxu0 %v607
    %v728 = vpop.f32.mrf.mxu0
    %v729 = vadd.f32 %v629, %v728
    %v730 = vpop.f32.mrf.mxu0
    %v731 = vpop.f32.mrf.mxu0
    %v732 = vadd.f32 %v629, %v731
    %v733 = vpop.f32.mrf.mxu0
    %734 = vmatprep.mubr.bf16.mxu0 0
    %735 = vmatmul.mubr.bf16.gmra.mxu0 %v608
    %v736 = vpop.f32.mrf.mxu0
    %v737 = vadd.f32 %v629, %v736
    %v738 = vpop.f32.mrf.mxu0
    %v739 = vpop.f32.mrf.mxu0
    %v740 = vadd.f32 %v629, %v739
    %v741 = vpop.f32.mrf.mxu0
    %742 = vdwg.mxu0
    %v743 = vmul.f32 %v713, 0.5
    %v744 = vmul.f32 %v716, 0.5
    %v745 = vmul.f32 %v721, 0.5
    %v746 = vmul.f32 %v724, 0.5
    %v747 = vmul.f32 %v729, 0.5
    %v748 = vmul.f32 %v732, 0.5
    %v749 = vmul.f32 %v737, 0.5
    %v750 = vmul.f32 %v740, 0.5
    %v751 = vmul.f32 %v713, 0.70710677
    %v752 = vmul.f32 %v716, 0.70710677
    %v753 = vmul.f32 %v721, 0.70710677
    %v754 = vmul.f32 %v724, 0.70710677
    %v755 = vmul.f32 %v729, 0.70710677
    %v756 = vmul.f32 %v732, 0.70710677
    %v757 = vmul.f32 %v737, 0.70710677
    %v758 = vmul.f32 %v740, 0.70710677
    %v759 = vand.u32 2147483647, %v751
    %v760 = vand.u32 2147483647, %v752
    %v761 = vand.u32 2147483647, %v753
    %v762 = vand.u32 2147483647, %v754
    %v763 = vand.u32 2147483647, %v755
    %v764 = vand.u32 2147483647, %v756
    %v765 = vand.u32 2147483647, %v757
    %v766 = vand.u32 2147483647, %v758
    %v767 = vmul.f32 %v759, 0.3275911
    %v768 = vmul.f32 %v760, 0.3275911
    %v769 = vmul.f32 %v761, 0.3275911
    %v770 = vmul.f32 %v762, 0.3275911
    %v771 = vmul.f32 %v763, 0.3275911
    %v772 = vmul.f32 %v764, 0.3275911
    %v773 = vmul.f32 %v765, 0.3275911
    %v774 = vmul.f32 %v766, 0.3275911
    %v775 = vadd.f32 %v767, 1.0
    %v776 = vadd.f32 %v768, 1.0
    %v777 = vadd.f32 %v769, 1.0
    %v778 = vadd.f32 %v770, 1.0
    %v779 = vadd.f32 %v771, 1.0
    %v780 = vadd.f32 %v772, 1.0
    %v781 = vadd.f32 %v773, 1.0
    %v782 = vadd.f32 %v774, 1.0
    %v783 = vrcp.pop %v775
    %v784 = vrcp.pop %v776
    %v785 = vrcp.pop %v777
    %v786 = vrcp.pop %v778
    %v787 = vrcp.pop %v779
    %v788 = vrcp.pop %v780
    %v789 = vrcp.pop %v781
    %v790 = vrcp.pop %v782
    %v791 = vmul.f32 %v783, 1.0614054
    %v792 = vmul.f32 %v784, 1.0614054
    %v793 = vmul.f32 %v785, 1.0614054
    %v794 = vmul.f32 %v786, 1.0614054
    %v795 = vmul.f32 %v787, 1.0614054
    %v796 = vmul.f32 %v788, 1.0614054
    %v797 = vmul.f32 %v789, 1.0614054
    %v798 = vmul.f32 %v790, 1.0614054
    %v799 = vadd.f32 %v791, -1.4531521
    %v800 = vadd.f32 %v792, -1.4531521
    %v801 = vadd.f32 %v793, -1.4531521
    %v802 = vadd.f32 %v794, -1.4531521
    %v803 = vadd.f32 %v795, -1.4531521
    %v804 = vadd.f32 %v796, -1.4531521
    %v805 = vadd.f32 %v797, -1.4531521
    %v806 = vadd.f32 %v798, -1.4531521
    %v807 = vmul.f32 %v799, %v783
    %v808 = vmul.f32 %v800, %v784
    %v809 = vmul.f32 %v801, %v785
    %v810 = vmul.f32 %v802, %v786
    %v811 = vmul.f32 %v803, %v787
    %v812 = vmul.f32 %v804, %v788
    %v813 = vmul.f32 %v805, %v789
    %v814 = vmul.f32 %v806, %v790
    %v815 = vadd.f32 %v807, 1.4214138
    %v816 = vadd.f32 %v808, 1.4214138
    %v817 = vadd.f32 %v809, 1.4214138
    %v818 = vadd.f32 %v810, 1.4214138
    %v819 = vadd.f32 %v811, 1.4214138
    %v820 = vadd.f32 %v812, 1.4214138
    %v821 = vadd.f32 %v813, 1.4214138
    %v822 = vadd.f32 %v814, 1.4214138
    %v823 = vmul.f32 %v815, %v783
    %v824 = vmul.f32 %v816, %v784
    %v825 = vmul.f32 %v817, %v785
    %v826 = vmul.f32 %v818, %v786
    %v827 = vmul.f32 %v819, %v787
    %v828 = vmul.f32 %v820, %v788
    %v829 = vmul.f32 %v821, %v789
    %v830 = vmul.f32 %v822, %v790
    %v831 = vadd.f32 %v823, -0.28449672
    %v832 = vadd.f32 %v824, -0.28449672
    %v833 = vadd.f32 %v825, -0.28449672
    %v834 = vadd.f32 %v826, -0.28449672
    %v835 = vadd.f32 %v827, -0.28449672
    %v836 = vadd.f32 %v828, -0.28449672
    %v837 = vadd.f32 %v829, -0.28449672
    %v838 = vadd.f32 %v830, -0.28449672
    %v839 = vmul.f32 %v831, %v783
    %v840 = vmul.f32 %v832, %v784
    %v841 = vmul.f32 %v833, %v785
    %v842 = vmul.f32 %v834, %v786
    %v843 = vmul.f32 %v835, %v787
    %v844 = vmul.f32 %v836, %v788
    %v845 = vmul.f32 %v837, %v789
    %v846 = vmul.f32 %v838, %v790
    %v847 = vadd.f32 %v839, 0.2548296
    %v848 = vadd.f32 %v840, 0.2548296
    %v849 = vadd.f32 %v841, 0.2548296
    %v850 = vadd.f32 %v842, 0.2548296
    %v851 = vadd.f32 %v843, 0.2548296
    %v852 = vadd.f32 %v844, 0.2548296
    %v853 = vadd.f32 %v845, 0.2548296
    %v854 = vadd.f32 %v846, 0.2548296
    %v855 = vmul.f32 %v847, %v783
    %v856 = vmul.f32 %v848, %v784
    %v857 = vmul.f32 %v849, %v785
    %v858 = vmul.f32 %v850, %v786
    %v859 = vmul.f32 %v851, %v787
    %v860 = vmul.f32 %v852, %v788
    %v861 = vmul.f32 %v853, %v789
    %v862 = vmul.f32 %v854, %v790
    %v863 = vmul.f32 %v759, %v759
    %v864 = vmul.f32 %v760, %v760
    %v865 = vmul.f32 %v761, %v761
    %v866 = vmul.f32 %v762, %v762
    %v867 = vmul.f32 %v763, %v763
    %v868 = vmul.f32 %v764, %v764
    %v869 = vmul.f32 %v765, %v765
    %v870 = vmul.f32 %v766, %v766
    %v871 = vsub.f32 0.0, %v863
    %v872 = vsub.f32 0.0, %v864
    %v873 = vsub.f32 0.0, %v865
    %v874 = vsub.f32 0.0, %v866
    %v875 = vsub.f32 0.0, %v867
    %v876 = vsub.f32 0.0, %v868
    %v877 = vsub.f32 0.0, %v869
    %v878 = vsub.f32 0.0, %v870
    %v879 = vmul.f32 %v871, 1.442695
    %v880 = vpow.pop %v879
    %v881 = vmul.f32 %v872, 1.442695
    %v882 = vpow.pop %v881
    %v883 = vmul.f32 %v873, 1.442695
    %v884 = vpow.pop %v883
    %v885 = vmul.f32 %v874, 1.442695
    %v886 = vpow.pop %v885
    %v887 = vmul.f32 %v875, 1.442695
    %v888 = vpow.pop %v887
    %v889 = vmul.f32 %v876, 1.442695
    %v890 = vpow.pop %v889
    %v891 = vmul.f32 %v877, 1.442695
    %v892 = vpow.pop %v891
    %v893 = vmul.f32 %v878, 1.442695
    %v894 = vpow.pop %v893
    %v895 = vmul.f32 %v855, %v880
    %v896 = vmul.f32 %v856, %v882
    %v897 = vmul.f32 %v857, %v884
    %v898 = vmul.f32 %v858, %v886
    %v899 = vmul.f32 %v859, %v888
    %v900 = vmul.f32 %v860, %v890
    %v901 = vmul.f32 %v861, %v892
    %v902 = vmul.f32 %v862, %v894
    %v903 = vsub.f32 1.0, %v895
    %v904 = vsub.f32 1.0, %v896
    %v905 = vsub.f32 1.0, %v897
    %v906 = vsub.f32 1.0, %v898
    %v907 = vsub.f32 1.0, %v899
    %v908 = vsub.f32 1.0, %v900
    %v909 = vsub.f32 1.0, %v901
    %v910 = vsub.f32 1.0, %v902
    %vm911 = vcmp.ge.f32.partialorder %v751, 0.0
    %vm912 = vcmp.ge.f32.partialorder %v752, 0.0
    %vm913 = vcmp.ge.f32.partialorder %v753, 0.0
    %vm914 = vcmp.ge.f32.partialorder %v754, 0.0
    %vm915 = vcmp.ge.f32.partialorder %v755, 0.0
    %vm916 = vcmp.ge.f32.partialorder %v756, 0.0
    %vm917 = vcmp.ge.f32.partialorder %v757, 0.0
    %vm918 = vcmp.ge.f32.partialorder %v758, 0.0
    %v919 = vsub.f32 0.0, %v903
    %v920 = vsub.f32 0.0, %v904
    %v921 = vsub.f32 0.0, %v905
    %v922 = vsub.f32 0.0, %v906
    %v923 = vsub.f32 0.0, %v907
    %v924 = vsub.f32 0.0, %v908
    %v925 = vsub.f32 0.0, %v909
    %v926 = vsub.f32 0.0, %v910
    %v927 = vsel %vm911, %v903, %v919
    %v928 = vsel %vm912, %v904, %v920
    %v929 = vsel %vm913, %v905, %v921
    %v930 = vsel %vm914, %v906, %v922
    %v931 = vsel %vm915, %v907, %v923
    %v932 = vsel %vm916, %v908, %v924
    %v933 = vsel %vm917, %v909, %v925
    %v934 = vsel %vm918, %v910, %v926
    %v935 = vadd.f32 %v927, 1.0
    %v936 = vadd.f32 %v928, 1.0
    %v937 = vadd.f32 %v929, 1.0
    %v938 = vadd.f32 %v930, 1.0
    %v939 = vadd.f32 %v931, 1.0
    %v940 = vadd.f32 %v932, 1.0
    %v941 = vadd.f32 %v933, 1.0
    %v942 = vadd.f32 %v934, 1.0
    %v943 = vmul.f32 %v743, %v935
    %v944 = vmul.f32 %v744, %v936
    %v945 = vmul.f32 %v745, %v937
    %v946 = vmul.f32 %v746, %v938
    %v947 = vmul.f32 %v747, %v939
    %v948 = vmul.f32 %v748, %v940
    %v949 = vmul.f32 %v749, %v941
    %v950 = vmul.f32 %v750, %v942
    %v951 = vadd.f32 %v597, %v943
    %v952 = vadd.f32 %v598, %v944
    %v953 = vadd.f32 %v599, %v945
    %v954 = vadd.f32 %v600, %v946
    %v955 = vadd.f32 %v601, %v947
    %v956 = vadd.f32 %v602, %v948
    %v957 = vadd.f32 %v603, %v949
    %v958 = vadd.f32 %v604, %v950
    %s959 = scalar_lea.vmem [#allocation6], 8
    %v960 = vld [vmem:[%s959] sm:$0x7]
    %v961 = vadd.f32 %v951, %v952
    %v962 = vadd.f32 %v961, %v953
    %v963 = vadd.f32 %v962, %v954
    %v964 = vadd.f32 %v963, %v955
    %v965 = vadd.f32 %v964, %v956
    %v966 = vadd.f32 %v965, %v957
    %v967 = vadd.f32 %v966, %v958
    %v968 = vrot.slane %v967, 4
    %v969 = vadd.f32 %v967, %v968
    %v970 = vrot.slane %v969, 2
    %v971 = vadd.f32 %v969, %v970
    %v972 = vrot.slane %v971, 1
    %v973 = vadd.f32 %v971, %v972
    %v974 = vmul.f32 %v951, %v951
    %v975 = vmul.f32 %v952, %v952
    %v976 = vmul.f32 %v953, %v953
    %v977 = vmul.f32 %v954, %v954
    %v978 = vmul.f32 %v955, %v955
    %v979 = vmul.f32 %v956, %v956
    %v980 = vmul.f32 %v957, %v957
    %v981 = vmul.f32 %v958, %v958
    %v982 = vadd.f32 %v974, %v975
    %v983 = vadd.f32 %v982, %v976
    %v984 = vadd.f32 %v983, %v977
    %v985 = vadd.f32 %v984, %v978
    %v986 = vadd.f32 %v985, %v979
    %v987 = vadd.f32 %v986, %v980
    %v988 = vadd.f32 %v987, %v981
    %v989 = vrot.slane %v988, 4
    %v990 = vadd.f32 %v988, %v989
    %v991 = vrot.slane %v990, 2
    %v992 = vadd.f32 %v990, %v991
    %v993 = vrot.slane %v992, 1
    %v994 = vadd.f32 %v992, %v993
    %v995 = vmul.f32 %v973, 0.015625
    %v996 = vmul.f32 %v994, 0.015625
    %v997 = vmul.f32 %v995, %v995
    %v998 = vsub.f32 %v996, %v997
    %v999 = vsub.f32 %v951, %v995
    %v1000 = vsub.f32 %v952, %v995
    %v1001 = vsub.f32 %v953, %v995
    %v1002 = vsub.f32 %v954, %v995
    %v1003 = vsub.f32 %v955, %v995
    %v1004 = vsub.f32 %v956, %v995
    %v1005 = vsub.f32 %v957, %v995
    %v1006 = vsub.f32 %v958, %v995
    %v1007 = vadd.f32 %v998, 1e-05
    %v1008 = vrsqrt.pop %v1007
    %v1009 = vmul.f32 %v999, %v1008
    %v1010 = vmul.f32 %v1000, %v1008
    %v1011 = vmul.f32 %v1001, %v1008
    %v1012 = vmul.f32 %v1002, %v1008
    %v1013 = vmul.f32 %v1003, %v1008
    %v1014 = vmul.f32 %v1004, %v1008
    %v1015 = vmul.f32 %v1005, %v1008
    %v1016 = vmul.f32 %v1006, %v1008
    %v1017 = vlaneseq
    %v1018 = vshrl.u32 %v1017, 7
    %v1019 = vsub.s32 0, %v1018
    %v1020 = vrot.slane %v960, %v1019
    %v1021 = vmul.f32 %v1009, %v1020
    %v1022 = vmul.f32 %v1010, %v1020
    %v1023 = vmul.f32 %v1011, %v1020
    %v1024 = vmul.f32 %v1012, %v1020
    %v1025 = vmul.f32 %v1013, %v1020
    %v1026 = vmul.f32 %v1014, %v1020
    %v1027 = vmul.f32 %v1015, %v1020
    %v1028 = vmul.f32 %v1016, %v1020
    %v1029 = vlaneseq
    %v1030 = vshrl.u32 %v1029, 7
    %v1031 = vsub.s32 1, %v1030
    %v1032 = vrot.slane %v960, %v1031
    %v1033 = vadd.f32 %v1021, %v1032
    %v1034 = vadd.f32 %v1022, %v1032
    %v1035 = vadd.f32 %v1023, %v1032
    %v1036 = vadd.f32 %v1024, %v1032
    %v1037 = vadd.f32 %v1025, %v1032
    %v1038 = vadd.f32 %v1026, %v1032
    %v1039 = vadd.f32 %v1027, %v1032
    %v1040 = vadd.f32 %v1028, %v1032
    %v1041 = vpack.c.bf16 %v1034, %v1033
    %v1042 = vpack.c.bf16 %v1036, %v1035
    %v1043 = vpack.c.bf16 %v1038, %v1037
    %v1044 = vpack.c.bf16 %v1040, %v1039
    %v1045 = vld [vmem:[#allocation9] sm:$0xff]
    %v1046 = vld [vmem:[#allocation9 + $0x8] sm:$0xff]
    %v1047 = vld [vmem:[#allocation9 + $0x10] sm:$0xff]
    %v1048 = vld [vmem:[#allocation9 + $0x18] sm:$0xff]
    %v1049 = vld [vmem:[#allocation9 + $0x20] sm:$0xff]
    %v1050 = vld [vmem:[#allocation9 + $0x28] sm:$0xff]
    %v1051 = vld [vmem:[#allocation9 + $0x30] sm:$0xff]
    %v1052 = vld [vmem:[#allocation9 + $0x38] sm:$0xff]
    %v1053 = vld [vmem:[#allocation9 + $0x40] sm:$0xff]
    %v1054 = vld [vmem:[#allocation9 + $0x48] sm:$0xff]
    %v1055 = vld [vmem:[#allocation9 + $0x50] sm:$0xff]
    %v1056 = vld [vmem:[#allocation9 + $0x58] sm:$0xff]
    %v1057 = vld [vmem:[#allocation9 + $0x60] sm:$0xff]
    %v1058 = vld [vmem:[#allocation9 + $0x68] sm:$0xff]
    %v1059 = vld [vmem:[#allocation9 + $0x70] sm:$0xff]
    %v1060 = vld [vmem:[#allocation9 + $0x78] sm:$0xff]
    %v1077 = vunpack.c.l.b16 %v1045
    %v1078 = vunpack.c.h.b16 %v1045
    %v1079 = vunpack.c.l.b16 %v1046
    %v1080 = vunpack.c.h.b16 %v1046
    %v1081 = vunpack.c.l.b16 %v1047
    %v1082 = vunpack.c.h.b16 %v1047
    %v1083 = vunpack.c.l.b16 %v1048
    %v1084 = vunpack.c.h.b16 %v1048
    %v1085 = vunpack.c.l.b16 %v1049
    %v1086 = vunpack.c.h.b16 %v1049
    %v1087 = vunpack.c.l.b16 %v1050
    %v1088 = vunpack.c.h.b16 %v1050
    %v1089 = vunpack.c.l.b16 %v1051
    %v1090 = vunpack.c.h.b16 %v1051
    %v1091 = vunpack.c.l.b16 %v1052
    %v1092 = vunpack.c.h.b16 %v1052
    %v1093 = vunpack.c.l.b16 %v1053
    %v1094 = vunpack.c.h.b16 %v1053
    %v1095 = vunpack.c.l.b16 %v1054
    %v1096 = vunpack.c.h.b16 %v1054
    %v1097 = vunpack.c.l.b16 %v1055
    %v1098 = vunpack.c.h.b16 %v1055
    %v1099 = vunpack.c.l.b16 %v1056
    %v1100 = vunpack.c.h.b16 %v1056
    %v1101 = vunpack.c.l.b16 %v1057
    %v1102 = vunpack.c.h.b16 %v1057
    %v1103 = vunpack.c.l.b16 %v1058
    %v1104 = vunpack.c.h.b16 %v1058
    %v1105 = vunpack.c.l.b16 %v1059
    %v1106 = vunpack.c.h.b16 %v1059
    %v1107 = vunpack.c.l.b16 %v1060
    %v1108 = vunpack.c.h.b16 %v1060
    %v1109 = vpack.c.b16 %v1079, %v1077
    %v1110 = vpack.c.b16 %v1080, %v1078
    %v1111 = vpack.c.b16 %v1083, %v1081
    %v1112 = vpack.c.b16 %v1084, %v1082
    %v1113 = vpack.c.b16 %v1087, %v1085
    %v1114 = vpack.c.b16 %v1088, %v1086
    %v1115 = vpack.c.b16 %v1091, %v1089
    %v1116 = vpack.c.b16 %v1092, %v1090
    %v1117 = vpack.c.b16 %v1095, %v1093
    %v1118 = vpack.c.b16 %v1096, %v1094
    %v1119 = vpack.c.b16 %v1099, %v1097
    %v1120 = vpack.c.b16 %v1100, %v1098
    %v1121 = vpack.c.b16 %v1103, %v1101
    %v1122 = vpack.c.b16 %v1104, %v1102
    %v1123 = vpack.c.b16 %v1107, %v1105
    %v1124 = vpack.c.b16 %v1108, %v1106
    %1141 = vmatprep.subr.bf16.mxu0 %v1124
    %1142 = vmatpush1.bf16.msra.mxu0 %v1123
    %1143 = vmatprep.subr.bf16.mxu0 %v1122
    %1144 = vmatpush1.bf16.msra.mxu0 %v1121
    %1145 = vmatprep.subr.bf16.mxu0 %v1120
    %1146 = vmatpush1.bf16.msra.mxu0 %v1119
    %1147 = vmatprep.subr.bf16.mxu0 %v1118
    %1148 = vmatpush1.bf16.msra.mxu0 %v1117
    %1149 = vmatprep.subr.bf16.mxu0 %v1116
    %1150 = vmatpush1.bf16.msra.mxu0 %v1115
    %1151 = vmatprep.subr.bf16.mxu0 %v1114
    %1152 = vmatpush1.bf16.msra.mxu0 %v1113
    %1153 = vmatprep.subr.bf16.mxu0 %v1112
    %1154 = vmatpush1.bf16.msra.mxu0 %v1111
    %1155 = vmatprep.subr.bf16.mxu0 %v1110
    %1156 = vmatpush1.bf16.msra.mxu0 %v1109
    %1157 = vmatprep.subr.bf16.mxu0 0
    %1158 = vmatpush2.bf16.msra.mxu0 0
    %1159 = vmatprep.subr.bf16.mxu0 0
    %1160 = vmatpush2.bf16.msra.mxu0 0
    %1161 = vmatprep.subr.bf16.mxu0 0
    %1162 = vmatpush2.bf16.msra.mxu0 0
    %1163 = vmatprep.subr.bf16.mxu0 0
    %1164 = vmatpush2.bf16.msra.mxu0 0
    %1165 = vmatprep.subr.bf16.mxu0 0
    %1166 = vmatpush2.bf16.msra.mxu0 0
    %1167 = vmatprep.subr.bf16.mxu0 0
    %1168 = vmatpush2.bf16.msra.mxu0 0
    %1169 = vmatprep.subr.bf16.mxu0 0
    %1170 = vmatpush2.bf16.msra.mxu0 0
    %1171 = vmatprep.subr.bf16.mxu0 0
    %1172 = vmatpush2.bf16.msra.mxu0 0
    %1173 = vmatprep.mubr.bf16.mxu0 0
    %1174 = vmatmul.mubr.bf16.gmra.mxu0 %v1041
    %v1175 = vpop.f32.mrf.mxu0
    %v1176 = vadd.f32 0.0, %v1175
    %v1177 = vpop.f32.mrf.mxu0
    %v1178 = vadd.f32 0.0, %v1177
    %v1179 = vpop.f32.mrf.mxu0
    %v1180 = vadd.f32 0.0, %v1179
    %v1181 = vpop.f32.mrf.mxu0
    %v1182 = vadd.f32 0.0, %v1181
    %1183 = vmatprep.mubr.bf16.mxu0 0
    %1184 = vmatmul.mubr.bf16.gmra.mxu0 %v1042
    %v1185 = vpop.f32.mrf.mxu0
    %v1186 = vadd.f32 0.0, %v1185
    %v1187 = vpop.f32.mrf.mxu0
    %v1188 = vadd.f32 0.0, %v1187
    %v1189 = vpop.f32.mrf.mxu0
    %v1190 = vadd.f32 0.0, %v1189
    %v1191 = vpop.f32.mrf.mxu0
    %v1192 = vadd.f32 0.0, %v1191
    %1193 = vmatprep.mubr.bf16.mxu0 0
    %1194 = vmatmul.mubr.bf16.gmra.mxu0 %v1043
    %v1195 = vpop.f32.mrf.mxu0
    %v1196 = vadd.f32 0.0, %v1195
    %v1197 = vpop.f32.mrf.mxu0
    %v1198 = vadd.f32 0.0, %v1197
    %v1199 = vpop.f32.mrf.mxu0
    %v1200 = vadd.f32 0.0, %v1199
    %v1201 = vpop.f32.mrf.mxu0
    %v1202 = vadd.f32 0.0, %v1201
    %1203 = vmatprep.mubr.bf16.mxu0 0
    %1204 = vmatmul.mubr.bf16.gmra.mxu0 %v1044
    %v1205 = vpop.f32.mrf.mxu0
    %v1206 = vadd.f32 0.0, %v1205
    %v1207 = vpop.f32.mrf.mxu0
    %v1208 = vadd.f32 0.0, %v1207
    %v1209 = vpop.f32.mrf.mxu0
    %v1210 = vadd.f32 0.0, %v1209
    %v1211 = vpop.f32.mrf.mxu0
    %v1212 = vadd.f32 0.0, %v1211
    %1213 = vdwg.mxu0
    %v1214 = vpack.c.bf16 %v1182, %v1178
    %v1215 = vpack.c.bf16 %v1192, %v1188
    %v1216 = vpack.c.bf16 %v1202, %v1198
    %v1217 = vpack.c.bf16 %v1212, %v1208
    %v1218 = vld [vmem:[#allocation4] sm:$0xf]
    %v1219 = vld [vmem:[#allocation4 + $0x4] sm:$0xf]
    %v1220 = vld [vmem:[#allocation4 + $0x8] sm:$0xf]
    %v1221 = vld [vmem:[#allocation4 + $0xc] sm:$0xf]
    %v1222 = vld [vmem:[#allocation4 + $0x10] sm:$0xf]
    %v1223 = vld [vmem:[#allocation4 + $0x14] sm:$0xf]
    %v1224 = vld [vmem:[#allocation4 + $0x18] sm:$0xf]
    %v1225 = vld [vmem:[#allocation4 + $0x1c] sm:$0xf]
    %v1234 = vunpack.c.l.b16 %v1218
    %v1235 = vunpack.c.l.b16 %v1219
    %v1236 = vunpack.c.l.b16 %v1220
    %v1237 = vunpack.c.l.b16 %v1221
    %v1238 = vunpack.c.l.b16 %v1222
    %v1239 = vunpack.c.l.b16 %v1223
    %v1240 = vunpack.c.l.b16 %v1224
    %v1241 = vunpack.c.l.b16 %v1225
    %v1242 = vpack.c.b16 %v1235, %v1234
    %v1243 = vpack.c.b16 %v1237, %v1236
    %v1244 = vpack.c.b16 %v1239, %v1238
    %v1245 = vpack.c.b16 %v1241, %v1240
    %vm1246 = vcmask 523264
    %v1248 = vsel %vm1246, %v1242, 0
    %v1251 = vsel %vm1246, %v1243, 0
    %v1254 = vsel %vm1246, %v1244, 0
    %v1257 = vsel %vm1246, %v1245, 0
    %1259 = vmatprep.subr.bf16.mxu0 0
    %1260 = vmatpush1.bf16.msra.mxu0 0
    %1261 = vmatprep.subr.bf16.mxu0 0
    %1262 = vmatpush1.bf16.msra.mxu0 0
    %1263 = vmatprep.subr.bf16.mxu0 0
    %1264 = vmatpush1.bf16.msra.mxu0 0
    %1265 = vmatprep.subr.bf16.mxu0 0
    %1266 = vmatpush1.bf16.msra.mxu0 0
    %1267 = vmatprep.subr.bf16.mxu0 0
    %1268 = vmatpush1.bf16.msra.mxu0 %v1217
    %1269 = vmatprep.subr.bf16.mxu0 0
    %1270 = vmatpush1.bf16.msra.mxu0 %v1216
    %1271 = vmatprep.subr.bf16.mxu0 0
    %1272 = vmatpush1.bf16.msra.mxu0 %v1215
    %1273 = vmatprep.subr.bf16.mxu0 0
    %1274 = vmatpush1.bf16.msra.mxu0 %v1214
    %1275 = vmatprep.subr.bf16.mxu0 0
    %1276 = vmatpush2.bf16.msra.mxu0 0
    %1277 = vmatprep.subr.bf16.mxu0 0
    %1278 = vmatpush2.bf16.msra.mxu0 0
    %1279 = vmatprep.subr.bf16.mxu0 0
    %1280 = vmatpush2.bf16.msra.mxu0 0
    %1281 = vmatprep.subr.bf16.mxu0 0
    %1282 = vmatpush2.bf16.msra.mxu0 0
    %1283 = vmatprep.subr.bf16.mxu0 0
    %1284 = vmatpush2.bf16.msra.mxu0 0
    %1285 = vmatprep.subr.bf16.mxu0 0
    %1286 = vmatpush2.bf16.msra.mxu0 0
    %1287 = vmatprep.subr.bf16.mxu0 0
    %1288 = vmatpush2.bf16.msra.mxu0 0
    %1289 = vmatprep.subr.bf16.mxu0 0
    %1290 = vmatpush2.bf16.msra.mxu0 0
    %1291 = vmatprep.mubr.bf16.mxu0 0
    %1292 = vmatmul.mubr.bf16.gmra.mxu0 %v1248
    %v1293 = vpop.f32.mrf.mxu0
    %v1294 = vadd.f32 0.0, %v1293
    %v1295 = vpop.f32.mrf.mxu0
    %v1296 = vpop.f32.mrf.mxu0
    %v1297 = vadd.f32 0.0, %v1296
    %v1298 = vpop.f32.mrf.mxu0
    %1299 = vmatprep.mubr.bf16.mxu0 0
    %1300 = vmatmul.mubr.bf16.gmra.mxu0 %v1251
    %v1301 = vpop.f32.mrf.mxu0
    %v1302 = vadd.f32 0.0, %v1301
    %v1303 = vpop.f32.mrf.mxu0
    %v1304 = vpop.f32.mrf.mxu0
    %v1305 = vadd.f32 0.0, %v1304
    %v1306 = vpop.f32.mrf.mxu0
    %1307 = vmatprep.mubr.bf16.mxu0 0
    %1308 = vmatmul.mubr.bf16.gmra.mxu0 %v1254
    %v1309 = vpop.f32.mrf.mxu0
    %v1310 = vadd.f32 0.0, %v1309
    %v1311 = vpop.f32.mrf.mxu0
    %v1312 = vpop.f32.mrf.mxu0
    %v1313 = vadd.f32 0.0, %v1312
    %v1314 = vpop.f32.mrf.mxu0
    %1315 = vmatprep.mubr.bf16.mxu0 0
    %1316 = vmatmul.mubr.bf16.gmra.mxu0 %v1257
    %v1317 = vpop.f32.mrf.mxu0
    %v1318 = vadd.f32 0.0, %v1317
    %v1319 = vpop.f32.mrf.mxu0
    %v1320 = vpop.f32.mrf.mxu0
    %v1321 = vadd.f32 0.0, %v1320
    %v1322 = vpop.f32.mrf.mxu0
    %1323 = vdwg.mxu0
    %v1324 = vadd.f32 %v1176, %v1294
    %v1325 = vadd.f32 %v1180, %v1297
    %v1326 = vadd.f32 %v1186, %v1302
    %v1327 = vadd.f32 %v1190, %v1305
    %v1328 = vadd.f32 %v1196, %v1310
    %v1329 = vadd.f32 %v1200, %v1313
    %v1330 = vadd.f32 %v1206, %v1318
    %v1331 = vadd.f32 %v1210, %v1321
    %v1332 = vlaneseq
    %v1333 = vshrl.u32 %v1332, 7
    %v1334 = vsub.s32 2, %v1333
    %v1335 = vrot.slane %v960, %v1334
    %v1336 = vadd.f32 %v1324, %v1335
    %v1337 = vadd.f32 %v1325, %v1335
    %v1338 = vadd.f32 %v1326, %v1335
    %v1339 = vadd.f32 %v1327, %v1335
    %v1340 = vadd.f32 %v1328, %v1335
    %v1341 = vadd.f32 %v1329, %v1335
    %v1342 = vadd.f32 %v1330, %v1335
    %v1343 = vadd.f32 %v1331, %v1335
    %v1344 = vadd.f32 %v1336, %v1033
    %v1345 = vadd.f32 %v1337, %v1034
    %v1346 = vadd.f32 %v1338, %v1035
    %v1347 = vadd.f32 %v1339, %v1036
    %v1348 = vadd.f32 %v1340, %v1037
    %v1349 = vadd.f32 %v1341, %v1038
    %v1350 = vadd.f32 %v1342, %v1039
    %v1351 = vadd.f32 %v1343, %v1040
    %v1352 = vmul.f32 %v1344, 0.5
    %v1353 = vmul.f32 %v1345, 0.5
    %v1354 = vmul.f32 %v1346, 0.5
    %v1355 = vmul.f32 %v1347, 0.5
    %v1356 = vmul.f32 %v1348, 0.5
    %v1357 = vmul.f32 %v1349, 0.5
    %v1358 = vmul.f32 %v1350, 0.5
    %v1359 = vmul.f32 %v1351, 0.5
    %v1360 = vmul.f32 %v1344, 0.70710677
    %v1361 = vmul.f32 %v1345, 0.70710677
    %v1362 = vmul.f32 %v1346, 0.70710677
    %v1363 = vmul.f32 %v1347, 0.70710677
    %v1364 = vmul.f32 %v1348, 0.70710677
    %v1365 = vmul.f32 %v1349, 0.70710677
    %v1366 = vmul.f32 %v1350, 0.70710677
    %v1367 = vmul.f32 %v1351, 0.70710677
    %v1368 = vand.u32 2147483647, %v1360
    %v1369 = vand.u32 2147483647, %v1361
    %v1370 = vand.u32 2147483647, %v1362
    %v1371 = vand.u32 2147483647, %v1363
    %v1372 = vand.u32 2147483647, %v1364
    %v1373 = vand.u32 2147483647, %v1365
    %v1374 = vand.u32 2147483647, %v1366
    %v1375 = vand.u32 2147483647, %v1367
    %v1376 = vmul.f32 %v1368, 0.3275911
    %v1377 = vmul.f32 %v1369, 0.3275911
    %v1378 = vmul.f32 %v1370, 0.3275911
    %v1379 = vmul.f32 %v1371, 0.3275911
    %v1380 = vmul.f32 %v1372, 0.3275911
    %v1381 = vmul.f32 %v1373, 0.3275911
    %v1382 = vmul.f32 %v1374, 0.3275911
    %v1383 = vmul.f32 %v1375, 0.3275911
    %v1384 = vadd.f32 %v1376, 1.0
    %v1385 = vadd.f32 %v1377, 1.0
    %v1386 = vadd.f32 %v1378, 1.0
    %v1387 = vadd.f32 %v1379, 1.0
    %v1388 = vadd.f32 %v1380, 1.0
    %v1389 = vadd.f32 %v1381, 1.0
    %v1390 = vadd.f32 %v1382, 1.0
    %v1391 = vadd.f32 %v1383, 1.0
    %v1392 = vrcp.pop %v1384
    %v1393 = vrcp.pop %v1385
    %v1394 = vrcp.pop %v1386
    %v1395 = vrcp.pop %v1387
    %v1396 = vrcp.pop %v1388
    %v1397 = vrcp.pop %v1389
    %v1398 = vrcp.pop %v1390
    %v1399 = vrcp.pop %v1391
    %v1400 = vmul.f32 %v1392, 1.0614054
    %v1401 = vmul.f32 %v1393, 1.0614054
    %v1402 = vmul.f32 %v1394, 1.0614054
    %v1403 = vmul.f32 %v1395, 1.0614054
    %v1404 = vmul.f32 %v1396, 1.0614054
    %v1405 = vmul.f32 %v1397, 1.0614054
    %v1406 = vmul.f32 %v1398, 1.0614054
    %v1407 = vmul.f32 %v1399, 1.0614054
    %v1408 = vadd.f32 %v1400, -1.4531521
    %v1409 = vadd.f32 %v1401, -1.4531521
    %v1410 = vadd.f32 %v1402, -1.4531521
    %v1411 = vadd.f32 %v1403, -1.4531521
    %v1412 = vadd.f32 %v1404, -1.4531521
    %v1413 = vadd.f32 %v1405, -1.4531521
    %v1414 = vadd.f32 %v1406, -1.4531521
    %v1415 = vadd.f32 %v1407, -1.4531521
    %v1416 = vmul.f32 %v1408, %v1392
    %v1417 = vmul.f32 %v1409, %v1393
    %v1418 = vmul.f32 %v1410, %v1394
    %v1419 = vmul.f32 %v1411, %v1395
    %v1420 = vmul.f32 %v1412, %v1396
    %v1421 = vmul.f32 %v1413, %v1397
    %v1422 = vmul.f32 %v1414, %v1398
    %v1423 = vmul.f32 %v1415, %v1399
    %v1424 = vadd.f32 %v1416, 1.4214138
    %v1425 = vadd.f32 %v1417, 1.4214138
    %v1426 = vadd.f32 %v1418, 1.4214138
    %v1427 = vadd.f32 %v1419, 1.4214138
    %v1428 = vadd.f32 %v1420, 1.4214138
    %v1429 = vadd.f32 %v1421, 1.4214138
    %v1430 = vadd.f32 %v1422, 1.4214138
    %v1431 = vadd.f32 %v1423, 1.4214138
    %v1432 = vmul.f32 %v1424, %v1392
    %v1433 = vmul.f32 %v1425, %v1393
    %v1434 = vmul.f32 %v1426, %v1394
    %v1435 = vmul.f32 %v1427, %v1395
    %v1436 = vmul.f32 %v1428, %v1396
    %v1437 = vmul.f32 %v1429, %v1397
    %v1438 = vmul.f32 %v1430, %v1398
    %v1439 = vmul.f32 %v1431, %v1399
    %v1440 = vadd.f32 %v1432, -0.28449672
    %v1441 = vadd.f32 %v1433, -0.28449672
    %v1442 = vadd.f32 %v1434, -0.28449672
    %v1443 = vadd.f32 %v1435, -0.28449672
    %v1444 = vadd.f32 %v1436, -0.28449672
    %v1445 = vadd.f32 %v1437, -0.28449672
    %v1446 = vadd.f32 %v1438, -0.28449672
    %v1447 = vadd.f32 %v1439, -0.28449672
    %v1448 = vmul.f32 %v1440, %v1392
    %v1449 = vmul.f32 %v1441, %v1393
    %v1450 = vmul.f32 %v1442, %v1394
    %v1451 = vmul.f32 %v1443, %v1395
    %v1452 = vmul.f32 %v1444, %v1396
    %v1453 = vmul.f32 %v1445, %v1397
    %v1454 = vmul.f32 %v1446, %v1398
    %v1455 = vmul.f32 %v1447, %v1399
    %v1456 = vadd.f32 %v1448, 0.2548296
    %v1457 = vadd.f32 %v1449, 0.2548296
    %v1458 = vadd.f32 %v1450, 0.2548296
    %v1459 = vadd.f32 %v1451, 0.2548296
    %v1460 = vadd.f32 %v1452, 0.2548296
    %v1461 = vadd.f32 %v1453, 0.2548296
    %v1462 = vadd.f32 %v1454, 0.2548296
    %v1463 = vadd.f32 %v1455, 0.2548296
    %v1464 = vmul.f32 %v1456, %v1392
    %v1465 = vmul.f32 %v1457, %v1393
    %v1466 = vmul.f32 %v1458, %v1394
    %v1467 = vmul.f32 %v1459, %v1395
    %v1468 = vmul.f32 %v1460, %v1396
    %v1469 = vmul.f32 %v1461, %v1397
    %v1470 = vmul.f32 %v1462, %v1398
    %v1471 = vmul.f32 %v1463, %v1399
    %v1472 = vmul.f32 %v1368, %v1368
    %v1473 = vmul.f32 %v1369, %v1369
    %v1474 = vmul.f32 %v1370, %v1370
    %v1475 = vmul.f32 %v1371, %v1371
    %v1476 = vmul.f32 %v1372, %v1372
    %v1477 = vmul.f32 %v1373, %v1373
    %v1478 = vmul.f32 %v1374, %v1374
    %v1479 = vmul.f32 %v1375, %v1375
    %v1480 = vsub.f32 0.0, %v1472
    %v1481 = vsub.f32 0.0, %v1473
    %v1482 = vsub.f32 0.0, %v1474
    %v1483 = vsub.f32 0.0, %v1475
    %v1484 = vsub.f32 0.0, %v1476
    %v1485 = vsub.f32 0.0, %v1477
    %v1486 = vsub.f32 0.0, %v1478
    %v1487 = vsub.f32 0.0, %v1479
    %v1488 = vmul.f32 %v1480, 1.442695
    %v1489 = vpow.pop %v1488
    %v1490 = vmul.f32 %v1481, 1.442695
    %v1491 = vpow.pop %v1490
    %v1492 = vmul.f32 %v1482, 1.442695
    %v1493 = vpow.pop %v1492
    %v1494 = vmul.f32 %v1483, 1.442695
    %v1495 = vpow.pop %v1494
    %v1496 = vmul.f32 %v1484, 1.442695
    %v1497 = vpow.pop %v1496
    %v1498 = vmul.f32 %v1485, 1.442695
    %v1499 = vpow.pop %v1498
    %v1500 = vmul.f32 %v1486, 1.442695
    %v1501 = vpow.pop %v1500
    %v1502 = vmul.f32 %v1487, 1.442695
    %v1503 = vpow.pop %v1502
    %v1504 = vmul.f32 %v1464, %v1489
    %v1505 = vmul.f32 %v1465, %v1491
    %v1506 = vmul.f32 %v1466, %v1493
    %v1507 = vmul.f32 %v1467, %v1495
    %v1508 = vmul.f32 %v1468, %v1497
    %v1509 = vmul.f32 %v1469, %v1499
    %v1510 = vmul.f32 %v1470, %v1501
    %v1511 = vmul.f32 %v1471, %v1503
    %v1512 = vsub.f32 1.0, %v1504
    %v1513 = vsub.f32 1.0, %v1505
    %v1514 = vsub.f32 1.0, %v1506
    %v1515 = vsub.f32 1.0, %v1507
    %v1516 = vsub.f32 1.0, %v1508
    %v1517 = vsub.f32 1.0, %v1509
    %v1518 = vsub.f32 1.0, %v1510
    %v1519 = vsub.f32 1.0, %v1511
    %vm1520 = vcmp.ge.f32.partialorder %v1360, 0.0
    %vm1521 = vcmp.ge.f32.partialorder %v1361, 0.0
    %vm1522 = vcmp.ge.f32.partialorder %v1362, 0.0
    %vm1523 = vcmp.ge.f32.partialorder %v1363, 0.0
    %vm1524 = vcmp.ge.f32.partialorder %v1364, 0.0
    %vm1525 = vcmp.ge.f32.partialorder %v1365, 0.0
    %vm1526 = vcmp.ge.f32.partialorder %v1366, 0.0
    %vm1527 = vcmp.ge.f32.partialorder %v1367, 0.0
    %v1528 = vsub.f32 0.0, %v1512
    %v1529 = vsub.f32 0.0, %v1513
    %v1530 = vsub.f32 0.0, %v1514
    %v1531 = vsub.f32 0.0, %v1515
    %v1532 = vsub.f32 0.0, %v1516
    %v1533 = vsub.f32 0.0, %v1517
    %v1534 = vsub.f32 0.0, %v1518
    %v1535 = vsub.f32 0.0, %v1519
    %v1536 = vsel %vm1520, %v1512, %v1528
    %v1537 = vsel %vm1521, %v1513, %v1529
    %v1538 = vsel %vm1522, %v1514, %v1530
    %v1539 = vsel %vm1523, %v1515, %v1531
    %v1540 = vsel %vm1524, %v1516, %v1532
    %v1541 = vsel %vm1525, %v1517, %v1533
    %v1542 = vsel %vm1526, %v1518, %v1534
    %v1543 = vsel %vm1527, %v1519, %v1535
    %v1544 = vadd.f32 %v1536, 1.0
    %v1545 = vadd.f32 %v1537, 1.0
    %v1546 = vadd.f32 %v1538, 1.0
    %v1547 = vadd.f32 %v1539, 1.0
    %v1548 = vadd.f32 %v1540, 1.0
    %v1549 = vadd.f32 %v1541, 1.0
    %v1550 = vadd.f32 %v1542, 1.0
    %v1551 = vadd.f32 %v1543, 1.0
    %v1552 = vmul.f32 %v1352, %v1544
    %v1553 = vmul.f32 %v1353, %v1545
    %v1554 = vmul.f32 %v1354, %v1546
    %v1555 = vmul.f32 %v1355, %v1547
    %v1556 = vmul.f32 %v1356, %v1548
    %v1557 = vmul.f32 %v1357, %v1549
    %v1558 = vmul.f32 %v1358, %v1550
    %v1559 = vmul.f32 %v1359, %v1551
    %s1560 = scalar_lea.vmem [#allocation6], 12
    %v1561 = vld [vmem:[%s1560] sm:$0x7]
    %v1562 = vadd.f32 %v1552, %v1553
    %v1563 = vadd.f32 %v1562, %v1554
    %v1564 = vadd.f32 %v1563, %v1555
    %v1565 = vadd.f32 %v1564, %v1556
    %v1566 = vadd.f32 %v1565, %v1557
    %v1567 = vadd.f32 %v1566, %v1558
    %v1568 = vadd.f32 %v1567, %v1559
    %v1569 = vrot.slane %v1568, 4
    %v1570 = vadd.f32 %v1568, %v1569
    %v1571 = vrot.slane %v1570, 2
    %v1572 = vadd.f32 %v1570, %v1571
    %v1573 = vrot.slane %v1572, 1
    %v1574 = vadd.f32 %v1572, %v1573
    %v1575 = vmul.f32 %v1552, %v1552
    %v1576 = vmul.f32 %v1553, %v1553
    %v1577 = vmul.f32 %v1554, %v1554
    %v1578 = vmul.f32 %v1555, %v1555
    %v1579 = vmul.f32 %v1556, %v1556
    %v1580 = vmul.f32 %v1557, %v1557
    %v1581 = vmul.f32 %v1558, %v1558
    %v1582 = vmul.f32 %v1559, %v1559
    %v1583 = vadd.f32 %v1575, %v1576
    %v1584 = vadd.f32 %v1583, %v1577
    %v1585 = vadd.f32 %v1584, %v1578
    %v1586 = vadd.f32 %v1585, %v1579
    %v1587 = vadd.f32 %v1586, %v1580
    %v1588 = vadd.f32 %v1587, %v1581
    %v1589 = vadd.f32 %v1588, %v1582
    %v1590 = vrot.slane %v1589, 4
    %v1591 = vadd.f32 %v1589, %v1590
    %v1592 = vrot.slane %v1591, 2
    %v1593 = vadd.f32 %v1591, %v1592
    %v1594 = vrot.slane %v1593, 1
    %v1595 = vadd.f32 %v1593, %v1594
    %v1596 = vmul.f32 %v1574, 0.015625
    %v1597 = vmul.f32 %v1595, 0.015625
    %v1598 = vmul.f32 %v1596, %v1596
    %v1599 = vsub.f32 %v1597, %v1598
    %v1600 = vsub.f32 %v1552, %v1596
    %v1601 = vsub.f32 %v1553, %v1596
    %v1602 = vsub.f32 %v1554, %v1596
    %v1603 = vsub.f32 %v1555, %v1596
    %v1604 = vsub.f32 %v1556, %v1596
    %v1605 = vsub.f32 %v1557, %v1596
    %v1606 = vsub.f32 %v1558, %v1596
    %v1607 = vsub.f32 %v1559, %v1596
    %v1608 = vadd.f32 %v1599, 1e-05
    %v1609 = vrsqrt.pop %v1608
    %v1610 = vmul.f32 %v1600, %v1609
    %v1611 = vmul.f32 %v1601, %v1609
    %v1612 = vmul.f32 %v1602, %v1609
    %v1613 = vmul.f32 %v1603, %v1609
    %v1614 = vmul.f32 %v1604, %v1609
    %v1615 = vmul.f32 %v1605, %v1609
    %v1616 = vmul.f32 %v1606, %v1609
    %v1617 = vmul.f32 %v1607, %v1609
    %v1618 = vlaneseq
    %v1619 = vshrl.u32 %v1618, 7
    %v1620 = vsub.s32 0, %v1619
    %v1621 = vrot.slane %v1561, %v1620
    %v1622 = vmul.f32 %v1610, %v1621
    %v1623 = vmul.f32 %v1611, %v1621
    %v1624 = vmul.f32 %v1612, %v1621
    %v1625 = vmul.f32 %v1613, %v1621
    %v1626 = vmul.f32 %v1614, %v1621
    %v1627 = vmul.f32 %v1615, %v1621
    %v1628 = vmul.f32 %v1616, %v1621
    %v1629 = vmul.f32 %v1617, %v1621
    %v1630 = vlaneseq
    %v1631 = vshrl.u32 %v1630, 7
    %v1632 = vsub.s32 1, %v1631
    %v1633 = vrot.slane %v1561, %v1632
    %v1634 = vadd.f32 %v1622, %v1633
    %v1635 = vadd.f32 %v1623, %v1633
    %v1636 = vadd.f32 %v1624, %v1633
    %v1637 = vadd.f32 %v1625, %v1633
    %v1638 = vadd.f32 %v1626, %v1633
    %v1639 = vadd.f32 %v1627, %v1633
    %v1640 = vadd.f32 %v1628, %v1633
    %v1641 = vadd.f32 %v1629, %v1633
    %v1642 = vpack.c.bf16 %v1635, %v1634
    %v1643 = vpack.c.bf16 %v1637, %v1636
    %v1644 = vpack.c.bf16 %v1639, %v1638
    %v1645 = vpack.c.bf16 %v1641, %v1640
    %s1646 = scalar_lea.vmem [#allocation9], 128
    %v1647 = vld [vmem:[%s1646] sm:$0xff]
    %v1648 = vld [vmem:[%s1646 + $0x8] sm:$0xff]
    %v1649 = vld [vmem:[%s1646 + $0x10] sm:$0xff]
    %v1650 = vld [vmem:[%s1646 + $0x18] sm:$0xff]
    %v1651 = vld [vmem:[%s1646 + $0x20] sm:$0xff]
    %v1652 = vld [vmem:[%s1646 + $0x28] sm:$0xff]
    %v1653 = vld [vmem:[%s1646 + $0x30] sm:$0xff]
    %v1654 = vld [vmem:[%s1646 + $0x38] sm:$0xff]
    %v1655 = vld [vmem:[%s1646 + $0x40] sm:$0xff]
    %v1656 = vld [vmem:[%s1646 + $0x48] sm:$0xff]
    %v1657 = vld [vmem:[%s1646 + $0x50] sm:$0xff]
    %v1658 = vld [vmem:[%s1646 + $0x58] sm:$0xff]
    %v1659 = vld [vmem:[%s1646 + $0x60] sm:$0xff]
    %v1660 = vld [vmem:[%s1646 + $0x68] sm:$0xff]
    %v1661 = vld [vmem:[%s1646 + $0x70] sm:$0xff]
    %v1662 = vld [vmem:[%s1646 + $0x78] sm:$0xff]
    %v1679 = vunpack.c.l.b16 %v1647
    %v1680 = vunpack.c.h.b16 %v1647
    %v1681 = vunpack.c.l.b16 %v1648
    %v1682 = vunpack.c.h.b16 %v1648
    %v1683 = vunpack.c.l.b16 %v1649
    %v1684 = vunpack.c.h.b16 %v1649
    %v1685 = vunpack.c.l.b16 %v1650
    %v1686 = vunpack.c.h.b16 %v1650
    %v1687 = vunpack.c.l.b16 %v1651
    %v1688 = vunpack.c.h.b16 %v1651
    %v1689 = vunpack.c.l.b16 %v1652
    %v1690 = vunpack.c.h.b16 %v1652
    %v1691 = vunpack.c.l.b16 %v1653
    %v1692 = vunpack.c.h.b16 %v1653
    %v1693 = vunpack.c.l.b16 %v1654
    %v1694 = vunpack.c.h.b16 %v1654
    %v1695 = vunpack.c.l.b16 %v1655
    %v1696 = vunpack.c.h.b16 %v1655
    %v1697 = vunpack.c.l.b16 %v1656
    %v1698 = vunpack.c.h.b16 %v1656
    %v1699 = vunpack.c.l.b16 %v1657
    %v1700 = vunpack.c.h.b16 %v1657
    %v1701 = vunpack.c.l.b16 %v1658
    %v1702 = vunpack.c.h.b16 %v1658
    %v1703 = vunpack.c.l.b16 %v1659
    %v1704 = vunpack.c.h.b16 %v1659
    %v1705 = vunpack.c.l.b16 %v1660
    %v1706 = vunpack.c.h.b16 %v1660
    %v1707 = vunpack.c.l.b16 %v1661
    %v1708 = vunpack.c.h.b16 %v1661
    %v1709 = vunpack.c.l.b16 %v1662
    %v1710 = vunpack.c.h.b16 %v1662
    %v1711 = vpack.c.b16 %v1681, %v1679
    %v1712 = vpack.c.b16 %v1682, %v1680
    %v1713 = vpack.c.b16 %v1685, %v1683
    %v1714 = vpack.c.b16 %v1686, %v1684
    %v1715 = vpack.c.b16 %v1689, %v1687
    %v1716 = vpack.c.b16 %v1690, %v1688
    %v1717 = vpack.c.b16 %v1693, %v1691
    %v1718 = vpack.c.b16 %v1694, %v1692
    %v1719 = vpack.c.b16 %v1697, %v1695
    %v1720 = vpack.c.b16 %v1698, %v1696
    %v1721 = vpack.c.b16 %v1701, %v1699
    %v1722 = vpack.c.b16 %v1702, %v1700
    %v1723 = vpack.c.b16 %v1705, %v1703
    %v1724 = vpack.c.b16 %v1706, %v1704
    %v1725 = vpack.c.b16 %v1709, %v1707
    %v1726 = vpack.c.b16 %v1710, %v1708
    %1743 = vmatprep.subr.bf16.mxu0 %v1726
    %1744 = vmatpush1.bf16.msra.mxu0 %v1725
    %1745 = vmatprep.subr.bf16.mxu0 %v1724
    %1746 = vmatpush1.bf16.msra.mxu0 %v1723
    %1747 = vmatprep.subr.bf16.mxu0 %v1722
    %1748 = vmatpush1.bf16.msra.mxu0 %v1721
    %1749 = vmatprep.subr.bf16.mxu0 %v1720
    %1750 = vmatpush1.bf16.msra.mxu0 %v1719
    %1751 = vmatprep.subr.bf16.mxu0 %v1718
    %1752 = vmatpush1.bf16.msra.mxu0 %v1717
    %1753 = vmatprep.subr.bf16.mxu0 %v1716
    %1754 = vmatpush1.bf16.msra.mxu0 %v1715
    %1755 = vmatprep.subr.bf16.mxu0 %v1714
    %1756 = vmatpush1.bf16.msra.mxu0 %v1713
    %1757 = vmatprep.subr.bf16.mxu0 %v1712
    %1758 = vmatpush1.bf16.msra.mxu0 %v1711
    %1759 = vmatprep.subr.bf16.mxu0 0
    %1760 = vmatpush2.bf16.msra.mxu0 0
    %1761 = vmatprep.subr.bf16.mxu0 0
    %1762 = vmatpush2.bf16.msra.mxu0 0
    %1763 = vmatprep.subr.bf16.mxu0 0
    %1764 = vmatpush2.bf16.msra.mxu0 0
    %1765 = vmatprep.subr.bf16.mxu0 0
    %1766 = vmatpush2.bf16.msra.mxu0 0
    %1767 = vmatprep.subr.bf16.mxu0 0
    %1768 = vmatpush2.bf16.msra.mxu0 0
    %1769 = vmatprep.subr.bf16.mxu0 0
    %1770 = vmatpush2.bf16.msra.mxu0 0
    %1771 = vmatprep.subr.bf16.mxu0 0
    %1772 = vmatpush2.bf16.msra.mxu0 0
    %1773 = vmatprep.subr.bf16.mxu0 0
    %1774 = vmatpush2.bf16.msra.mxu0 0
    %1775 = vmatprep.mubr.bf16.mxu0 0
    %1776 = vmatmul.mubr.bf16.gmra.mxu0 %v1642
    %v1777 = vpop.f32.mrf.mxu0
    %v1778 = vadd.f32 0.0, %v1777
    %v1779 = vpop.f32.mrf.mxu0
    %v1780 = vadd.f32 0.0, %v1779
    %v1781 = vpop.f32.mrf.mxu0
    %v1782 = vadd.f32 0.0, %v1781
    %v1783 = vpop.f32.mrf.mxu0
    %v1784 = vadd.f32 0.0, %v1783
    %1785 = vmatprep.mubr.bf16.mxu0 0
    %1786 = vmatmul.mubr.bf16.gmra.mxu0 %v1643
    %v1787 = vpop.f32.mrf.mxu0
    %v1788 = vadd.f32 0.0, %v1787
    %v1789 = vpop.f32.mrf.mxu0
    %v1790 = vadd.f32 0.0, %v1789
    %v1791 = vpop.f32.mrf.mxu0
    %v1792 = vadd.f32 0.0, %v1791
    %v1793 = vpop.f32.mrf.mxu0
    %v1794 = vadd.f32 0.0, %v1793
    %1795 = vmatprep.mubr.bf16.mxu0 0
    %1796 = vmatmul.mubr.bf16.gmra.mxu0 %v1644
    %v1797 = vpop.f32.mrf.mxu0
    %v1798 = vadd.f32 0.0, %v1797
    %v1799 = vpop.f32.mrf.mxu0
    %v1800 = vadd.f32 0.0, %v1799
    %v1801 = vpop.f32.mrf.mxu0
    %v1802 = vadd.f32 0.0, %v1801
    %v1803 = vpop.f32.mrf.mxu0
    %v1804 = vadd.f32 0.0, %v1803
    %1805 = vmatprep.mubr.bf16.mxu0 0
    %1806 = vmatmul.mubr.bf16.gmra.mxu0 %v1645
    %v1807 = vpop.f32.mrf.mxu0
    %v1808 = vadd.f32 0.0, %v1807
    %v1809 = vpop.f32.mrf.mxu0
    %v1810 = vadd.f32 0.0, %v1809
    %v1811 = vpop.f32.mrf.mxu0
    %v1812 = vadd.f32 0.0, %v1811
    %v1813 = vpop.f32.mrf.mxu0
    %v1814 = vadd.f32 0.0, %v1813
    %1815 = vdwg.mxu0
    %v1816 = vpack.c.bf16 %v1784, %v1780
    %v1817 = vpack.c.bf16 %v1794, %v1790
    %v1818 = vpack.c.bf16 %v1804, %v1800
    %v1819 = vpack.c.bf16 %v1814, %v1810
    %1820 = vmatprep.subr.bf16.mxu0 0
    %1821 = vmatpush1.bf16.msra.mxu0 0
    %1822 = vmatprep.subr.bf16.mxu0 0
    %1823 = vmatpush1.bf16.msra.mxu0 0
    %1824 = vmatprep.subr.bf16.mxu0 0
    %1825 = vmatpush1.bf16.msra.mxu0 0
    %1826 = vmatprep.subr.bf16.mxu0 0
    %1827 = vmatpush1.bf16.msra.mxu0 0
    %1828 = vmatprep.subr.bf16.mxu0 0
    %1829 = vmatpush1.bf16.msra.mxu0 %v1819
    %1830 = vmatprep.subr.bf16.mxu0 0
    %1831 = vmatpush1.bf16.msra.mxu0 %v1818
    %1832 = vmatprep.subr.bf16.mxu0 0
    %1833 = vmatpush1.bf16.msra.mxu0 %v1817
    %1834 = vmatprep.subr.bf16.mxu0 0
    %1835 = vmatpush1.bf16.msra.mxu0 %v1816
    %1836 = vmatprep.subr.bf16.mxu0 0
    %1837 = vmatpush2.bf16.msra.mxu0 0
    %1838 = vmatprep.subr.bf16.mxu0 0
    %1839 = vmatpush2.bf16.msra.mxu0 0
    %1840 = vmatprep.subr.bf16.mxu0 0
    %1841 = vmatpush2.bf16.msra.mxu0 0
    %1842 = vmatprep.subr.bf16.mxu0 0
    %1843 = vmatpush2.bf16.msra.mxu0 0
    %1844 = vmatprep.subr.bf16.mxu0 0
    %1845 = vmatpush2.bf16.msra.mxu0 0
    %1846 = vmatprep.subr.bf16.mxu0 0
    %1847 = vmatpush2.bf16.msra.mxu0 0
    %1848 = vmatprep.subr.bf16.mxu0 0
    %1849 = vmatpush2.bf16.msra.mxu0 0
    %1850 = vmatprep.subr.bf16.mxu0 0
    %1851 = vmatpush2.bf16.msra.mxu0 0
    %1852 = vmatprep.mubr.bf16.mxu0 0
    %1853 = vmatmul.mubr.bf16.gmra.mxu0 %v1248
    %v1854 = vpop.f32.mrf.mxu0
    %v1855 = vadd.f32 0.0, %v1854
    %v1856 = vpop.f32.mrf.mxu0
    %v1857 = vpop.f32.mrf.mxu0
    %v1858 = vadd.f32 0.0, %v1857
    %v1859 = vpop.f32.mrf.mxu0
    %1860 = vmatprep.mubr.bf16.mxu0 0
    %1861 = vmatmul.mubr.bf16.gmra.mxu0 %v1251
    %v1862 = vpop.f32.mrf.mxu0
    %v1863 = vadd.f32 0.0, %v1862
    %v1864 = vpop.f32.mrf.mxu0
    %v1865 = vpop.f32.mrf.mxu0
    %v1866 = vadd.f32 0.0, %v1865
    %v1867 = vpop.f32.mrf.mxu0
    %1868 = vmatprep.mubr.bf16.mxu0 0
    %1869 = vmatmul.mubr.bf16.gmra.mxu0 %v1254
    %v1870 = vpop.f32.mrf.mxu0
    %v1871 = vadd.f32 0.0, %v1870
    %v1872 = vpop.f32.mrf.mxu0
    %v1873 = vpop.f32.mrf.mxu0
    %v1874 = vadd.f32 0.0, %v1873
    %v1875 = vpop.f32.mrf.mxu0
    %1876 = vmatprep.mubr.bf16.mxu0 0
    %1877 = vmatmul.mubr.bf16.gmra.mxu0 %v1257
    %v1878 = vpop.f32.mrf.mxu0
    %v1879 = vadd.f32 0.0, %v1878
    %v1880 = vpop.f32.mrf.mxu0
    %v1881 = vpop.f32.mrf.mxu0
    %v1882 = vadd.f32 0.0, %v1881
    %v1883 = vpop.f32.mrf.mxu0
    %1884 = vdwg.mxu0
    %v1885 = vadd.f32 %v1778, %v1855
    %v1886 = vadd.f32 %v1782, %v1858
    %v1887 = vadd.f32 %v1788, %v1863
    %v1888 = vadd.f32 %v1792, %v1866
    %v1889 = vadd.f32 %v1798, %v1871
    %v1890 = vadd.f32 %v1802, %v1874
    %v1891 = vadd.f32 %v1808, %v1879
    %v1892 = vadd.f32 %v1812, %v1882
    %v1893 = vlaneseq
    %v1894 = vshrl.u32 %v1893, 7
    %v1895 = vsub.s32 2, %v1894
    %v1896 = vrot.slane %v1561, %v1895
    %v1897 = vadd.f32 %v1885, %v1896
    %v1898 = vadd.f32 %v1886, %v1896
    %v1899 = vadd.f32 %v1887, %v1896
    %v1900 = vadd.f32 %v1888, %v1896
    %v1901 = vadd.f32 %v1889, %v1896
    %v1902 = vadd.f32 %v1890, %v1896
    %v1903 = vadd.f32 %v1891, %v1896
    %v1904 = vadd.f32 %v1892, %v1896
    %v1905 = vadd.f32 %v1897, %v1634
    %v1906 = vadd.f32 %v1898, %v1635
    %v1907 = vadd.f32 %v1899, %v1636
    %v1908 = vadd.f32 %v1900, %v1637
    %v1909 = vadd.f32 %v1901, %v1638
    %v1910 = vadd.f32 %v1902, %v1639
    %v1911 = vadd.f32 %v1903, %v1640
    %v1912 = vadd.f32 %v1904, %v1641
    %v1913 = vmul.f32 %v1905, 0.5
    %v1914 = vmul.f32 %v1906, 0.5
    %v1915 = vmul.f32 %v1907, 0.5
    %v1916 = vmul.f32 %v1908, 0.5
    %v1917 = vmul.f32 %v1909, 0.5
    %v1918 = vmul.f32 %v1910, 0.5
    %v1919 = vmul.f32 %v1911, 0.5
    %v1920 = vmul.f32 %v1912, 0.5
    %v1921 = vmul.f32 %v1905, 0.70710677
    %v1922 = vmul.f32 %v1906, 0.70710677
    %v1923 = vmul.f32 %v1907, 0.70710677
    %v1924 = vmul.f32 %v1908, 0.70710677
    %v1925 = vmul.f32 %v1909, 0.70710677
    %v1926 = vmul.f32 %v1910, 0.70710677
    %v1927 = vmul.f32 %v1911, 0.70710677
    %v1928 = vmul.f32 %v1912, 0.70710677
    %v1929 = vand.u32 2147483647, %v1921
    %v1930 = vand.u32 2147483647, %v1922
    %v1931 = vand.u32 2147483647, %v1923
    %v1932 = vand.u32 2147483647, %v1924
    %v1933 = vand.u32 2147483647, %v1925
    %v1934 = vand.u32 2147483647, %v1926
    %v1935 = vand.u32 2147483647, %v1927
    %v1936 = vand.u32 2147483647, %v1928
    %v1937 = vmul.f32 %v1929, 0.3275911
    %v1938 = vmul.f32 %v1930, 0.3275911
    %v1939 = vmul.f32 %v1931, 0.3275911
    %v1940 = vmul.f32 %v1932, 0.3275911
    %v1941 = vmul.f32 %v1933, 0.3275911
    %v1942 = vmul.f32 %v1934, 0.3275911
    %v1943 = vmul.f32 %v1935, 0.3275911
    %v1944 = vmul.f32 %v1936, 0.3275911
    %v1945 = vadd.f32 %v1937, 1.0
    %v1946 = vadd.f32 %v1938, 1.0
    %v1947 = vadd.f32 %v1939, 1.0
    %v1948 = vadd.f32 %v1940, 1.0
    %v1949 = vadd.f32 %v1941, 1.0
    %v1950 = vadd.f32 %v1942, 1.0
    %v1951 = vadd.f32 %v1943, 1.0
    %v1952 = vadd.f32 %v1944, 1.0
    %v1953 = vrcp.pop %v1945
    %v1954 = vrcp.pop %v1946
    %v1955 = vrcp.pop %v1947
    %v1956 = vrcp.pop %v1948
    %v1957 = vrcp.pop %v1949
    %v1958 = vrcp.pop %v1950
    %v1959 = vrcp.pop %v1951
    %v1960 = vrcp.pop %v1952
    %v1961 = vmul.f32 %v1953, 1.0614054
    %v1962 = vmul.f32 %v1954, 1.0614054
    %v1963 = vmul.f32 %v1955, 1.0614054
    %v1964 = vmul.f32 %v1956, 1.0614054
    %v1965 = vmul.f32 %v1957, 1.0614054
    %v1966 = vmul.f32 %v1958, 1.0614054
    %v1967 = vmul.f32 %v1959, 1.0614054
    %v1968 = vmul.f32 %v1960, 1.0614054
    %v1969 = vadd.f32 %v1961, -1.4531521
    %v1970 = vadd.f32 %v1962, -1.4531521
    %v1971 = vadd.f32 %v1963, -1.4531521
    %v1972 = vadd.f32 %v1964, -1.4531521
    %v1973 = vadd.f32 %v1965, -1.4531521
    %v1974 = vadd.f32 %v1966, -1.4531521
    %v1975 = vadd.f32 %v1967, -1.4531521
    %v1976 = vadd.f32 %v1968, -1.4531521
    %v1977 = vmul.f32 %v1969, %v1953
    %v1978 = vmul.f32 %v1970, %v1954
    %v1979 = vmul.f32 %v1971, %v1955
    %v1980 = vmul.f32 %v1972, %v1956
    %v1981 = vmul.f32 %v1973, %v1957
    %v1982 = vmul.f32 %v1974, %v1958
    %v1983 = vmul.f32 %v1975, %v1959
    %v1984 = vmul.f32 %v1976, %v1960
    %v1985 = vadd.f32 %v1977, 1.4214138
    %v1986 = vadd.f32 %v1978, 1.4214138
    %v1987 = vadd.f32 %v1979, 1.4214138
    %v1988 = vadd.f32 %v1980, 1.4214138
    %v1989 = vadd.f32 %v1981, 1.4214138
    %v1990 = vadd.f32 %v1982, 1.4214138
    %v1991 = vadd.f32 %v1983, 1.4214138
    %v1992 = vadd.f32 %v1984, 1.4214138
    %v1993 = vmul.f32 %v1985, %v1953
    %v1994 = vmul.f32 %v1986, %v1954
    %v1995 = vmul.f32 %v1987, %v1955
    %v1996 = vmul.f32 %v1988, %v1956
    %v1997 = vmul.f32 %v1989, %v1957
    %v1998 = vmul.f32 %v1990, %v1958
    %v1999 = vmul.f32 %v1991, %v1959
    %v2000 = vmul.f32 %v1992, %v1960
    %v2001 = vadd.f32 %v1993, -0.28449672
    %v2002 = vadd.f32 %v1994, -0.28449672
    %v2003 = vadd.f32 %v1995, -0.28449672
    %v2004 = vadd.f32 %v1996, -0.28449672
    %v2005 = vadd.f32 %v1997, -0.28449672
    %v2006 = vadd.f32 %v1998, -0.28449672
    %v2007 = vadd.f32 %v1999, -0.28449672
    %v2008 = vadd.f32 %v2000, -0.28449672
    %v2009 = vmul.f32 %v2001, %v1953
    %v2010 = vmul.f32 %v2002, %v1954
    %v2011 = vmul.f32 %v2003, %v1955
    %v2012 = vmul.f32 %v2004, %v1956
    %v2013 = vmul.f32 %v2005, %v1957
    %v2014 = vmul.f32 %v2006, %v1958
    %v2015 = vmul.f32 %v2007, %v1959
    %v2016 = vmul.f32 %v2008, %v1960
    %v2017 = vadd.f32 %v2009, 0.2548296
    %v2018 = vadd.f32 %v2010, 0.2548296
    %v2019 = vadd.f32 %v2011, 0.2548296
    %v2020 = vadd.f32 %v2012, 0.2548296
    %v2021 = vadd.f32 %v2013, 0.2548296
    %v2022 = vadd.f32 %v2014, 0.2548296
    %v2023 = vadd.f32 %v2015, 0.2548296
    %v2024 = vadd.f32 %v2016, 0.2548296
    %v2025 = vmul.f32 %v2017, %v1953
    %v2026 = vmul.f32 %v2018, %v1954
    %v2027 = vmul.f32 %v2019, %v1955
    %v2028 = vmul.f32 %v2020, %v1956
    %v2029 = vmul.f32 %v2021, %v1957
    %v2030 = vmul.f32 %v2022, %v1958
    %v2031 = vmul.f32 %v2023, %v1959
    %v2032 = vmul.f32 %v2024, %v1960
    %v2033 = vmul.f32 %v1929, %v1929
    %v2034 = vmul.f32 %v1930, %v1930
    %v2035 = vmul.f32 %v1931, %v1931
    %v2036 = vmul.f32 %v1932, %v1932
    %v2037 = vmul.f32 %v1933, %v1933
    %v2038 = vmul.f32 %v1934, %v1934
    %v2039 = vmul.f32 %v1935, %v1935
    %v2040 = vmul.f32 %v1936, %v1936
    %v2041 = vsub.f32 0.0, %v2033
    %v2042 = vsub.f32 0.0, %v2034
    %v2043 = vsub.f32 0.0, %v2035
    %v2044 = vsub.f32 0.0, %v2036
    %v2045 = vsub.f32 0.0, %v2037
    %v2046 = vsub.f32 0.0, %v2038
    %v2047 = vsub.f32 0.0, %v2039
    %v2048 = vsub.f32 0.0, %v2040
    %v2049 = vmul.f32 %v2041, 1.442695
    %v2050 = vpow.pop %v2049
    %v2051 = vmul.f32 %v2042, 1.442695
    %v2052 = vpow.pop %v2051
    %v2053 = vmul.f32 %v2043, 1.442695
    %v2054 = vpow.pop %v2053
    %v2055 = vmul.f32 %v2044, 1.442695
    %v2056 = vpow.pop %v2055
    %v2057 = vmul.f32 %v2045, 1.442695
    %v2058 = vpow.pop %v2057
    %v2059 = vmul.f32 %v2046, 1.442695
    %v2060 = vpow.pop %v2059
    %v2061 = vmul.f32 %v2047, 1.442695
    %v2062 = vpow.pop %v2061
    %v2063 = vmul.f32 %v2048, 1.442695
    %v2064 = vpow.pop %v2063
    %v2065 = vmul.f32 %v2025, %v2050
    %v2066 = vmul.f32 %v2026, %v2052
    %v2067 = vmul.f32 %v2027, %v2054
    %v2068 = vmul.f32 %v2028, %v2056
    %v2069 = vmul.f32 %v2029, %v2058
    %v2070 = vmul.f32 %v2030, %v2060
    %v2071 = vmul.f32 %v2031, %v2062
    %v2072 = vmul.f32 %v2032, %v2064
    %v2073 = vsub.f32 1.0, %v2065
    %v2074 = vsub.f32 1.0, %v2066
    %v2075 = vsub.f32 1.0, %v2067
    %v2076 = vsub.f32 1.0, %v2068
    %v2077 = vsub.f32 1.0, %v2069
    %v2078 = vsub.f32 1.0, %v2070
    %v2079 = vsub.f32 1.0, %v2071
    %v2080 = vsub.f32 1.0, %v2072
    %vm2081 = vcmp.ge.f32.partialorder %v1921, 0.0
    %vm2082 = vcmp.ge.f32.partialorder %v1922, 0.0
    %vm2083 = vcmp.ge.f32.partialorder %v1923, 0.0
    %vm2084 = vcmp.ge.f32.partialorder %v1924, 0.0
    %vm2085 = vcmp.ge.f32.partialorder %v1925, 0.0
    %vm2086 = vcmp.ge.f32.partialorder %v1926, 0.0
    %vm2087 = vcmp.ge.f32.partialorder %v1927, 0.0
    %vm2088 = vcmp.ge.f32.partialorder %v1928, 0.0
    %v2089 = vsub.f32 0.0, %v2073
    %v2090 = vsub.f32 0.0, %v2074
    %v2091 = vsub.f32 0.0, %v2075
    %v2092 = vsub.f32 0.0, %v2076
    %v2093 = vsub.f32 0.0, %v2077
    %v2094 = vsub.f32 0.0, %v2078
    %v2095 = vsub.f32 0.0, %v2079
    %v2096 = vsub.f32 0.0, %v2080
    %v2097 = vsel %vm2081, %v2073, %v2089
    %v2098 = vsel %vm2082, %v2074, %v2090
    %v2099 = vsel %vm2083, %v2075, %v2091
    %v2100 = vsel %vm2084, %v2076, %v2092
    %v2101 = vsel %vm2085, %v2077, %v2093
    %v2102 = vsel %vm2086, %v2078, %v2094
    %v2103 = vsel %vm2087, %v2079, %v2095
    %v2104 = vsel %vm2088, %v2080, %v2096
    %v2105 = vadd.f32 %v2097, 1.0
    %v2106 = vadd.f32 %v2098, 1.0
    %v2107 = vadd.f32 %v2099, 1.0
    %v2108 = vadd.f32 %v2100, 1.0
    %v2109 = vadd.f32 %v2101, 1.0
    %v2110 = vadd.f32 %v2102, 1.0
    %v2111 = vadd.f32 %v2103, 1.0
    %v2112 = vadd.f32 %v2104, 1.0
    %v2113 = vmul.f32 %v1913, %v2105
    %v2114 = vmul.f32 %v1914, %v2106
    %v2115 = vmul.f32 %v1915, %v2107
    %v2116 = vmul.f32 %v1916, %v2108
    %v2117 = vmul.f32 %v1917, %v2109
    %v2118 = vmul.f32 %v1918, %v2110
    %v2119 = vmul.f32 %v1919, %v2111
    %v2120 = vmul.f32 %v1920, %v2112
    %s2121 = scalar_lea.vmem [#allocation6], 16
    %v2122 = vld [vmem:[%s2121] sm:$0x7]
    %v2123 = vadd.f32 %v2113, %v2114
    %v2124 = vadd.f32 %v2123, %v2115
    %v2125 = vadd.f32 %v2124, %v2116
    %v2126 = vadd.f32 %v2125, %v2117
    %v2127 = vadd.f32 %v2126, %v2118
    %v2128 = vadd.f32 %v2127, %v2119
    %v2129 = vadd.f32 %v2128, %v2120
    %v2130 = vrot.slane %v2129, 4
    %v2131 = vadd.f32 %v2129, %v2130
    %v2132 = vrot.slane %v2131, 2
    %v2133 = vadd.f32 %v2131, %v2132
    %v2134 = vrot.slane %v2133, 1
    %v2135 = vadd.f32 %v2133, %v2134
    %v2136 = vmul.f32 %v2113, %v2113
    %v2137 = vmul.f32 %v2114, %v2114
    %v2138 = vmul.f32 %v2115, %v2115
    %v2139 = vmul.f32 %v2116, %v2116
    %v2140 = vmul.f32 %v2117, %v2117
    %v2141 = vmul.f32 %v2118, %v2118
    %v2142 = vmul.f32 %v2119, %v2119
    %v2143 = vmul.f32 %v2120, %v2120
    %v2144 = vadd.f32 %v2136, %v2137
    %v2145 = vadd.f32 %v2144, %v2138
    %v2146 = vadd.f32 %v2145, %v2139
    %v2147 = vadd.f32 %v2146, %v2140
    %v2148 = vadd.f32 %v2147, %v2141
    %v2149 = vadd.f32 %v2148, %v2142
    %v2150 = vadd.f32 %v2149, %v2143
    %v2151 = vrot.slane %v2150, 4
    %v2152 = vadd.f32 %v2150, %v2151
    %v2153 = vrot.slane %v2152, 2
    %v2154 = vadd.f32 %v2152, %v2153
    %v2155 = vrot.slane %v2154, 1
    %v2156 = vadd.f32 %v2154, %v2155
    %v2157 = vmul.f32 %v2135, 0.015625
    %v2158 = vmul.f32 %v2156, 0.015625
    %v2159 = vmul.f32 %v2157, %v2157
    %v2160 = vsub.f32 %v2158, %v2159
    %v2161 = vsub.f32 %v2113, %v2157
    %v2162 = vsub.f32 %v2114, %v2157
    %v2163 = vsub.f32 %v2115, %v2157
    %v2164 = vsub.f32 %v2116, %v2157
    %v2165 = vsub.f32 %v2117, %v2157
    %v2166 = vsub.f32 %v2118, %v2157
    %v2167 = vsub.f32 %v2119, %v2157
    %v2168 = vsub.f32 %v2120, %v2157
    %v2169 = vadd.f32 %v2160, 1e-05
    %v2170 = vrsqrt.pop %v2169
    %v2171 = vmul.f32 %v2161, %v2170
    %v2172 = vmul.f32 %v2162, %v2170
    %v2173 = vmul.f32 %v2163, %v2170
    %v2174 = vmul.f32 %v2164, %v2170
    %v2175 = vmul.f32 %v2165, %v2170
    %v2176 = vmul.f32 %v2166, %v2170
    %v2177 = vmul.f32 %v2167, %v2170
    %v2178 = vmul.f32 %v2168, %v2170
    %v2179 = vlaneseq
    %v2180 = vshrl.u32 %v2179, 7
    %v2181 = vsub.s32 0, %v2180
    %v2182 = vrot.slane %v2122, %v2181
    %v2183 = vmul.f32 %v2171, %v2182
    %v2184 = vmul.f32 %v2172, %v2182
    %v2185 = vmul.f32 %v2173, %v2182
    %v2186 = vmul.f32 %v2174, %v2182
    %v2187 = vmul.f32 %v2175, %v2182
    %v2188 = vmul.f32 %v2176, %v2182
    %v2189 = vmul.f32 %v2177, %v2182
    %v2190 = vmul.f32 %v2178, %v2182
    %v2191 = vlaneseq
    %v2192 = vshrl.u32 %v2191, 7
    %v2193 = vsub.s32 1, %v2192
    %v2194 = vrot.slane %v2122, %v2193
    %v2195 = vadd.f32 %v2183, %v2194
    %v2196 = vadd.f32 %v2184, %v2194
    %v2197 = vadd.f32 %v2185, %v2194
    %v2198 = vadd.f32 %v2186, %v2194
    %v2199 = vadd.f32 %v2187, %v2194
    %v2200 = vadd.f32 %v2188, %v2194
    %v2201 = vadd.f32 %v2189, %v2194
    %v2202 = vadd.f32 %v2190, %v2194
    %v2203 = vpack.c.bf16 %v2196, %v2195
    %v2204 = vpack.c.bf16 %v2198, %v2197
    %v2205 = vpack.c.bf16 %v2200, %v2199
    %v2206 = vpack.c.bf16 %v2202, %v2201
    %s2207 = scalar_lea.vmem [#allocation7], 128
    %v2208 = vld [vmem:[%s2207] sm:$0xf]
    %v2209 = vld [vmem:[%s2207 + $0x4] sm:$0xf]
    %v2210 = vld [vmem:[%s2207 + $0x8] sm:$0xf]
    %v2211 = vld [vmem:[%s2207 + $0xc] sm:$0xf]
    %v2212 = vld [vmem:[%s2207 + $0x10] sm:$0xf]
    %v2213 = vld [vmem:[%s2207 + $0x14] sm:$0xf]
    %v2214 = vld [vmem:[%s2207 + $0x18] sm:$0xf]
    %v2215 = vld [vmem:[%s2207 + $0x1c] sm:$0xf]
    %v2216 = vld [vmem:[%s2207 + $0x20] sm:$0xf]
    %v2217 = vld [vmem:[%s2207 + $0x24] sm:$0xf]
    %v2218 = vld [vmem:[%s2207 + $0x28] sm:$0xf]
    %v2219 = vld [vmem:[%s2207 + $0x2c] sm:$0xf]
    %v2220 = vld [vmem:[%s2207 + $0x30] sm:$0xf]
    %v2221 = vld [vmem:[%s2207 + $0x34] sm:$0xf]
    %v2222 = vld [vmem:[%s2207 + $0x38] sm:$0xf]
    %v2223 = vld [vmem:[%s2207 + $0x3c] sm:$0xf]
    %v2224 = vlaneseq
    %v2225 = vshrl.u32 %v2224, 7
    %v2226 = vsub.s32 2, %v2225
    %v2227 = vrot.slane %v2122, %v2226
    %v2244 = vunpack.c.l.b16 %v2208
    %v2245 = vunpack.c.l.b16 %v2209
    %v2246 = vunpack.c.l.b16 %v2210
    %v2247 = vunpack.c.l.b16 %v2211
    %v2248 = vunpack.c.l.b16 %v2212
    %v2249 = vunpack.c.l.b16 %v2213
    %v2250 = vunpack.c.l.b16 %v2214
    %v2251 = vunpack.c.l.b16 %v2215
    %v2252 = vunpack.c.l.b16 %v2216
    %v2253 = vunpack.c.l.b16 %v2217
    %v2254 = vunpack.c.l.b16 %v2218
    %v2255 = vunpack.c.l.b16 %v2219
    %v2256 = vunpack.c.l.b16 %v2220
    %v2257 = vunpack.c.l.b16 %v2221
    %v2258 = vunpack.c.l.b16 %v2222
    %v2259 = vunpack.c.l.b16 %v2223
    %v2260 = vpack.c.b16 %v2245, %v2244
    %v2261 = vpack.c.b16 %v2247, %v2246
    %v2262 = vpack.c.b16 %v2249, %v2248
    %v2263 = vpack.c.b16 %v2251, %v2250
    %v2264 = vpack.c.b16 %v2253, %v2252
    %v2265 = vpack.c.b16 %v2255, %v2254
    %v2266 = vpack.c.b16 %v2257, %v2256
    %v2267 = vpack.c.b16 %v2259, %v2258
    %2276 = vmatprep.subr.bf16.mxu0 0
    %2277 = vmatpush1.bf16.msra.mxu0 %v2267
    %2278 = vmatprep.subr.bf16.mxu0 0
    %2279 = vmatpush1.bf16.msra.mxu0 %v2266
    %2280 = vmatprep.subr.bf16.mxu0 0
    %2281 = vmatpush1.bf16.msra.mxu0 %v2265
    %2282 = vmatprep.subr.bf16.mxu0 0
    %2283 = vmatpush1.bf16.msra.mxu0 %v2264
    %2284 = vmatprep.subr.bf16.mxu0 0
    %2285 = vmatpush1.bf16.msra.mxu0 %v2263
    %2286 = vmatprep.subr.bf16.mxu0 0
    %2287 = vmatpush1.bf16.msra.mxu0 %v2262
    %2288 = vmatprep.subr.bf16.mxu0 0
    %2289 = vmatpush1.bf16.msra.mxu0 %v2261
    %2290 = vmatprep.subr.bf16.mxu0 0
    %2291 = vmatpush1.bf16.msra.mxu0 %v2260
    %2292 = vmatprep.subr.bf16.mxu0 0
    %2293 = vmatpush2.bf16.msra.mxu0 0
    %2294 = vmatprep.subr.bf16.mxu0 0
    %2295 = vmatpush2.bf16.msra.mxu0 0
    %2296 = vmatprep.subr.bf16.mxu0 0
    %2297 = vmatpush2.bf16.msra.mxu0 0
    %2298 = vmatprep.subr.bf16.mxu0 0
    %2299 = vmatpush2.bf16.msra.mxu0 0
    %2300 = vmatprep.subr.bf16.mxu0 0
    %2301 = vmatpush2.bf16.msra.mxu0 0
    %2302 = vmatprep.subr.bf16.mxu0 0
    %2303 = vmatpush2.bf16.msra.mxu0 0
    %2304 = vmatprep.subr.bf16.mxu0 0
    %2305 = vmatpush2.bf16.msra.mxu0 0
    %2306 = vmatprep.subr.bf16.mxu0 0
    %2307 = vmatpush2.bf16.msra.mxu0 0
    %2308 = vmatprep.mubr.bf16.mxu0 0
    %2309 = vmatmul.mubr.bf16.gmra.mxu0 %v2203
    %v2310 = vpop.f32.mrf.mxu0
    %v2311 = vadd.f32 %v2227, %v2310
    %v2312 = vpop.f32.mrf.mxu0
    %v2313 = vpop.f32.mrf.mxu0
    %v2314 = vadd.f32 %v2227, %v2313
    %v2315 = vpop.f32.mrf.mxu0
    %2316 = vmatprep.mubr.bf16.mxu0 0
    %2317 = vmatmul.mubr.bf16.gmra.mxu0 %v2204
    %v2318 = vpop.f32.mrf.mxu0
    %v2319 = vadd.f32 %v2227, %v2318
    %v2320 = vpop.f32.mrf.mxu0
    %v2321 = vpop.f32.mrf.mxu0
    %v2322 = vadd.f32 %v2227, %v2321
    %v2323 = vpop.f32.mrf.mxu0
    %2324 = vmatprep.mubr.bf16.mxu0 0
    %2325 = vmatmul.mubr.bf16.gmra.mxu0 %v2205
    %v2326 = vpop.f32.mrf.mxu0
    %v2327 = vadd.f32 %v2227, %v2326
    %v2328 = vpop.f32.mrf.mxu0
    %v2329 = vpop.f32.mrf.mxu0
    %v2330 = vadd.f32 %v2227, %v2329
    %v2331 = vpop.f32.mrf.mxu0
    %2332 = vmatprep.mubr.bf16.mxu0 0
    %2333 = vmatmul.mubr.bf16.gmra.mxu0 %v2206
    %v2334 = vpop.f32.mrf.mxu0
    %v2335 = vadd.f32 %v2227, %v2334
    %v2336 = vpop.f32.mrf.mxu0
    %v2337 = vpop.f32.mrf.mxu0
    %v2338 = vadd.f32 %v2227, %v2337
    %v2339 = vpop.f32.mrf.mxu0
    %2340 = vdwg.mxu0
    %v2341 = vmul.f32 %v2311, 0.5
    %v2342 = vmul.f32 %v2314, 0.5
    %v2343 = vmul.f32 %v2319, 0.5
    %v2344 = vmul.f32 %v2322, 0.5
    %v2345 = vmul.f32 %v2327, 0.5
    %v2346 = vmul.f32 %v2330, 0.5
    %v2347 = vmul.f32 %v2335, 0.5
    %v2348 = vmul.f32 %v2338, 0.5
    %v2349 = vmul.f32 %v2311, 0.70710677
    %v2350 = vmul.f32 %v2314, 0.70710677
    %v2351 = vmul.f32 %v2319, 0.70710677
    %v2352 = vmul.f32 %v2322, 0.70710677
    %v2353 = vmul.f32 %v2327, 0.70710677
    %v2354 = vmul.f32 %v2330, 0.70710677
    %v2355 = vmul.f32 %v2335, 0.70710677
    %v2356 = vmul.f32 %v2338, 0.70710677
    %v2357 = vand.u32 2147483647, %v2349
    %v2358 = vand.u32 2147483647, %v2350
    %v2359 = vand.u32 2147483647, %v2351
    %v2360 = vand.u32 2147483647, %v2352
    %v2361 = vand.u32 2147483647, %v2353
    %v2362 = vand.u32 2147483647, %v2354
    %v2363 = vand.u32 2147483647, %v2355
    %v2364 = vand.u32 2147483647, %v2356
    %v2365 = vmul.f32 %v2357, 0.3275911
    %v2366 = vmul.f32 %v2358, 0.3275911
    %v2367 = vmul.f32 %v2359, 0.3275911
    %v2368 = vmul.f32 %v2360, 0.3275911
    %v2369 = vmul.f32 %v2361, 0.3275911
    %v2370 = vmul.f32 %v2362, 0.3275911
    %v2371 = vmul.f32 %v2363, 0.3275911
    %v2372 = vmul.f32 %v2364, 0.3275911
    %v2373 = vadd.f32 %v2365, 1.0
    %v2374 = vadd.f32 %v2366, 1.0
    %v2375 = vadd.f32 %v2367, 1.0
    %v2376 = vadd.f32 %v2368, 1.0
    %v2377 = vadd.f32 %v2369, 1.0
    %v2378 = vadd.f32 %v2370, 1.0
    %v2379 = vadd.f32 %v2371, 1.0
    %v2380 = vadd.f32 %v2372, 1.0
    %v2381 = vrcp.pop %v2373
    %v2382 = vrcp.pop %v2374
    %v2383 = vrcp.pop %v2375
    %v2384 = vrcp.pop %v2376
    %v2385 = vrcp.pop %v2377
    %v2386 = vrcp.pop %v2378
    %v2387 = vrcp.pop %v2379
    %v2388 = vrcp.pop %v2380
    %v2389 = vmul.f32 %v2381, 1.0614054
    %v2390 = vmul.f32 %v2382, 1.0614054
    %v2391 = vmul.f32 %v2383, 1.0614054
    %v2392 = vmul.f32 %v2384, 1.0614054
    %v2393 = vmul.f32 %v2385, 1.0614054
    %v2394 = vmul.f32 %v2386, 1.0614054
    %v2395 = vmul.f32 %v2387, 1.0614054
    %v2396 = vmul.f32 %v2388, 1.0614054
    %v2397 = vadd.f32 %v2389, -1.4531521
    %v2398 = vadd.f32 %v2390, -1.4531521
    %v2399 = vadd.f32 %v2391, -1.4531521
    %v2400 = vadd.f32 %v2392, -1.4531521
    %v2401 = vadd.f32 %v2393, -1.4531521
    %v2402 = vadd.f32 %v2394, -1.4531521
    %v2403 = vadd.f32 %v2395, -1.4531521
    %v2404 = vadd.f32 %v2396, -1.4531521
    %v2405 = vmul.f32 %v2397, %v2381
    %v2406 = vmul.f32 %v2398, %v2382
    %v2407 = vmul.f32 %v2399, %v2383
    %v2408 = vmul.f32 %v2400, %v2384
    %v2409 = vmul.f32 %v2401, %v2385
    %v2410 = vmul.f32 %v2402, %v2386
    %v2411 = vmul.f32 %v2403, %v2387
    %v2412 = vmul.f32 %v2404, %v2388
    %v2413 = vadd.f32 %v2405, 1.4214138
    %v2414 = vadd.f32 %v2406, 1.4214138
    %v2415 = vadd.f32 %v2407, 1.4214138
    %v2416 = vadd.f32 %v2408, 1.4214138
    %v2417 = vadd.f32 %v2409, 1.4214138
    %v2418 = vadd.f32 %v2410, 1.4214138
    %v2419 = vadd.f32 %v2411, 1.4214138
    %v2420 = vadd.f32 %v2412, 1.4214138
    %v2421 = vmul.f32 %v2413, %v2381
    %v2422 = vmul.f32 %v2414, %v2382
    %v2423 = vmul.f32 %v2415, %v2383
    %v2424 = vmul.f32 %v2416, %v2384
    %v2425 = vmul.f32 %v2417, %v2385
    %v2426 = vmul.f32 %v2418, %v2386
    %v2427 = vmul.f32 %v2419, %v2387
    %v2428 = vmul.f32 %v2420, %v2388
    %v2429 = vadd.f32 %v2421, -0.28449672
    %v2430 = vadd.f32 %v2422, -0.28449672
    %v2431 = vadd.f32 %v2423, -0.28449672
    %v2432 = vadd.f32 %v2424, -0.28449672
    %v2433 = vadd.f32 %v2425, -0.28449672
    %v2434 = vadd.f32 %v2426, -0.28449672
    %v2435 = vadd.f32 %v2427, -0.28449672
    %v2436 = vadd.f32 %v2428, -0.28449672
    %v2437 = vmul.f32 %v2429, %v2381
    %v2438 = vmul.f32 %v2430, %v2382
    %v2439 = vmul.f32 %v2431, %v2383
    %v2440 = vmul.f32 %v2432, %v2384
    %v2441 = vmul.f32 %v2433, %v2385
    %v2442 = vmul.f32 %v2434, %v2386
    %v2443 = vmul.f32 %v2435, %v2387
    %v2444 = vmul.f32 %v2436, %v2388
    %v2445 = vadd.f32 %v2437, 0.2548296
    %v2446 = vadd.f32 %v2438, 0.2548296
    %v2447 = vadd.f32 %v2439, 0.2548296
    %v2448 = vadd.f32 %v2440, 0.2548296
    %v2449 = vadd.f32 %v2441, 0.2548296
    %v2450 = vadd.f32 %v2442, 0.2548296
    %v2451 = vadd.f32 %v2443, 0.2548296
    %v2452 = vadd.f32 %v2444, 0.2548296
    %v2453 = vmul.f32 %v2445, %v2381
    %v2454 = vmul.f32 %v2446, %v2382
    %v2455 = vmul.f32 %v2447, %v2383
    %v2456 = vmul.f32 %v2448, %v2384
    %v2457 = vmul.f32 %v2449, %v2385
    %v2458 = vmul.f32 %v2450, %v2386
    %v2459 = vmul.f32 %v2451, %v2387
    %v2460 = vmul.f32 %v2452, %v2388
    %v2461 = vmul.f32 %v2357, %v2357
    %v2462 = vmul.f32 %v2358, %v2358
    %v2463 = vmul.f32 %v2359, %v2359
    %v2464 = vmul.f32 %v2360, %v2360
    %v2465 = vmul.f32 %v2361, %v2361
    %v2466 = vmul.f32 %v2362, %v2362
    %v2467 = vmul.f32 %v2363, %v2363
    %v2468 = vmul.f32 %v2364, %v2364
    %v2469 = vsub.f32 0.0, %v2461
    %v2470 = vsub.f32 0.0, %v2462
    %v2471 = vsub.f32 0.0, %v2463
    %v2472 = vsub.f32 0.0, %v2464
    %v2473 = vsub.f32 0.0, %v2465
    %v2474 = vsub.f32 0.0, %v2466
    %v2475 = vsub.f32 0.0, %v2467
    %v2476 = vsub.f32 0.0, %v2468
    %v2477 = vmul.f32 %v2469, 1.442695
    %v2478 = vpow.pop %v2477
    %v2479 = vmul.f32 %v2470, 1.442695
    %v2480 = vpow.pop %v2479
    %v2481 = vmul.f32 %v2471, 1.442695
    %v2482 = vpow.pop %v2481
    %v2483 = vmul.f32 %v2472, 1.442695
    %v2484 = vpow.pop %v2483
    %v2485 = vmul.f32 %v2473, 1.442695
    %v2486 = vpow.pop %v2485
    %v2487 = vmul.f32 %v2474, 1.442695
    %v2488 = vpow.pop %v2487
    %v2489 = vmul.f32 %v2475, 1.442695
    %v2490 = vpow.pop %v2489
    %v2491 = vmul.f32 %v2476, 1.442695
    %v2492 = vpow.pop %v2491
    %v2493 = vmul.f32 %v2453, %v2478
    %v2494 = vmul.f32 %v2454, %v2480
    %v2495 = vmul.f32 %v2455, %v2482
    %v2496 = vmul.f32 %v2456, %v2484
    %v2497 = vmul.f32 %v2457, %v2486
    %v2498 = vmul.f32 %v2458, %v2488
    %v2499 = vmul.f32 %v2459, %v2490
    %v2500 = vmul.f32 %v2460, %v2492
    %v2501 = vsub.f32 1.0, %v2493
    %v2502 = vsub.f32 1.0, %v2494
    %v2503 = vsub.f32 1.0, %v2495
    %v2504 = vsub.f32 1.0, %v2496
    %v2505 = vsub.f32 1.0, %v2497
    %v2506 = vsub.f32 1.0, %v2498
    %v2507 = vsub.f32 1.0, %v2499
    %v2508 = vsub.f32 1.0, %v2500
    %vm2509 = vcmp.ge.f32.partialorder %v2349, 0.0
    %vm2510 = vcmp.ge.f32.partialorder %v2350, 0.0
    %vm2511 = vcmp.ge.f32.partialorder %v2351, 0.0
    %vm2512 = vcmp.ge.f32.partialorder %v2352, 0.0
    %vm2513 = vcmp.ge.f32.partialorder %v2353, 0.0
    %vm2514 = vcmp.ge.f32.partialorder %v2354, 0.0
    %vm2515 = vcmp.ge.f32.partialorder %v2355, 0.0
    %vm2516 = vcmp.ge.f32.partialorder %v2356, 0.0
    %v2517 = vsub.f32 0.0, %v2501
    %v2518 = vsub.f32 0.0, %v2502
    %v2519 = vsub.f32 0.0, %v2503
    %v2520 = vsub.f32 0.0, %v2504
    %v2521 = vsub.f32 0.0, %v2505
    %v2522 = vsub.f32 0.0, %v2506
    %v2523 = vsub.f32 0.0, %v2507
    %v2524 = vsub.f32 0.0, %v2508
    %v2525 = vsel %vm2509, %v2501, %v2517
    %v2526 = vsel %vm2510, %v2502, %v2518
    %v2527 = vsel %vm2511, %v2503, %v2519
    %v2528 = vsel %vm2512, %v2504, %v2520
    %v2529 = vsel %vm2513, %v2505, %v2521
    %v2530 = vsel %vm2514, %v2506, %v2522
    %v2531 = vsel %vm2515, %v2507, %v2523
    %v2532 = vsel %vm2516, %v2508, %v2524
    %v2533 = vadd.f32 %v2525, 1.0
    %v2534 = vadd.f32 %v2526, 1.0
    %v2535 = vadd.f32 %v2527, 1.0
    %v2536 = vadd.f32 %v2528, 1.0
    %v2537 = vadd.f32 %v2529, 1.0
    %v2538 = vadd.f32 %v2530, 1.0
    %v2539 = vadd.f32 %v2531, 1.0
    %v2540 = vadd.f32 %v2532, 1.0
    %v2541 = vmul.f32 %v2341, %v2533
    %v2542 = vmul.f32 %v2342, %v2534
    %v2543 = vmul.f32 %v2343, %v2535
    %v2544 = vmul.f32 %v2344, %v2536
    %v2545 = vmul.f32 %v2345, %v2537
    %v2546 = vmul.f32 %v2346, %v2538
    %v2547 = vmul.f32 %v2347, %v2539
    %v2548 = vmul.f32 %v2348, %v2540
    %v2549 = vadd.f32 %v2195, %v2541
    %v2550 = vadd.f32 %v2196, %v2542
    %v2551 = vadd.f32 %v2197, %v2543
    %v2552 = vadd.f32 %v2198, %v2544
    %v2553 = vadd.f32 %v2199, %v2545
    %v2554 = vadd.f32 %v2200, %v2546
    %v2555 = vadd.f32 %v2201, %v2547
    %v2556 = vadd.f32 %v2202, %v2548
    %s2557 = scalar_lea.vmem [#allocation6], 20
    %v2558 = vld [vmem:[%s2557] sm:$0x7]
    %v2559 = vadd.f32 %v2549, %v2550
    %v2560 = vadd.f32 %v2559, %v2551
    %v2561 = vadd.f32 %v2560, %v2552
    %v2562 = vadd.f32 %v2561, %v2553
    %v2563 = vadd.f32 %v2562, %v2554
    %v2564 = vadd.f32 %v2563, %v2555
    %v2565 = vadd.f32 %v2564, %v2556
    %v2566 = vrot.slane %v2565, 4
    %v2567 = vadd.f32 %v2565, %v2566
    %v2568 = vrot.slane %v2567, 2
    %v2569 = vadd.f32 %v2567, %v2568
    %v2570 = vrot.slane %v2569, 1
    %v2571 = vadd.f32 %v2569, %v2570
    %v2572 = vmul.f32 %v2549, %v2549
    %v2573 = vmul.f32 %v2550, %v2550
    %v2574 = vmul.f32 %v2551, %v2551
    %v2575 = vmul.f32 %v2552, %v2552
    %v2576 = vmul.f32 %v2553, %v2553
    %v2577 = vmul.f32 %v2554, %v2554
    %v2578 = vmul.f32 %v2555, %v2555
    %v2579 = vmul.f32 %v2556, %v2556
    %v2580 = vadd.f32 %v2572, %v2573
    %v2581 = vadd.f32 %v2580, %v2574
    %v2582 = vadd.f32 %v2581, %v2575
    %v2583 = vadd.f32 %v2582, %v2576
    %v2584 = vadd.f32 %v2583, %v2577
    %v2585 = vadd.f32 %v2584, %v2578
    %v2586 = vadd.f32 %v2585, %v2579
    %v2587 = vrot.slane %v2586, 4
    %v2588 = vadd.f32 %v2586, %v2587
    %v2589 = vrot.slane %v2588, 2
    %v2590 = vadd.f32 %v2588, %v2589
    %v2591 = vrot.slane %v2590, 1
    %v2592 = vadd.f32 %v2590, %v2591
    %v2593 = vmul.f32 %v2571, 0.015625
    %v2594 = vmul.f32 %v2592, 0.015625
    %v2595 = vmul.f32 %v2593, %v2593
    %v2596 = vsub.f32 %v2594, %v2595
    %v2597 = vsub.f32 %v2549, %v2593
    %v2598 = vsub.f32 %v2550, %v2593
    %v2599 = vsub.f32 %v2551, %v2593
    %v2600 = vsub.f32 %v2552, %v2593
    %v2601 = vsub.f32 %v2553, %v2593
    %v2602 = vsub.f32 %v2554, %v2593
    %v2603 = vsub.f32 %v2555, %v2593
    %v2604 = vsub.f32 %v2556, %v2593
    %v2605 = vadd.f32 %v2596, 1e-05
    %v2606 = vrsqrt.pop %v2605
    %v2607 = vmul.f32 %v2597, %v2606
    %v2608 = vmul.f32 %v2598, %v2606
    %v2609 = vmul.f32 %v2599, %v2606
    %v2610 = vmul.f32 %v2600, %v2606
    %v2611 = vmul.f32 %v2601, %v2606
    %v2612 = vmul.f32 %v2602, %v2606
    %v2613 = vmul.f32 %v2603, %v2606
    %v2614 = vmul.f32 %v2604, %v2606
    %v2615 = vlaneseq
    %v2616 = vshrl.u32 %v2615, 7
    %v2617 = vsub.s32 0, %v2616
    %v2618 = vrot.slane %v2558, %v2617
    %v2619 = vmul.f32 %v2607, %v2618
    %v2620 = vmul.f32 %v2608, %v2618
    %v2621 = vmul.f32 %v2609, %v2618
    %v2622 = vmul.f32 %v2610, %v2618
    %v2623 = vmul.f32 %v2611, %v2618
    %v2624 = vmul.f32 %v2612, %v2618
    %v2625 = vmul.f32 %v2613, %v2618
    %v2626 = vmul.f32 %v2614, %v2618
    %v2627 = vlaneseq
    %v2628 = vshrl.u32 %v2627, 7
    %v2629 = vsub.s32 1, %v2628
    %v2630 = vrot.slane %v2558, %v2629
    %v2631 = vadd.f32 %v2619, %v2630
    %v2632 = vadd.f32 %v2620, %v2630
    %v2633 = vadd.f32 %v2621, %v2630
    %v2634 = vadd.f32 %v2622, %v2630
    %v2635 = vadd.f32 %v2623, %v2630
    %v2636 = vadd.f32 %v2624, %v2630
    %v2637 = vadd.f32 %v2625, %v2630
    %v2638 = vadd.f32 %v2626, %v2630
    %v2639 = vpack.c.bf16 %v2632, %v2631
    %v2640 = vpack.c.bf16 %v2634, %v2633
    %v2641 = vpack.c.bf16 %v2636, %v2635
    %v2642 = vpack.c.bf16 %v2638, %v2637
    %s2643 = scalar_lea.vmem [#allocation7], 192
    %v2644 = vld [vmem:[%s2643] sm:$0xf]
    %v2645 = vld [vmem:[%s2643 + $0x4] sm:$0xf]
    %v2646 = vld [vmem:[%s2643 + $0x8] sm:$0xf]
    %v2647 = vld [vmem:[%s2643 + $0xc] sm:$0xf]
    %v2648 = vld [vmem:[%s2643 + $0x10] sm:$0xf]
    %v2649 = vld [vmem:[%s2643 + $0x14] sm:$0xf]
    %v2650 = vld [vmem:[%s2643 + $0x18] sm:$0xf]
    %v2651 = vld [vmem:[%s2643 + $0x1c] sm:$0xf]
    %v2652 = vld [vmem:[%s2643 + $0x20] sm:$0xf]
    %v2653 = vld [vmem:[%s2643 + $0x24] sm:$0xf]
    %v2654 = vld [vmem:[%s2643 + $0x28] sm:$0xf]
    %v2655 = vld [vmem:[%s2643 + $0x2c] sm:$0xf]
    %v2656 = vld [vmem:[%s2643 + $0x30] sm:$0xf]
    %v2657 = vld [vmem:[%s2643 + $0x34] sm:$0xf]
    %v2658 = vld [vmem:[%s2643 + $0x38] sm:$0xf]
    %v2659 = vld [vmem:[%s2643 + $0x3c] sm:$0xf]
    %v2660 = vlaneseq
    %v2661 = vshrl.u32 %v2660, 7
    %v2662 = vsub.s32 2, %v2661
    %v2663 = vrot.slane %v2558, %v2662
    %v2680 = vunpack.c.l.b16 %v2644
    %v2681 = vunpack.c.l.b16 %v2645
    %v2682 = vunpack.c.l.b16 %v2646
    %v2683 = vunpack.c.l.b16 %v2647
    %v2684 = vunpack.c.l.b16 %v2648
    %v2685 = vunpack.c.l.b16 %v2649
    %v2686 = vunpack.c.l.b16 %v2650
    %v2687 = vunpack.c.l.b16 %v2651
    %v2688 = vunpack.c.l.b16 %v2652
    %v2689 = vunpack.c.l.b16 %v2653
    %v2690 = vunpack.c.l.b16 %v2654
    %v2691 = vunpack.c.l.b16 %v2655
    %v2692 = vunpack.c.l.b16 %v2656
    %v2693 = vunpack.c.l.b16 %v2657
    %v2694 = vunpack.c.l.b16 %v2658
    %v2695 = vunpack.c.l.b16 %v2659
    %v2696 = vpack.c.b16 %v2681, %v2680
    %v2697 = vpack.c.b16 %v2683, %v2682
    %v2698 = vpack.c.b16 %v2685, %v2684
    %v2699 = vpack.c.b16 %v2687, %v2686
    %v2700 = vpack.c.b16 %v2689, %v2688
    %v2701 = vpack.c.b16 %v2691, %v2690
    %v2702 = vpack.c.b16 %v2693, %v2692
    %v2703 = vpack.c.b16 %v2695, %v2694
    %2712 = vmatprep.subr.bf16.mxu0 0
    %2713 = vmatpush1.bf16.msra.mxu0 %v2703
    %2714 = vmatprep.subr.bf16.mxu0 0
    %2715 = vmatpush1.bf16.msra.mxu0 %v2702
    %2716 = vmatprep.subr.bf16.mxu0 0
    %2717 = vmatpush1.bf16.msra.mxu0 %v2701
    %2718 = vmatprep.subr.bf16.mxu0 0
    %2719 = vmatpush1.bf16.msra.mxu0 %v2700
    %2720 = vmatprep.subr.bf16.mxu0 0
    %2721 = vmatpush1.bf16.msra.mxu0 %v2699
    %2722 = vmatprep.subr.bf16.mxu0 0
    %2723 = vmatpush1.bf16.msra.mxu0 %v2698
    %2724 = vmatprep.subr.bf16.mxu0 0
    %2725 = vmatpush1.bf16.msra.mxu0 %v2697
    %2726 = vmatprep.subr.bf16.mxu0 0
    %2727 = vmatpush1.bf16.msra.mxu0 %v2696
    %2728 = vmatprep.subr.bf16.mxu0 0
    %2729 = vmatpush2.bf16.msra.mxu0 0
    %2730 = vmatprep.subr.bf16.mxu0 0
    %2731 = vmatpush2.bf16.msra.mxu0 0
    %2732 = vmatprep.subr.bf16.mxu0 0
    %2733 = vmatpush2.bf16.msra.mxu0 0
    %2734 = vmatprep.subr.bf16.mxu0 0
    %2735 = vmatpush2.bf16.msra.mxu0 0
    %2736 = vmatprep.subr.bf16.mxu0 0
    %2737 = vmatpush2.bf16.msra.mxu0 0
    %2738 = vmatprep.subr.bf16.mxu0 0
    %2739 = vmatpush2.bf16.msra.mxu0 0
    %2740 = vmatprep.subr.bf16.mxu0 0
    %2741 = vmatpush2.bf16.msra.mxu0 0
    %2742 = vmatprep.subr.bf16.mxu0 0
    %2743 = vmatpush2.bf16.msra.mxu0 0
    %2744 = vmatprep.mubr.bf16.mxu0 0
    %2745 = vmatmul.mubr.bf16.gmra.mxu0 %v2639
    %v2746 = vpop.f32.mrf.mxu0
    %v2747 = vadd.f32 %v2663, %v2746
    %v2748 = vpop.f32.mrf.mxu0
    %v2749 = vpop.f32.mrf.mxu0
    %v2750 = vadd.f32 %v2663, %v2749
    %v2751 = vpop.f32.mrf.mxu0
    %2752 = vmatprep.mubr.bf16.mxu0 0
    %2753 = vmatmul.mubr.bf16.gmra.mxu0 %v2640
    %v2754 = vpop.f32.mrf.mxu0
    %v2755 = vadd.f32 %v2663, %v2754
    %v2756 = vpop.f32.mrf.mxu0
    %v2757 = vpop.f32.mrf.mxu0
    %v2758 = vadd.f32 %v2663, %v2757
    %v2759 = vpop.f32.mrf.mxu0
    %2760 = vmatprep.mubr.bf16.mxu0 0
    %2761 = vmatmul.mubr.bf16.gmra.mxu0 %v2641
    %v2762 = vpop.f32.mrf.mxu0
    %v2763 = vadd.f32 %v2663, %v2762
    %v2764 = vpop.f32.mrf.mxu0
    %v2765 = vpop.f32.mrf.mxu0
    %v2766 = vadd.f32 %v2663, %v2765
    %v2767 = vpop.f32.mrf.mxu0
    %2768 = vmatprep.mubr.bf16.mxu0 0
    %2769 = vmatmul.mubr.bf16.gmra.mxu0 %v2642
    %v2770 = vpop.f32.mrf.mxu0
    %v2771 = vadd.f32 %v2663, %v2770
    %v2772 = vpop.f32.mrf.mxu0
    %v2773 = vpop.f32.mrf.mxu0
    %v2774 = vadd.f32 %v2663, %v2773
    %v2775 = vpop.f32.mrf.mxu0
    %2776 = vdwg.mxu0
    %2777 = vst [vmem:[%s5] sm:$0xff] %v2747
    %2778 = vst [vmem:[%s5 + $0x8] sm:$0xff] %v2750
    %2779 = vst [vmem:[%s5 + $0x10] sm:$0xff] %v2755
    %2780 = vst [vmem:[%s5 + $0x18] sm:$0xff] %v2758
    %2781 = vst [vmem:[%s5 + $0x20] sm:$0xff] %v2763
    %2782 = vst [vmem:[%s5 + $0x28] sm:$0xff] %v2766
    %2783 = vst [vmem:[%s5 + $0x30] sm:$0xff] %v2771
    %2784 = vst [vmem:[%s5 + $0x38] sm:$0xff] %v2774
    // Predicated region
    $region42: #{forward.1} parent=1 // pred_check
      _
    $region43: #{forward.1} parent=1 // pred_check_branch
      %2786 = sbr.rel (0) target = $region45
    $region44: #{forward.1} parent=1 // pred_region
      _
    $region45: #{forward.1} parent=1 // pred_fallthru
      _
    // Predicated region
    $region46: #{forward.1} parent=1 // pred_check
      _
    $region47: #{forward.1} parent=1 // pred_check_branch
      %2788 = sbr.rel (0) target = $region49
    $region48: #{forward.1} parent=1 // pred_region
      _
    $region49: #{forward.1} parent=1 // pred_fallthru
      _
    %2789 = vsyncpa [#allocation3], 1
    %2790 = vsyncpa [#allocation5], 1
    %2791 = vsyncpa [#allocation8], 1

</llo_original>
